<compile_context>
chip_gen: v6e
topology: v6e:2x2x1
jax: 0.10.0
libtpu: 0.0.40
codegen_flags: <defaults>
</compile_context>

<pallas_src>
import functools

import jax
import jax.numpy as jnp
from jax import lax
from jax.experimental import pallas as pl
from jax.experimental.pallas import tpu as pltpu


_VMEM_LIMIT = 32 * 1024 * 1024


def _round_up(x, m):
    return ((x + m - 1) // m) * m


def _pick_m_tile(m, candidates=(512, 256, 128)):
    """Largest tile in `candidates` dividing round_up(m,128); prefer >=2 grid steps."""
    m_p = _round_up(m, 128)
    divs = [t for t in candidates if m_p % t == 0]
    multi = [t for t in divs if m_p // t >= 2]
    tm = max(multi) if multi else max(divs)
    return tm, m_p


# ----------------------------------------------------------------------------
# Pallas kernel 1: fused  out[Nout, M_tile] = act(W @ P_tile + b)   (M on lanes)
# ----------------------------------------------------------------------------
def _matmul_bias_act_kernel(w_ref, p_ref, b_ref, o_ref, *, act):
    acc = jnp.dot(w_ref[...], p_ref[...], preferred_element_type=jnp.float32)
    acc = acc + b_ref[...]                       # (Nout, tm) + (Nout, 1)
    if act == "relu":
        acc = jnp.maximum(acc, 0.0)
    elif act == "tanh":
        acc = jnp.tanh(acc)
    o_ref[...] = acc.astype(o_ref.dtype)


def fused_matmul_bias_act(w, p, b, act, out_dtype):
    """w: (Nout, K) bf16, p: (K, M) bf16, b: (Nout, 1) f32 -> (Nout, M) out_dtype."""
    nout, k = w.shape
    _, m = p.shape
    nout_p = _round_up(nout, 8)
    if nout_p != nout:
        w = jnp.pad(w, ((0, nout_p - nout), (0, 0)))
        b = jnp.pad(b, ((0, nout_p - nout), (0, 0)))
    tm, m_p = _pick_m_tile(m)
    if m_p != m:
        p = jnp.pad(p, ((0, 0), (0, m_p - m)))

    out = pl.pallas_call(
        functools.partial(_matmul_bias_act_kernel, act=act),
        out_shape=jax.ShapeDtypeStruct((nout_p, m_p), out_dtype),
        grid=(m_p // tm,),
        in_specs=[
            pl.BlockSpec((nout_p, k), lambda i: (0, 0)),   # resident weights
            pl.BlockSpec((k, tm), lambda i: (0, i)),       # streaming patch tiles
            pl.BlockSpec((nout_p, 1), lambda i: (0, 0)),   # resident bias
        ],
        out_specs=pl.BlockSpec((nout_p, tm), lambda i: (0, i)),
        compiler_params=pltpu.CompilerParams(
            dimension_semantics=("parallel",),
            vmem_limit_bytes=_VMEM_LIMIT),
    )(w, p, b)
    return out[:nout, :m]


# ----------------------------------------------------------------------------
# Pallas kernel 2: 7x7 conv with fused row taps + bias + tanh
# ----------------------------------------------------------------------------
def _conv7_rowfused_kernel(x_ref, w_ref, b_ref, o_ref, *, wo, ksize):
    """x_ref: (Mi, K7) bf16 -- full padded image, rows flattened with width Wo (resident).
       w_ref: (ksize, Cout_p, K7) bf16.  b_ref: (Cout_p, 1) f32.  o_ref: (Cout_p, TM) f32.
       out[:, m0:m0+TM] = tanh(b + sum_ky  w[ky] @ x[m0+ky*Wo : m0+ky*Wo+TM, :].T)."""
    tm = o_ref.shape[-1]
    m0 = pl.program_id(1) * tm
    acc = jnp.zeros(o_ref.shape, jnp.float32)
    for ky in range(ksize):                                   # unrolled, static taps
        start = m0 + ky * wo
        if wo % 8 == 0:
            start = pl.multiple_of(start, 8)
        xs = x_ref[pl.ds(start, tm), :]                       # (TM, K7) bf16
        acc = acc + lax.dot_general(
            w_ref[ky], xs,
            dimension_numbers=(((1,), (1,)), ((), ())),       # contract K7 (NT matmul)
            preferred_element_type=jnp.float32)
    o_ref[...] = jnp.tanh(acc + b_ref[...]).astype(o_ref.dtype)


# ----------------------------------------------------------------------------
# Layer wrappers (host-side weight folding / light layout plumbing)
# ----------------------------------------------------------------------------
def _convT_bn_relu_ps(x_cf, w_ct, gamma, beta, mean, var, eps=1e-5):
    """ConvTranspose2d(k=3,s=2,p=1,op=1,bias=False) + BatchNorm2d(eval) + ReLU.

    x_cf: (Cin, N, H, W) bf16 channel-first.  Returns (Cout, N, 2H, 2W) bf16.
    Sub-pixel form: out[cout, n, 2r+py, 2c+px] =
        sum_{dy,dx,cin} Wps[(py,px,cout),(dy,dx,cin)] * x[cin, n, r+dy, c+dx]
    with Wps[...] = w_ct[cin, cout, py-2dy+1, px-2dx+1]  (0 if out of [0,3) range).
    """
    cin, n, h, w = x_cf.shape
    cout = w_ct.shape[1]

    # ---- fold BN (eval mode) & build the pixel-shuffle weight matrix (4*Cout, 4*Cin)
    scale = gamma / jnp.sqrt(var + eps)                       # (Cout,)
    rows = []
    for py in (0, 1):
        for px in (0, 1):
            blocks = []
            for dy in (0, 1):
                for dx in (0, 1):
                    ky, kx = py - 2 * dy + 1, px - 2 * dx + 1
                    if 0 <= ky < 3 and 0 <= kx < 3:
                        blk = w_ct[:, :, ky, kx].T            # (Cout, Cin)
                    else:
                        blk = jnp.zeros((cout, cin), w_ct.dtype)
                    blocks.append(blk)
            rows.append(jnp.concatenate(blocks, axis=1))      # (Cout, 4*Cin)
    w_ps = jnp.concatenate(rows, axis=0) * jnp.tile(scale, 4)[:, None]
    bias = jnp.tile(beta - mean * scale, 4)[:, None].astype(jnp.float32)

    # ---- 2x2 im2col in (K, M) layout, M = N*H*W on the lane axis (only non-zero taps)
    xp = jnp.pad(x_cf, ((0, 0), (0, 0), (0, 1), (0, 1)))
    taps = [xp[:, :, dy:dy + h, dx:dx + w] for dy in (0, 1) for dx in (0, 1)]
    patches = jnp.stack(taps, axis=0).reshape(4 * cin, n * h * w)

    out = fused_matmul_bias_act(w_ps.astype(jnp.bfloat16),
                                patches.astype(jnp.bfloat16),
                                bias, "relu", jnp.bfloat16)   # (4*Cout, N*H*W)

    # ---- pixel shuffle back to channel-first (Cout, N, 2H, 2W)
    out = out.reshape(2, 2, cout, n, h, w).transpose(2, 3, 4, 0, 5, 1)
    return out.reshape(cout, n, 2 * h, 2 * w)


def _reflpad_conv7_tanh(x_cf, w, b):
    """ReflectionPad2d(3) + Conv2d(k=7, padding=0, bias) + Tanh.
    x_cf: (Cin, N, H, W) bf16.  Returns (N, Cout, H, W) f32 (NCHW)."""
    cin, n, h, wsp = x_cf.shape
    cout = w.shape[0]
    k, pad = 7, 3
    ho, wo = h, wsp
    hp = ho + k - 1

    xp = jnp.pad(x_cf, ((0, 0), (0, 0), (pad, pad), (pad, pad)), mode="reflect")
    # 7x column-expanded activation, rows flattened with width:
    #   xcol[n, r*Wo + c, cin*7 + kx] = xp[cin, n, r, c + kx]
    cols = [xp[:, :, :, kx:kx + wo] for kx in range(k)]       # each (Cin, N, Hp, Wo)
    xcol = jnp.stack(cols, axis=-1).transpose(1, 2, 3, 0, 4)  # (N, Hp, Wo, Cin, 7)
    xcol = xcol.reshape(n, hp * wo, cin * k).astype(jnp.bfloat16)

    # per-row-tap weights: w_rows[ky, cout, cin*7 + kx] = w[cout, cin, ky, kx]
    w_rows = w.transpose(2, 0, 1, 3).reshape(k, cout, cin * k)
    cout_p = _round_up(cout, 8)
    if cout_p != cout:
        w_rows = jnp.pad(w_rows, ((0, 0), (0, cout_p - cout), (0, 0)))
        b = jnp.pad(b, (0, cout_p - cout))
    bias = b[:, None].astype(jnp.float32)

    mo = ho * wo
    tm, mo_p = _pick_m_tile(mo)
    mi = mo_p + (k - 1) * wo
    if mi > hp * wo:
        xcol = jnp.pad(xcol, ((0, 0), (0, mi - hp * wo), (0, 0)))

    ck = cin * k
    out = pl.pallas_call(
        functools.partial(_conv7_rowfused_kernel, wo=wo, ksize=k),
        out_shape=jax.ShapeDtypeStruct((n, cout_p, mo_p), jnp.float32),
        grid=(n, mo_p // tm),
        in_specs=[
            pl.BlockSpec((None, mi, ck), lambda b_, m_: (b_, 0, 0)),   # resident per image
            pl.BlockSpec((k, cout_p, ck), lambda b_, m_: (0, 0, 0)),   # resident weights
            pl.BlockSpec((cout_p, 1), lambda b_, m_: (0, 0)),          # resident bias
        ],
        out_specs=pl.BlockSpec((None, cout_p, tm), lambda b_, m_: (b_, 0, m_)),
        compiler_params=pltpu.CompilerParams(
            dimension_semantics=("parallel", "parallel"),
            vmem_limit_bytes=_VMEM_LIMIT),
    )(xcol, w_rows.astype(jnp.bfloat16), bias)

    return out[:, :cout, :mo].reshape(n, cout, ho, wo)


# ----------------------------------------------------------------------------
# Full decoder forward
# ----------------------------------------------------------------------------
def image_decoder_forward(x, params):
    # NCHW -> channel-first (C, N, H, W); bf16 between layers, single transpose in;
    # the final conv emits NCHW f32 directly.
    h = jnp.transpose(x, (1, 0, 2, 3)).astype(jnp.bfloat16)
    for name in ("up0", "up1"):
        p = params[name]
        h = _convT_bn_relu_ps(h, p["weight"], p["gamma"], p["beta"],
                              p["mean"], p["var"])
    f = params["final"]
    return _reflpad_conv7_tanh(h, f["weight"], f["bias"])


# ----------------------------------------------------------------------------
# Deterministic parameter construction (synthetic, mirrors __init__ shapes)
# ----------------------------------------------------------------------------
def init_params(key, ngf, output_nc):
    params = {}
    n_down = 2
    for i in range(n_down):
        mult = 2 ** (n_down - i)
        cin, cout = ngf * mult, ngf * mult // 2
        key, k1, k2, k3, k4, k5 = jax.random.split(key, 6)
        params[f"up{i}"] = {
            # ConvTranspose2d weight: (Cin, Cout, 3, 3), bias=False (BatchNorm)
            "weight": 0.1 * jax.random.normal(k1, (cin, cout, 3, 3), jnp.float32),
            "gamma": 1.0 + 0.05 * jax.random.normal(k2, (cout,), jnp.float32),
            "beta": 0.05 * jax.random.normal(k3, (cout,), jnp.float32),
            "mean": 0.05 * jax.random.normal(k4, (cout,), jnp.float32),
            "var": 1.0 + 0.1 * jax.random.uniform(k5, (cout,), jnp.float32),
        }
    key, k1, k2 = jax.random.split(key, 3)
    params["final"] = {
        # Conv2d weight: (output_nc, ngf, 7, 7), bias: (output_nc,)
        "weight": 0.1 * jax.random.normal(k1, (output_nc, ngf, 7, 7), jnp.float32),
        "bias": 0.05 * jax.random.normal(k2, (output_nc,), jnp.float32),
    }
    return params


if __name__ == "__main__":
    ngf = 8
    output_nc = 3
    key = jax.random.PRNGKey(0)
    key, kx = jax.random.split(key)

    # decoder input has ngf * 2**n_downsampling = 4*ngf channels
    x = jax.random.normal(kx, (2, 4 * ngf, 8, 8), jnp.float32)   # (2, 32, 8, 8)
    params = init_params(key, ngf, output_nc)

    out = jax.jit(image_decoder_forward)(x, params)
    out = jax.block_until_ready(out)

    assert out.shape == (2, output_nc, 32, 32), out.shape
    assert bool(jnp.all(jnp.isfinite(out)))
    assert bool(jnp.all(jnp.abs(out) <= 1.0))   # tanh range
    print("KERNEL_OK")
</pallas_src>

<mosaic_0001>
module attributes {stable_mosaic.version = 11 : i64} {
  func.func @_matmul_bias_act_kernel(%arg0: i32, %arg1: memref<64x128xbf16, #tpu.memory_space<vmem>>, %arg2: memref<128x128xbf16, #tpu.memory_space<vmem>>, %arg3: memref<64x1xf32, #tpu.memory_space<vmem>>, %arg4: memref<64x128xbf16, #tpu.memory_space<vmem>>) attributes {dimension_semantics = [#tpu.dimension_semantics<parallel>], iteration_bounds = array<i64: 1>, scalar_prefetch = 0 : i64, scratch_operands = 0 : i64, tpu.core_type = #tpu.core_type<tc>, window_params = [{pipeline_mode = #tpu.pipeline_mode<synchronous>, transform_indices = @transform_0, window_bounds = array<i64: 64, 128>}, {transform_indices = @transform_1, window_bounds = array<i64: 128, 128>}, {pipeline_mode = #tpu.pipeline_mode<synchronous>, transform_indices = @transform_2, window_bounds = array<i64: 64, 1>}, {transform_indices = @transform_3, window_bounds = array<i64: 64, 128>}]} {
    %c0 = arith.constant 0 : index
    %c0_0 = arith.constant 0 : index
    %0 = vector.load %arg1[%c0, %c0_0] : memref<64x128xbf16, #tpu.memory_space<vmem>>, vector<64x128xbf16>
    %c0_1 = arith.constant 0 : index
    %c0_2 = arith.constant 0 : index
    %1 = vector.load %arg2[%c0_1, %c0_2] : memref<128x128xbf16, #tpu.memory_space<vmem>>, vector<128x128xbf16>
    %cst = arith.constant dense<0.000000e+00> : vector<64x128xf32>
    %2 = tpu.matmul %0, %1, %cst {dimension_numbers = #tpu.dot_dimension_numbers<[1], [0], [0], [1], [0, 0, 1, 1], [], []>} : vector<64x128xbf16>, vector<128x128xbf16>, vector<64x128xf32> -> vector<64x128xf32>
    %c0_3 = arith.constant 0 : index
    %c0_4 = arith.constant 0 : index
    %3 = vector.load %arg3[%c0_3, %c0_4] : memref<64x1xf32, #tpu.memory_space<vmem>>, vector<64x1xf32>
    %4 = vector.broadcast %3 : vector<64x1xf32> to vector<64x128xf32>
    %5 = arith.addf %2, %4 : vector<64x128xf32>
    %cst_5 = arith.constant 0.000000e+00 : f32
    %6 = vector.broadcast %cst_5 : f32 to vector<64x128xf32>
    %7 = arith.maximumf %5, %6 : vector<64x128xf32>
    %8 = arith.truncf %7 : vector<64x128xf32> to vector<64x128xbf16>
    %c0_6 = arith.constant 0 : index
    %c0_7 = arith.constant 0 : index
    %9 = vector.load %arg4[%c0_6, %c0_7] : memref<64x128xbf16, #tpu.memory_space<vmem>>, vector<64x128xbf16>
    tpu.vector_store %arg4[%c0_6, %c0_7], %8 {strides = array<i32>} : memref<64x128xbf16, #tpu.memory_space<vmem>>, vector<64x128xbf16>,
    return
  }
  func.func @transform_0(%arg0: i32) -> (i32, i32) {
    %c0_i32 = arith.constant 0 : i32
    %c0_i32_0 = arith.constant 0 : i32
    %c0_i32_1 = arith.constant 0 : i32
    return %c0_i32, %c0_i32_0 : i32, i32
  }
  func.func @transform_1(%arg0: i32) -> (i32, i32) {
    %c0_i32 = arith.constant 0 : i32
    %c0_i32_0 = arith.constant 0 : i32
    return %c0_i32, %arg0 : i32, i32
  }
  func.func @transform_2(%arg0: i32) -> (i32, i32) {
    %c0_i32 = arith.constant 0 : i32
    %c0_i32_0 = arith.constant 0 : i32
    %c0_i32_1 = arith.constant 0 : i32
    return %c0_i32, %c0_i32_0 : i32, i32
  }
  func.func @transform_3(%arg0: i32) -> (i32, i32) {
    %c0_i32 = arith.constant 0 : i32
    %c0_i32_0 = arith.constant 0 : i32
    return %c0_i32, %arg0 : i32, i32
  }
}

module attributes {stable_mosaic.version = 11 : i64} {
  func.func @_matmul_bias_act_kernel(%arg0: i32, %arg1: memref<32x64xbf16, #tpu.memory_space<vmem>>, %arg2: memref<64x256xbf16, #tpu.memory_space<vmem>>, %arg3: memref<32x1xf32, #tpu.memory_space<vmem>>, %arg4: memref<32x256xbf16, #tpu.memory_space<vmem>>) attributes {dimension_semantics = [#tpu.dimension_semantics<parallel>], iteration_bounds = array<i64: 2>, scalar_prefetch = 0 : i64, scratch_operands = 0 : i64, tpu.core_type = #tpu.core_type<tc>, window_params = [{pipeline_mode = #tpu.pipeline_mode<synchronous>, transform_indices = @transform_0, window_bounds = array<i64: 32, 64>}, {transform_indices = @transform_1, window_bounds = array<i64: 64, 256>}, {pipeline_mode = #tpu.pipeline_mode<synchronous>, transform_indices = @transform_2, window_bounds = array<i64: 32, 1>}, {transform_indices = @transform_3, window_bounds = array<i64: 32, 256>}]} {
    %c0 = arith.constant 0 : index
    %c0_0 = arith.constant 0 : index
    %0 = vector.load %arg1[%c0, %c0_0] : memref<32x64xbf16, #tpu.memory_space<vmem>>, vector<32x64xbf16>
    %c0_1 = arith.constant 0 : index
    %c0_2 = arith.constant 0 : index
    %1 = vector.load %arg2[%c0_1, %c0_2] : memref<64x256xbf16, #tpu.memory_space<vmem>>, vector<64x256xbf16>
    %cst = arith.constant dense<0.000000e+00> : vector<32x256xf32>
    %2 = tpu.matmul %0, %1, %cst {dimension_numbers = #tpu.dot_dimension_numbers<[1], [0], [0], [1], [0, 0, 1, 1], [], []>} : vector<32x64xbf16>, vector<64x256xbf16>, vector<32x256xf32> -> vector<32x256xf32>
    %c0_3 = arith.constant 0 : index
    %c0_4 = arith.constant 0 : index
    %3 = vector.load %arg3[%c0_3, %c0_4] : memref<32x1xf32, #tpu.memory_space<vmem>>, vector<32x1xf32>
    %4 = vector.broadcast %3 : vector<32x1xf32> to vector<32x256xf32>
    %5 = arith.addf %2, %4 : vector<32x256xf32>
    %cst_5 = arith.constant 0.000000e+00 : f32
    %6 = vector.broadcast %cst_5 : f32 to vector<32x256xf32>
    %7 = arith.maximumf %5, %6 : vector<32x256xf32>
    %8 = arith.truncf %7 : vector<32x256xf32> to vector<32x256xbf16>
    %c0_6 = arith.constant 0 : index
    %c0_7 = arith.constant 0 : index
    %9 = vector.load %arg4[%c0_6, %c0_7] : memref<32x256xbf16, #tpu.memory_space<vmem>>, vector<32x256xbf16>
    tpu.vector_store %arg4[%c0_6, %c0_7], %8 {strides = array<i32>} : memref<32x256xbf16, #tpu.memory_space<vmem>>, vector<32x256xbf16>,
    return
  }
  func.func @transform_0(%arg0: i32) -> (i32, i32) {
    %c0_i32 = arith.constant 0 : i32
    %c0_i32_0 = arith.constant 0 : i32
    %c0_i32_1 = arith.constant 0 : i32
    return %c0_i32, %c0_i32_0 : i32, i32
  }
  func.func @transform_1(%arg0: i32) -> (i32, i32) {
    %c0_i32 = arith.constant 0 : i32
    %c0_i32_0 = arith.constant 0 : i32
    return %c0_i32, %arg0 : i32, i32
  }
  func.func @transform_2(%arg0: i32) -> (i32, i32) {
    %c0_i32 = arith.constant 0 : i32
    %c0_i32_0 = arith.constant 0 : i32
    %c0_i32_1 = arith.constant 0 : i32
    return %c0_i32, %c0_i32_0 : i32, i32
  }
  func.func @transform_3(%arg0: i32) -> (i32, i32) {
    %c0_i32 = arith.constant 0 : i32
    %c0_i32_0 = arith.constant 0 : i32
    return %c0_i32, %arg0 : i32, i32
  }
}

module attributes {stable_mosaic.version = 11 : i64} {
  func.func @_conv7_rowfused_kernel(%arg0: i32, %arg1: i32, %arg2: memref<1x1216x56xbf16, #tpu.memory_space<vmem>>, %arg3: memref<7x8x56xbf16, #tpu.memory_space<vmem>>, %arg4: memref<8x1xf32, #tpu.memory_space<vmem>>, %arg5: memref<1x8x512xf32, #tpu.memory_space<vmem>>) attributes {dimension_semantics = [#tpu.dimension_semantics<parallel>, #tpu.dimension_semantics<parallel>], iteration_bounds = array<i64: 2, 2>, scalar_prefetch = 0 : i64, scratch_operands = 0 : i64, tpu.core_type = #tpu.core_type<tc>, window_params = [{transform_indices = @transform_0, window_bounds = array<i64: 1, 1216, 56>}, {pipeline_mode = #tpu.pipeline_mode<synchronous>, transform_indices = @transform_1, window_bounds = array<i64: 7, 8, 56>}, {pipeline_mode = #tpu.pipeline_mode<synchronous>, transform_indices = @transform_2, window_bounds = array<i64: 8, 1>}, {transform_indices = @transform_3, window_bounds = array<i64: 1, 8, 512>}]} {
    %c512_i32 = arith.constant 512 : i32
    %0 = arith.muli %arg1, %c512_i32 : i32
    %cst = arith.constant 0.000000e+00 : f32
    %1 = vector.broadcast %cst : f32 to vector<8x512xf32>
    %c0_i32 = arith.constant 0 : i32
    %2 = arith.addi %0, %c0_i32 : i32
    %3 = tpu.assume_multiple %2, 8 : i32
    %c0 = arith.constant 0 : index
    %4 = arith.index_cast %3 : i32 to index
    %c0_0 = arith.constant 0 : index
    %5 = vector.load %arg2[%c0, %4, %c0_0] : memref<1x1216x56xbf16, #tpu.memory_space<vmem>>, vector<1x512x56xbf16>
    %6 = vector.shape_cast %5 : vector<1x512x56xbf16> to vector<512x56xbf16>
    %c0_1 = arith.constant 0 : index
    %c0_2 = arith.constant 0 : index
    %c0_3 = arith.constant 0 : index
    %7 = vector.load %arg3[%c0_1, %c0_2, %c0_3] : memref<7x8x56xbf16, #tpu.memory_space<vmem>>, vector<1x8x56xbf16>
    %8 = vector.shape_cast %7 : vector<1x8x56xbf16> to vector<8x56xbf16>
    %cst_4 = arith.constant dense<0.000000e+00> : vector<8x512xf32>
    %9 = tpu.matmul %8, %6, %cst_4 {dimension_numbers = #tpu.dot_dimension_numbers<[1], [1], [0], [0], [0, 0, 1, 0], [], []>} : vector<8x56xbf16>, vector<512x56xbf16>, vector<8x512xf32> -> vector<8x512xf32>
    %10 = arith.addf %1, %9 : vector<8x512xf32>
    %c32_i32 = arith.constant 32 : i32
    %11 = arith.addi %0, %c32_i32 : i32
    %12 = tpu.assume_multiple %11, 8 : i32
    %c0_5 = arith.constant 0 : index
    %13 = arith.index_cast %12 : i32 to index
    %c0_6 = arith.constant 0 : index
    %14 = vector.load %arg2[%c0_5, %13, %c0_6] : memref<1x1216x56xbf16, #tpu.memory_space<vmem>>, vector<1x512x56xbf16>
    %15 = vector.shape_cast %14 : vector<1x512x56xbf16> to vector<512x56xbf16>
    %c1 = arith.constant 1 : index
    %c0_7 = arith.constant 0 : index
    %c0_8 = arith.constant 0 : index
    %16 = vector.load %arg3[%c1, %c0_7, %c0_8] : memref<7x8x56xbf16, #tpu.memory_space<vmem>>, vector<1x8x56xbf16>
    %17 = vector.shape_cast %16 : vector<1x8x56xbf16> to vector<8x56xbf16>
    %cst_9 = arith.constant dense<0.000000e+00> : vector<8x512xf32>
    %18 = tpu.matmul %17, %15, %cst_9 {dimension_numbers = #tpu.dot_dimension_numbers<[1], [1], [0], [0], [0, 0, 1, 0], [], []>} : vector<8x56xbf16>, vector<512x56xbf16>, vector<8x512xf32> -> vector<8x512xf32>
    %19 = arith.addf %10, %18 : vector<8x512xf32>
    %c64_i32 = arith.constant 64 : i32
    %20 = arith.addi %0, %c64_i32 : i32
    %21 = tpu.assume_multiple %20, 8 : i32
    %c0_10 = arith.constant 0 : index
    %22 = arith.index_cast %21 : i32 to index
    %c0_11 = arith.constant 0 : index
    %23 = vector.load %arg2[%c0_10, %22, %c0_11] : memref<1x1216x56xbf16, #tpu.memory_space<vmem>>, vector<1x512x56xbf16>
    %24 = vector.shape_cast %23 : vector<1x512x56xbf16> to vector<512x56xbf16>
    %c2 = arith.constant 2 : index
    %c0_12 = arith.constant 0 : index
    %c0_13 = arith.constant 0 : index
    %25 = vector.load %arg3[%c2, %c0_12, %c0_13] : memref<7x8x56xbf16, #tpu.memory_space<vmem>>, vector<1x8x56xbf16>
    %26 = vector.shape_cast %25 : vector<1x8x56xbf16> to vector<8x56xbf16>
    %cst_14 = arith.constant dense<0.000000e+00> : vector<8x512xf32>
    %27 = tpu.matmul %26, %24, %cst_14 {dimension_numbers = #tpu.dot_dimension_numbers<[1], [1], [0], [0], [0, 0, 1, 0], [], []>} : vector<8x56xbf16>, vector<512x56xbf16>, vector<8x512xf32> -> vector<8x512xf32>
    %28 = arith.addf %19, %27 : vector<8x512xf32>
    %c96_i32 = arith.constant 96 : i32
    %29 = arith.addi %0, %c96_i32 : i32
    %30 = tpu.assume_multiple %29, 8 : i32
    %c0_15 = arith.constant 0 : index
    %31 = arith.index_cast %30 : i32 to index
    %c0_16 = arith.constant 0 : index
    %32 = vector.load %arg2[%c0_15, %31, %c0_16] : memref<1x1216x56xbf16, #tpu.memory_space<vmem>>, vector<1x512x56xbf16>
    %33 = vector.shape_cast %32 : vector<1x512x56xbf16> to vector<512x56xbf16>
    %c3 = arith.constant 3 : index
    %c0_17 = arith.constant 0 : index
    %c0_18 = arith.constant 0 : index
    %34 = vector.load %arg3[%c3, %c0_17, %c0_18] : memref<7x8x56xbf16, #tpu.memory_space<vmem>>, vector<1x8x56xbf16>
    %35 = vector.shape_cast %34 : vector<1x8x56xbf16> to vector<8x56xbf16>
    %cst_19 = arith.constant dense<0.000000e+00> : vector<8x512xf32>
    %36 = tpu.matmul %35, %33, %cst_19 {dimension_numbers = #tpu.dot_dimension_numbers<[1], [1], [0], [0], [0, 0, 1, 0], [], []>} : vector<8x56xbf16>, vector<512x56xbf16>, vector<8x512xf32> -> vector<8x512xf32>
    %37 = arith.addf %28, %36 : vector<8x512xf32>
    %c128_i32 = arith.constant 128 : i32
    %38 = arith.addi %0, %c128_i32 : i32
    %39 = tpu.assume_multiple %38, 8 : i32
    %c0_20 = arith.constant 0 : index
    %40 = arith.index_cast %39 : i32 to index
    %c0_21 = arith.constant 0 : index
    %41 = vector.load %arg2[%c0_20, %40, %c0_21] : memref<1x1216x56xbf16, #tpu.memory_space<vmem>>, vector<1x512x56xbf16>
    %42 = vector.shape_cast %41 : vector<1x512x56xbf16> to vector<512x56xbf16>
    %c4 = arith.constant 4 : index
    %c0_22 = arith.constant 0 : index
    %c0_23 = arith.constant 0 : index
    %43 = vector.load %arg3[%c4, %c0_22, %c0_23] : memref<7x8x56xbf16, #tpu.memory_space<vmem>>, vector<1x8x56xbf16>
    %44 = vector.shape_cast %43 : vector<1x8x56xbf16> to vector<8x56xbf16>
    %cst_24 = arith.constant dense<0.000000e+00> : vector<8x512xf32>
    %45 = tpu.matmul %44, %42, %cst_24 {dimension_numbers = #tpu.dot_dimension_numbers<[1], [1], [0], [0], [0, 0, 1, 0], [], []>} : vector<8x56xbf16>, vector<512x56xbf16>, vector<8x512xf32> -> vector<8x512xf32>
    %46 = arith.addf %37, %45 : vector<8x512xf32>
    %c160_i32 = arith.constant 160 : i32
    %47 = arith.addi %0, %c160_i32 : i32
    %48 = tpu.assume_multiple %47, 8 : i32
    %c0_25 = arith.constant 0 : index
    %49 = arith.index_cast %48 : i32 to index
    %c0_26 = arith.constant 0 : index
    %50 = vector.load %arg2[%c0_25, %49, %c0_26] : memref<1x1216x56xbf16, #tpu.memory_space<vmem>>, vector<1x512x56xbf16>
    %51 = vector.shape_cast %50 : vector<1x512x56xbf16> to vector<512x56xbf16>
    %c5 = arith.constant 5 : index
    %c0_27 = arith.constant 0 : index
    %c0_28 = arith.constant 0 : index
    %52 = vector.load %arg3[%c5, %c0_27, %c0_28] : memref<7x8x56xbf16, #tpu.memory_space<vmem>>, vector<1x8x56xbf16>
    %53 = vector.shape_cast %52 : vector<1x8x56xbf16> to vector<8x56xbf16>
    %cst_29 = arith.constant dense<0.000000e+00> : vector<8x512xf32>
    %54 = tpu.matmul %53, %51, %cst_29 {dimension_numbers = #tpu.dot_dimension_numbers<[1], [1], [0], [0], [0, 0, 1, 0], [], []>} : vector<8x56xbf16>, vector<512x56xbf16>, vector<8x512xf32> -> vector<8x512xf32>
    %55 = arith.addf %46, %54 : vector<8x512xf32>
    %c192_i32 = arith.constant 192 : i32
    %56 = arith.addi %0, %c192_i32 : i32
    %57 = tpu.assume_multiple %56, 8 : i32
    %c0_30 = arith.constant 0 : index
    %58 = arith.index_cast %57 : i32 to index
    %c0_31 = arith.constant 0 : index
    %59 = vector.load %arg2[%c0_30, %58, %c0_31] : memref<1x1216x56xbf16, #tpu.memory_space<vmem>>, vector<1x512x56xbf16>
    %60 = vector.shape_cast %59 : vector<1x512x56xbf16> to vector<512x56xbf16>
    %c6 = arith.constant 6 : index
    %c0_32 = arith.constant 0 : index
    %c0_33 = arith.constant 0 : index
    %61 = vector.load %arg3[%c6, %c0_32, %c0_33] : memref<7x8x56xbf16, #tpu.memory_space<vmem>>, vector<1x8x56xbf16>
    %62 = vector.shape_cast %61 : vector<1x8x56xbf16> to vector<8x56xbf16>
    %cst_34 = arith.constant dense<0.000000e+00> : vector<8x512xf32>
    %63 = tpu.matmul %62, %60, %cst_34 {dimension_numbers = #tpu.dot_dimension_numbers<[1], [1], [0], [0], [0, 0, 1, 0], [], []>} : vector<8x56xbf16>, vector<512x56xbf16>, vector<8x512xf32> -> vector<8x512xf32>
    %64 = arith.addf %55, %63 : vector<8x512xf32>
    %c0_35 = arith.constant 0 : index
    %c0_36 = arith.constant 0 : index
    %65 = vector.load %arg4[%c0_35, %c0_36] : memref<8x1xf32, #tpu.memory_space<vmem>>, vector<8x1xf32>
    %66 = vector.broadcast %65 : vector<8x1xf32> to vector<8x512xf32>
    %67 = arith.addf %64, %66 : vector<8x512xf32>
    %68 = math.tanh %67 : vector<8x512xf32>
    %c0_37 = arith.constant 0 : index
    %c0_38 = arith.constant 0 : index
    %c0_39 = arith.constant 0 : index
    %69 = vector.load %arg5[%c0_37, %c0_38, %c0_39] : memref<1x8x512xf32, #tpu.memory_space<vmem>>, vector<1x8x512xf32>
    %70 = vector.shape_cast %69 : vector<1x8x512xf32> to vector<8x512xf32>
    %71 = vector.shape_cast %68 : vector<8x512xf32> to vector<1x8x512xf32>
    tpu.vector_store %arg5[%c0_37, %c0_38, %c0_39], %71 {strides = array<i32>} : memref<1x8x512xf32, #tpu.memory_space<vmem>>, vector<1x8x512xf32>,
    return
  }
  func.func @transform_0(%arg0: i32, %arg1: i32) -> (i32, i32, i32) {
    %c0_i32 = arith.constant 0 : i32
    %c0_i32_0 = arith.constant 0 : i32
    %c0_i32_1 = arith.constant 0 : i32
    return %arg0, %c0_i32, %c0_i32_0 : i32, i32, i32
  }
  func.func @transform_1(%arg0: i32, %arg1: i32) -> (i32, i32, i32) {
    %c0_i32 = arith.constant 0 : i32
    %c0_i32_0 = arith.constant 0 : i32
    %c0_i32_1 = arith.constant 0 : i32
    %c0_i32_2 = arith.constant 0 : i32
    return %c0_i32, %c0_i32_0, %c0_i32_1 : i32, i32, i32
  }
  func.func @transform_2(%arg0: i32, %arg1: i32) -> (i32, i32) {
    %c0_i32 = arith.constant 0 : i32
    %c0_i32_0 = arith.constant 0 : i32
    %c0_i32_1 = arith.constant 0 : i32
    return %c0_i32, %c0_i32_0 : i32, i32
  }
  func.func @transform_3(%arg0: i32, %arg1: i32) -> (i32, i32, i32) {
    %c0_i32 = arith.constant 0 : i32
    %c0_i32_0 = arith.constant 0 : i32
    return %arg0, %c0_i32, %arg1 : i32, i32, i32
  }
}

</mosaic_0001>

<llo_original>
// kernel: tile.33
$region0: #{tile.33}
  #allocation0 [shape = 's32[1]{0}', space=sflag, size = 0x4, scoped, tag = 'scoped memory for tile.33']
  %s0 = inlined_call_operand.vmem [shape: f32[8], index: 0, kind: input, shape index: {}]
  %s1 = inlined_call_operand.vmem [shape: f32[4,8], index: 1, kind: output, shape index: {}]
  // Predicated region
  $region2: #{tile.33} parent=0 // pred_check
    _
  $region3: #{tile.33} parent=0 // pred_check_branch
    %3 = sbr.rel (0) target = $region5
  $region4: #{tile.33} parent=0 // pred_region
    _
  $region5: #{tile.33} parent=0 // pred_fallthru
    _
  %v4 = vld [vmem:[%s0] ss:$0 sm:$0xff]
  %5 = vst [vmem:[%s1] sm:$0xf] %v4

// kernel: mul.16
$region0: #{mul.16}
  %s0 = inlined_call_operand.vmem [shape: f32[4,8], index: 0, kind: input, shape index: {}]
  %s1 = inlined_call_operand.vmem [shape: f32[32], index: 1, kind: output, shape index: {}]
  $region1: #{mul.16} parent=0
    #allocation0 [shape = 'u8[4096]{0}', space=vmem, size = 0x1000, scoped, tag = 'scoped mem for output reshape']
    #allocation1 [shape = 'u8[4096]{0}', space=vmem, size = 0x1000, scoped, tag = 'scoped mem for input reshape']
    %s3 = sshll.u32 1, 4
    %s4 = ssub.s32 %s3, 1
    %v5 = vld [vmem:[%s0] sm:%s4]
    %6 = vst [vmem:[#allocation1] sm:%s4] %v5
    %v7 = vld [vmem:[#allocation1] sm:$0x1]
    %vm8 = vcmask 64512
    %9 = vst.msk [vmem:[#allocation0] sm:$0x1] %vm8, %v7
    %s10 = scalar_lea.vmem [#allocation1], 3
    %v11 = vld [vmem:[%s10] sm:$0x1]
    %12 = vrot.lane.b32.xlu0 %v11, 24
    %v13 = vpop.permute.xlu0 %12
    %vm14 = vcmask 261312
    %15 = vst.msk [vmem:[#allocation0] sm:$0x1] %vm14, %v13
    %s16 = scalar_lea.vmem [#allocation1], 2
    %v17 = vld [vmem:[%s16] sm:$0x1]
    %18 = vrot.lane.b32.xlu0 %v17, 16
    %v19 = vpop.permute.xlu0 %18
    %vm20 = vcmask 195712
    %21 = vst.msk [vmem:[#allocation0] sm:$0x1] %vm20, %v19
    %s22 = scalar_lea.vmem [#allocation1], 1
    %v23 = vld [vmem:[%s22] sm:$0x1]
    %24 = vrot.lane.b32.xlu0 %v23, 8
    %v25 = vpop.permute.xlu0 %24
    %vm26 = vcmask 130112
    %27 = vst.msk [vmem:[#allocation0] sm:$0x1] %vm26, %v25
    %s29 = sshll.u32 1, 1
    %s30 = ssub.s32 %s29, 1
    %v32 = vld [vmem:[#allocation0] sm:%s30]
    %s33 = sshll.u32 1, 1
    %s34 = ssub.s32 %s33, 1
    %35 = vst [vmem:[%s1] sm:%s34] %v32

// kernel: tile.23
$region0: #{tile.23}
  #allocation0 [shape = 's32[1]{0}', space=sflag, size = 0x4, scoped, tag = 'scoped memory for tile.23']
  %s0 = inlined_call_operand.vmem [shape: f32[16], index: 0, kind: input, shape index: {}]
  %s1 = inlined_call_operand.vmem [shape: f32[4,16], index: 1, kind: output, shape index: {}]
  // Predicated region
  $region2: #{tile.23} parent=0 // pred_check
    _
  $region3: #{tile.23} parent=0 // pred_check_branch
    %3 = sbr.rel (0) target = $region5
  $region4: #{tile.23} parent=0 // pred_region
    _
  $region5: #{tile.23} parent=0 // pred_fallthru
    _
  %v4 = vld [vmem:[%s0] ss:$0 sm:$0xff]
  %5 = vst [vmem:[%s1] sm:$0xf] %v4

// kernel: mul.11
$region0: #{mul.11}
  %s0 = inlined_call_operand.vmem [shape: f32[4,16], index: 0, kind: input, shape index: {}]
  %s1 = inlined_call_operand.vmem [shape: f32[64], index: 1, kind: output, shape index: {}]
  $region1: #{mul.11} parent=0
    #allocation0 [shape = 'u8[4096]{0}', space=vmem, size = 0x1000, scoped, tag = 'scoped mem for output reshape']
    #allocation1 [shape = 'u8[4096]{0}', space=vmem, size = 0x1000, scoped, tag = 'scoped mem for input reshape']
    %s3 = sshll.u32 1, 4
    %s4 = ssub.s32 %s3, 1
    %v5 = vld [vmem:[%s0] sm:%s4]
    %6 = vst [vmem:[#allocation1] sm:%s4] %v5
    %v7 = vld [vmem:[#allocation1] sm:$0x1]
    %vm8 = vcmask 130048
    %9 = vst.msk [vmem:[#allocation0] sm:$0x1] %vm8, %v7
    %s10 = scalar_lea.vmem [#allocation1], 3
    %v11 = vld [vmem:[%s10] sm:$0x1]
    %12 = vrot.lane.b32.xlu0 %v11, 48
    %v13 = vpop.permute.xlu0 %12
    %vm14 = vcmask 523648
    %15 = vst.msk [vmem:[#allocation0] sm:$0x1] %vm14, %v13
    %s16 = scalar_lea.vmem [#allocation1], 2
    %v17 = vld [vmem:[%s16] sm:$0x1]
    %18 = vrot.lane.b32.xlu0 %v17, 32
    %v19 = vpop.permute.xlu0 %18
    %vm20 = vcmask 392448
    %21 = vst.msk [vmem:[#allocation0] sm:$0x1] %vm20, %v19
    %s22 = scalar_lea.vmem [#allocation1], 1
    %v23 = vld [vmem:[%s22] sm:$0x1]
    %24 = vrot.lane.b32.xlu0 %v23, 16
    %v25 = vpop.permute.xlu0 %24
    %vm26 = vcmask 261248
    %27 = vst.msk [vmem:[#allocation0] sm:$0x1] %vm26, %v25
    %s29 = sshll.u32 1, 1
    %s30 = ssub.s32 %s29, 1
    %v32 = vld [vmem:[#allocation0] sm:%s30]
    %s33 = sshll.u32 1, 1
    %s34 = ssub.s32 %s33, 1
    %35 = vst [vmem:[%s1] sm:%s34] %v32

// kernel: tile.0
$region0: #{tile.0}
  %s0 = inlined_call_operand.vmem [shape: f32[4,16], index: 0, kind: input, shape index: {}]
  %s1 = inlined_call_operand.vmem [shape: f32[64,1], index: 1, kind: output, shape index: {}]
  $region1: #{tile.0} parent=0
    #allocation0 [shape = 'u8[4096]{0}', space=vmem, size = 0x1000, scoped, tag = 'scoped mem for input reshape']
    %s3 = sshll.u32 1, 4
    %s4 = ssub.s32 %s3, 1
    %v5 = vld [vmem:[%s0] sm:%s4]
    %6 = vst [vmem:[#allocation0] sm:%s4] %v5
    %v7 = vld [vmem:[#allocation0] sm:$0xf]
    %vm8 = vcmask 7168
    %9 = vst.msk [vmem:[%s1] ss:$16 sm:$0x3] %vm8, %v7
    %10 = vst.msk [vmem:[%s1] ss:$16 sm:$0xc] %vm8, %v7
    %v11 = vld [vmem:[#allocation0] sm:$0xf]
    %12 = vrot.lane.b32.xlu0 %v11, 127
    %v13 = vpop.permute.xlu0 %12
    %vm14 = vcmask 7168
    %s15 = scalar_lea.vmem %s1, 1
    %16 = vst.msk [vmem:[%s15] ss:$16 sm:$0x3] %vm14, %v13
    %s17 = scalar_lea.vmem %s1, 1
    %18 = vst.msk [vmem:[%s17] ss:$16 sm:$0xc] %vm14, %v13
    %v19 = vld [vmem:[#allocation0] sm:$0xf]
    %20 = vrot.lane.b32.xlu0 %v19, 126
    %v21 = vpop.permute.xlu0 %20
    %vm22 = vcmask 7168
    %s23 = scalar_lea.vmem %s1, 2
    %24 = vst.msk [vmem:[%s23] ss:$16 sm:$0x3] %vm22, %v21
    %s25 = scalar_lea.vmem %s1, 2
    %26 = vst.msk [vmem:[%s25] ss:$16 sm:$0xc] %vm22, %v21
    %v27 = vld [vmem:[#allocation0] sm:$0xf]
    %28 = vrot.lane.b32.xlu0 %v27, 125
    %v29 = vpop.permute.xlu0 %28
    %vm30 = vcmask 7168
    %s31 = scalar_lea.vmem %s1, 3
    %32 = vst.msk [vmem:[%s31] ss:$16 sm:$0x3] %vm30, %v29
    %s33 = scalar_lea.vmem %s1, 3
    %34 = vst.msk [vmem:[%s33] ss:$16 sm:$0xc] %vm30, %v29
    %v35 = vld [vmem:[#allocation0] sm:$0xf]
    %36 = vrot.lane.b32.xlu0 %v35, 124
    %v37 = vpop.permute.xlu0 %36
    %vm38 = vcmask 7168
    %s39 = scalar_lea.vmem %s1, 4
    %40 = vst.msk [vmem:[%s39] ss:$16 sm:$0x3] %vm38, %v37
    %s41 = scalar_lea.vmem %s1, 4
    %42 = vst.msk [vmem:[%s41] ss:$16 sm:$0xc] %vm38, %v37
    %v43 = vld [vmem:[#allocation0] sm:$0xf]
    %44 = vrot.lane.b32.xlu0 %v43, 123
    %v45 = vpop.permute.xlu0 %44
    %vm46 = vcmask 7168
    %s47 = scalar_lea.vmem %s1, 5
    %48 = vst.msk [vmem:[%s47] ss:$16 sm:$0x3] %vm46, %v45
    %s49 = scalar_lea.vmem %s1, 5
    %50 = vst.msk [vmem:[%s49] ss:$16 sm:$0xc] %vm46, %v45
    %v51 = vld [vmem:[#allocation0] sm:$0xf]
    %52 = vrot.lane.b32.xlu0 %v51, 122
    %v53 = vpop.permute.xlu0 %52
    %vm54 = vcmask 7168
    %s55 = scalar_lea.vmem %s1, 6
    %56 = vst.msk [vmem:[%s55] ss:$16 sm:$0x3] %vm54, %v53
    %s57 = scalar_lea.vmem %s1, 6
    %58 = vst.msk [vmem:[%s57] ss:$16 sm:$0xc] %vm54, %v53
    %v59 = vld [vmem:[#allocation0] sm:$0xf]
    %60 = vrot.lane.b32.xlu0 %v59, 121
    %v61 = vpop.permute.xlu0 %60
    %vm62 = vcmask 7168
    %s63 = scalar_lea.vmem %s1, 7
    %64 = vst.msk [vmem:[%s63] ss:$16 sm:$0x3] %vm62, %v61
    %s65 = scalar_lea.vmem %s1, 7
    %66 = vst.msk [vmem:[%s65] ss:$16 sm:$0xc] %vm62, %v61
    %v67 = vld [vmem:[#allocation0] sm:$0xf]
    %68 = vrot.lane.b32.xlu0 %v67, 120
    %v69 = vpop.permute.xlu0 %68
    %vm70 = vcmask 7168
    %s71 = scalar_lea.vmem %s1, 8
    %72 = vst.msk [vmem:[%s71] ss:$16 sm:$0x3] %vm70, %v69
    %s73 = scalar_lea.vmem %s1, 8
    %74 = vst.msk [vmem:[%s73] ss:$16 sm:$0xc] %vm70, %v69
    %v75 = vld [vmem:[#allocation0] sm:$0xf]
    %76 = vrot.lane.b32.xlu0 %v75, 119
    %v77 = vpop.permute.xlu0 %76
    %vm78 = vcmask 7168
    %s79 = scalar_lea.vmem %s1, 9
    %80 = vst.msk [vmem:[%s79] ss:$16 sm:$0x3] %vm78, %v77
    %s81 = scalar_lea.vmem %s1, 9
    %82 = vst.msk [vmem:[%s81] ss:$16 sm:$0xc] %vm78, %v77
    %v83 = vld [vmem:[#allocation0] sm:$0xf]
    %84 = vrot.lane.b32.xlu0 %v83, 118
    %v85 = vpop.permute.xlu0 %84
    %vm86 = vcmask 7168
    %s87 = scalar_lea.vmem %s1, 10
    %88 = vst.msk [vmem:[%s87] ss:$16 sm:$0x3] %vm86, %v85
    %s89 = scalar_lea.vmem %s1, 10
    %90 = vst.msk [vmem:[%s89] ss:$16 sm:$0xc] %vm86, %v85
    %v91 = vld [vmem:[#allocation0] sm:$0xf]
    %92 = vrot.lane.b32.xlu0 %v91, 117
    %v93 = vpop.permute.xlu0 %92
    %vm94 = vcmask 7168
    %s95 = scalar_lea.vmem %s1, 11
    %96 = vst.msk [vmem:[%s95] ss:$16 sm:$0x3] %vm94, %v93
    %s97 = scalar_lea.vmem %s1, 11
    %98 = vst.msk [vmem:[%s97] ss:$16 sm:$0xc] %vm94, %v93
    %v99 = vld [vmem:[#allocation0] sm:$0xf]
    %100 = vrot.lane.b32.xlu0 %v99, 116
    %v101 = vpop.permute.xlu0 %100
    %vm102 = vcmask 7168
    %s103 = scalar_lea.vmem %s1, 12
    %104 = vst.msk [vmem:[%s103] ss:$16 sm:$0x3] %vm102, %v101
    %s105 = scalar_lea.vmem %s1, 12
    %106 = vst.msk [vmem:[%s105] ss:$16 sm:$0xc] %vm102, %v101
    %v107 = vld [vmem:[#allocation0] sm:$0xf]
    %108 = vrot.lane.b32.xlu0 %v107, 115
    %v109 = vpop.permute.xlu0 %108
    %vm110 = vcmask 7168
    %s111 = scalar_lea.vmem %s1, 13
    %112 = vst.msk [vmem:[%s111] ss:$16 sm:$0x3] %vm110, %v109
    %s113 = scalar_lea.vmem %s1, 13
    %114 = vst.msk [vmem:[%s113] ss:$16 sm:$0xc] %vm110, %v109
    %v115 = vld [vmem:[#allocation0] sm:$0xf]
    %116 = vrot.lane.b32.xlu0 %v115, 114
    %v117 = vpop.permute.xlu0 %116
    %vm118 = vcmask 7168
    %s119 = scalar_lea.vmem %s1, 14
    %120 = vst.msk [vmem:[%s119] ss:$16 sm:$0x3] %vm118, %v117
    %s121 = scalar_lea.vmem %s1, 14
    %122 = vst.msk [vmem:[%s121] ss:$16 sm:$0xc] %vm118, %v117
    %v123 = vld [vmem:[#allocation0] sm:$0xf]
    %124 = vrot.lane.b32.xlu0 %v123, 113
    %v125 = vpop.permute.xlu0 %124
    %vm126 = vcmask 7168
    %s127 = scalar_lea.vmem %s1, 15
    %128 = vst.msk [vmem:[%s127] ss:$16 sm:$0x3] %vm126, %v125
    %s129 = scalar_lea.vmem %s1, 15
    %130 = vst.msk [vmem:[%s129] ss:$16 sm:$0xc] %vm126, %v125

// kernel: image_decoder_forward.3
$region0: #{image_decoder_forward.3}
  #allocation0 [shape = 'u32[]', space=smem, size = 0x4, offset = 0x4, fixed_abs, tag = 'smem constant byte address 0x4 - core index']
  #allocation1 [shape = 'u32[144,128]{1,0:T(1,128)}', space=vmem, size = 0x12000, scoped, tag = 'internal scratch']
  %s0 = inlined_call_operand.vmem [shape: bf16[64,128], index: 0, kind: input, shape index: {}]
  %s1 = inlined_call_operand.vmem [shape: bf16[128,128], index: 1, kind: input, shape index: {}]
  %s2 = inlined_call_operand.vmem [shape: f32[64,1], index: 2, kind: input, shape index: {}]
  %s3 = inlined_call_operand.vmem [shape: bf16[64,128], index: 3, kind: output, shape index: {}]
  %s4 = sld [smem:[#allocation0]]
  $region22: #{image_decoder_forward.3} parent=0
    _
  %s6 = ssub.s32 1, %s4
  %s7 = scalar_select 0, %s6, %s4
  // Predicated region
  $region2: #{image_decoder_forward.3} parent=0 // pred_check
    _
  $region3: #{image_decoder_forward.3} parent=0 // pred_check_branch
    %9 = sbr.rel (0) target = $region5
  $region4: #{image_decoder_forward.3} parent=0 // pred_region
    _
  $region5: #{image_decoder_forward.3} parent=0 // pred_fallthru
    _
  // Predicated region
  $region6: #{image_decoder_forward.3} parent=0 // pred_check
    _
  $region7: #{image_decoder_forward.3} parent=0 // pred_check_branch
    %11 = sbr.rel (0) target = $region9
  $region8: #{image_decoder_forward.3} parent=0 // pred_region
    _
  $region9: #{image_decoder_forward.3} parent=0 // pred_fallthru
    _
  // Predicated region
  $region10: #{image_decoder_forward.3} parent=0 // pred_check
    _
  $region11: #{image_decoder_forward.3} parent=0 // pred_check_branch
    %13 = sbr.rel (0) target = $region13
  $region12: #{image_decoder_forward.3} parent=0 // pred_region
    _
  $region13: #{image_decoder_forward.3} parent=0 // pred_fallthru
    _
  %v15 = vld [vmem:[%s0] sm:$0xf]
  %v16 = vld [vmem:[%s0 + $0x4] sm:$0xf]
  %v17 = vld [vmem:[%s0 + $0x8] sm:$0xf]
  %v18 = vld [vmem:[%s0 + $0xc] sm:$0xf]
  %v19 = vld [vmem:[%s0 + $0x10] sm:$0xf]
  %v20 = vld [vmem:[%s0 + $0x14] sm:$0xf]
  %v21 = vld [vmem:[%s0 + $0x18] sm:$0xf]
  %v22 = vld [vmem:[%s0 + $0x1c] sm:$0xf]
  %v23 = vld [vmem:[%s1] sm:$0xf]
  %v24 = vld [vmem:[%s1 + $0x4] sm:$0xf]
  %v25 = vld [vmem:[%s1 + $0x8] sm:$0xf]
  %v26 = vld [vmem:[%s1 + $0xc] sm:$0xf]
  %v27 = vld [vmem:[%s1 + $0x10] sm:$0xf]
  %v28 = vld [vmem:[%s1 + $0x14] sm:$0xf]
  %v29 = vld [vmem:[%s1 + $0x18] sm:$0xf]
  %v30 = vld [vmem:[%s1 + $0x1c] sm:$0xf]
  %v31 = vld [vmem:[%s1 + $0x20] sm:$0xf]
  %v32 = vld [vmem:[%s1 + $0x24] sm:$0xf]
  %v33 = vld [vmem:[%s1 + $0x28] sm:$0xf]
  %v34 = vld [vmem:[%s1 + $0x2c] sm:$0xf]
  %v35 = vld [vmem:[%s1 + $0x30] sm:$0xf]
  %v36 = vld [vmem:[%s1 + $0x34] sm:$0xf]
  %v37 = vld [vmem:[%s1 + $0x38] sm:$0xf]
  %v38 = vld [vmem:[%s1 + $0x3c] sm:$0xf]
  %v39 = vld [vmem:[%s2] sm:$0xff]
  %v40 = vld [vmem:[%s2 + $0x8] sm:$0xff]
  %v41 = vld [vmem:[%s2 + $0x10] sm:$0xff]
  %v42 = vld [vmem:[%s2 + $0x18] sm:$0xff]
  %v43 = vld [vmem:[%s2 + $0x20] sm:$0xff]
  %v44 = vld [vmem:[%s2 + $0x28] sm:$0xff]
  %v45 = vld [vmem:[%s2 + $0x30] sm:$0xff]
  %v46 = vld [vmem:[%s2 + $0x38] sm:$0xff]
  %48 = vset.pattern.permute.xlu0 0
  %49 = vperm.xlu0 %48, %v39
  %v50 = vpop.permute.xlu0 %49
  %53 = vset.pattern.permute.xlu0 0
  %54 = vperm.xlu0 %53, %v40
  %v55 = vpop.permute.xlu0 %54
  %58 = vset.pattern.permute.xlu0 0
  %59 = vperm.xlu0 %58, %v41
  %v60 = vpop.permute.xlu0 %59
  %63 = vset.pattern.permute.xlu0 0
  %64 = vperm.xlu0 %63, %v42
  %v65 = vpop.permute.xlu0 %64
  %68 = vset.pattern.permute.xlu0 0
  %69 = vperm.xlu0 %68, %v43
  %v70 = vpop.permute.xlu0 %69
  %73 = vset.pattern.permute.xlu0 0
  %74 = vperm.xlu0 %73, %v44
  %v75 = vpop.permute.xlu0 %74
  %78 = vset.pattern.permute.xlu0 0
  %79 = vperm.xlu0 %78, %v45
  %v80 = vpop.permute.xlu0 %79
  %83 = vset.pattern.permute.xlu0 0
  %84 = vperm.xlu0 %83, %v46
  %v85 = vpop.permute.xlu0 %84
  %v95 = vunpack.c.l.b16 %v15
  %v96 = vunpack.c.l.b16 %v16
  %v97 = vunpack.c.l.b16 %v17
  %v98 = vunpack.c.l.b16 %v18
  %v99 = vunpack.c.l.b16 %v19
  %v100 = vunpack.c.l.b16 %v20
  %v101 = vunpack.c.l.b16 %v21
  %v102 = vunpack.c.l.b16 %v22
  %v103 = vpack.c.b16 %v96, %v95
  %v104 = vpack.c.b16 %v98, %v97
  %v105 = vpack.c.b16 %v100, %v99
  %v106 = vpack.c.b16 %v102, %v101
  %v127 = vunpack.c.l.b16 %v23
  %v128 = vunpack.c.l.b16 %v24
  %v129 = vunpack.c.l.b16 %v25
  %v130 = vunpack.c.l.b16 %v26
  %v131 = vunpack.c.l.b16 %v27
  %v132 = vunpack.c.l.b16 %v28
  %v133 = vunpack.c.l.b16 %v29
  %v134 = vunpack.c.l.b16 %v30
  %v135 = vunpack.c.l.b16 %v31
  %v136 = vunpack.c.l.b16 %v32
  %v137 = vunpack.c.l.b16 %v33
  %v138 = vunpack.c.l.b16 %v34
  %v139 = vunpack.c.l.b16 %v35
  %v140 = vunpack.c.l.b16 %v36
  %v141 = vunpack.c.l.b16 %v37
  %v142 = vunpack.c.l.b16 %v38
  %v143 = vpack.c.b16 %v128, %v127
  %v144 = vpack.c.b16 %v130, %v129
  %v145 = vpack.c.b16 %v132, %v131
  %v146 = vpack.c.b16 %v134, %v133
  %v147 = vpack.c.b16 %v136, %v135
  %v148 = vpack.c.b16 %v138, %v137
  %v149 = vpack.c.b16 %v140, %v139
  %v150 = vpack.c.b16 %v142, %v141
  %159 = vmatprep.subr.bf16.mxu0 0
  %160 = vmatpush1.bf16.msra.mxu0 %v150
  %161 = vmatprep.subr.bf16.mxu0 0
  %162 = vmatpush1.bf16.msra.mxu0 %v149
  %163 = vmatprep.subr.bf16.mxu0 0
  %164 = vmatpush1.bf16.msra.mxu0 %v148
  %165 = vmatprep.subr.bf16.mxu0 0
  %166 = vmatpush1.bf16.msra.mxu0 %v147
  %167 = vmatprep.subr.bf16.mxu0 0
  %168 = vmatpush1.bf16.msra.mxu0 %v146
  %169 = vmatprep.subr.bf16.mxu0 0
  %170 = vmatpush1.bf16.msra.mxu0 %v145
  %171 = vmatprep.subr.bf16.mxu0 0
  %172 = vmatpush1.bf16.msra.mxu0 %v144
  %173 = vmatprep.subr.bf16.mxu0 0
  %174 = vmatpush1.bf16.msra.mxu0 %v143
  %175 = vmatprep.subr.bf16.mxu0 0
  %176 = vmatpush2.bf16.msra.mxu0 0
  %177 = vmatprep.subr.bf16.mxu0 0
  %178 = vmatpush2.bf16.msra.mxu0 0
  %179 = vmatprep.subr.bf16.mxu0 0
  %180 = vmatpush2.bf16.msra.mxu0 0
  %181 = vmatprep.subr.bf16.mxu0 0
  %182 = vmatpush2.bf16.msra.mxu0 0
  %183 = vmatprep.subr.bf16.mxu0 0
  %184 = vmatpush2.bf16.msra.mxu0 0
  %185 = vmatprep.subr.bf16.mxu0 0
  %186 = vmatpush2.bf16.msra.mxu0 0
  %187 = vmatprep.subr.bf16.mxu0 0
  %188 = vmatpush2.bf16.msra.mxu0 0
  %189 = vmatprep.subr.bf16.mxu0 0
  %190 = vmatpush2.bf16.msra.mxu0 0
  %191 = vmatprep.mubr.bf16.mxu0 0
  %192 = vmatmul.mubr.bf16.gmra.mxu0 %v103
  %v193 = vpop.f32.mrf.mxu0
  %v194 = vadd.f32 %v50, %v193
  %v195 = vpop.f32.mrf.mxu0
  %v196 = vpop.f32.mrf.mxu0
  %v197 = vadd.f32 %v55, %v196
  %v198 = vpop.f32.mrf.mxu0
  %199 = vmatprep.mubr.bf16.mxu0 0
  %200 = vmatmul.mubr.bf16.gmra.mxu0 %v104
  %v201 = vpop.f32.mrf.mxu0
  %v202 = vadd.f32 %v60, %v201
  %v203 = vpop.f32.mrf.mxu0
  %v204 = vpop.f32.mrf.mxu0
  %v205 = vadd.f32 %v65, %v204
  %v206 = vpop.f32.mrf.mxu0
  %207 = vmatprep.mubr.bf16.mxu0 0
  %208 = vmatmul.mubr.bf16.gmra.mxu0 %v105
  %v209 = vpop.f32.mrf.mxu0
  %v210 = vadd.f32 %v70, %v209
  %v211 = vpop.f32.mrf.mxu0
  %v212 = vpop.f32.mrf.mxu0
  %v213 = vadd.f32 %v75, %v212
  %v214 = vpop.f32.mrf.mxu0
  %215 = vmatprep.mubr.bf16.mxu0 0
  %216 = vmatmul.mubr.bf16.gmra.mxu0 %v106
  %v217 = vpop.f32.mrf.mxu0
  %v218 = vadd.f32 %v80, %v217
  %v219 = vpop.f32.mrf.mxu0
  %v220 = vpop.f32.mrf.mxu0
  %v221 = vadd.f32 %v85, %v220
  %v222 = vpop.f32.mrf.mxu0
  %223 = vdwg.mxu0
  %v224 = vmax.f32 %v194, 0.0
  %v225 = vmax.f32 %v197, 0.0
  %v226 = vmax.f32 %v202, 0.0
  %v227 = vmax.f32 %v205, 0.0
  %v228 = vmax.f32 %v210, 0.0
  %v229 = vmax.f32 %v213, 0.0
  %v230 = vmax.f32 %v218, 0.0
  %v231 = vmax.f32 %v221, 0.0
  %v232 = vpack.c.bf16 %v225, %v224
  %v233 = vpack.c.bf16 %v227, %v226
  %v234 = vpack.c.bf16 %v229, %v228
  %v235 = vpack.c.bf16 %v231, %v230
  %v240 = vunpack.c.l.b16 %v232
  %v241 = vunpack.c.h.b16 %v232
  %v242 = vunpack.c.l.b16 %v233
  %v243 = vunpack.c.h.b16 %v233
  %v244 = vunpack.c.l.b16 %v234
  %v245 = vunpack.c.h.b16 %v234
  %v246 = vunpack.c.l.b16 %v235
  %v247 = vunpack.c.h.b16 %v235
  %v248 = vpack.c.b16 %v240, %v240
  %v249 = vpack.c.b16 %v241, %v241
  %v250 = vpack.c.b16 %v242, %v242
  %v251 = vpack.c.b16 %v243, %v243
  %v252 = vpack.c.b16 %v244, %v244
  %v253 = vpack.c.b16 %v245, %v245
  %v254 = vpack.c.b16 %v246, %v246
  %v255 = vpack.c.b16 %v247, %v247
  %264 = vst [vmem:[%s3] sm:$0xf] %v248
  %265 = vst [vmem:[%s3 + $0x4] sm:$0xf] %v249
  %266 = vst [vmem:[%s3 + $0x8] sm:$0xf] %v250
  %267 = vst [vmem:[%s3 + $0xc] sm:$0xf] %v251
  %268 = vst [vmem:[%s3 + $0x10] sm:$0xf] %v252
  %269 = vst [vmem:[%s3 + $0x14] sm:$0xf] %v253
  %270 = vst [vmem:[%s3 + $0x18] sm:$0xf] %v254
  %271 = vst [vmem:[%s3 + $0x1c] sm:$0xf] %v255
  // Predicated region
  $region14: #{image_decoder_forward.3} parent=0 // pred_check
    _
  $region15: #{image_decoder_forward.3} parent=0 // pred_check_branch
    %273 = sbr.rel (0) target = $region17
  $region16: #{image_decoder_forward.3} parent=0 // pred_region
    _
  $region17: #{image_decoder_forward.3} parent=0 // pred_fallthru
    _
  // Predicated region
  $region18: #{image_decoder_forward.3} parent=0 // pred_check
    _
  $region19: #{image_decoder_forward.3} parent=0 // pred_check_branch
    %275 = sbr.rel (0) target = $region21
  $region20: #{image_decoder_forward.3} parent=0 // pred_region
    _
  $region21: #{image_decoder_forward.3} parent=0 // pred_fallthru
    _

// kernel: tile.1
$region0: #{tile.1}
  %s0 = inlined_call_operand.vmem [shape: f32[4,8], index: 0, kind: input, shape index: {}]
  %s1 = inlined_call_operand.vmem [shape: f32[32,1], index: 1, kind: output, shape index: {}]
  $region1: #{tile.1} parent=0
    #allocation0 [shape = 'u8[4096]{0}', space=vmem, size = 0x1000, scoped, tag = 'scoped mem for input reshape']
    %s3 = sshll.u32 1, 4
    %s4 = ssub.s32 %s3, 1
    %v5 = vld [vmem:[%s0] sm:%s4]
    %6 = vst [vmem:[#allocation0] sm:%s4] %v5
    %v7 = vld [vmem:[#allocation0] sm:$0xf]
    %vm8 = vcmask 7168
    %9 = vst.msk [vmem:[%s1] ss:$8 sm:$0xf] %vm8, %v7
    %v10 = vld [vmem:[#allocation0] sm:$0xf]
    %11 = vrot.lane.b32.xlu0 %v10, 127
    %v12 = vpop.permute.xlu0 %11
    %vm13 = vcmask 7168
    %s14 = scalar_lea.vmem %s1, 1
    %15 = vst.msk [vmem:[%s14] ss:$8 sm:$0xf] %vm13, %v12
    %v16 = vld [vmem:[#allocation0] sm:$0xf]
    %17 = vrot.lane.b32.xlu0 %v16, 126
    %v18 = vpop.permute.xlu0 %17
    %vm19 = vcmask 7168
    %s20 = scalar_lea.vmem %s1, 2
    %21 = vst.msk [vmem:[%s20] ss:$8 sm:$0xf] %vm19, %v18
    %v22 = vld [vmem:[#allocation0] sm:$0xf]
    %23 = vrot.lane.b32.xlu0 %v22, 125
    %v24 = vpop.permute.xlu0 %23
    %vm25 = vcmask 7168
    %s26 = scalar_lea.vmem %s1, 3
    %27 = vst.msk [vmem:[%s26] ss:$8 sm:$0xf] %vm25, %v24
    %v28 = vld [vmem:[#allocation0] sm:$0xf]
    %29 = vrot.lane.b32.xlu0 %v28, 124
    %v30 = vpop.permute.xlu0 %29
    %vm31 = vcmask 7168
    %s32 = scalar_lea.vmem %s1, 4
    %33 = vst.msk [vmem:[%s32] ss:$8 sm:$0xf] %vm31, %v30
    %v34 = vld [vmem:[#allocation0] sm:$0xf]
    %35 = vrot.lane.b32.xlu0 %v34, 123
    %v36 = vpop.permute.xlu0 %35
    %vm37 = vcmask 7168
    %s38 = scalar_lea.vmem %s1, 5
    %39 = vst.msk [vmem:[%s38] ss:$8 sm:$0xf] %vm37, %v36
    %v40 = vld [vmem:[#allocation0] sm:$0xf]
    %41 = vrot.lane.b32.xlu0 %v40, 122
    %v42 = vpop.permute.xlu0 %41
    %vm43 = vcmask 7168
    %s44 = scalar_lea.vmem %s1, 6
    %45 = vst.msk [vmem:[%s44] ss:$8 sm:$0xf] %vm43, %v42
    %v46 = vld [vmem:[#allocation0] sm:$0xf]
    %47 = vrot.lane.b32.xlu0 %v46, 121
    %v48 = vpop.permute.xlu0 %47
    %vm49 = vcmask 7168
    %s50 = scalar_lea.vmem %s1, 7
    %51 = vst.msk [vmem:[%s50] ss:$8 sm:$0xf] %vm49, %v48

// kernel: image_decoder_forward.4
$region0: #{image_decoder_forward.4}
  #allocation0 [shape = 'u32[]', space=smem, size = 0x4, offset = 0x4, fixed_abs, tag = 'smem constant byte address 0x4 - core index']
  #allocation1 [shape = 'u32[144,128]{1,0:T(1,128)}', space=vmem, size = 0x12000, scoped, tag = 'internal scratch']
  %s0 = inlined_call_operand.vmem [shape: bf16[32,64], index: 0, kind: input, shape index: {}]
  %s1 = inlined_call_operand.vmem [shape: bf16[64,512], index: 1, kind: input, shape index: {}]
  %s2 = inlined_call_operand.vmem [shape: f32[32,1], index: 2, kind: input, shape index: {}]
  %s3 = inlined_call_operand.vmem [shape: bf16[32,512], index: 3, kind: output, shape index: {}]
  %s4 = sld [smem:[#allocation0]]
  $region117: #{image_decoder_forward.4} parent=0
    _
  %s6 = ssub.s32 1, %s4
  %s7 = scalar_select 0, %s6, %s4
  $region1: #{image_decoder_forward.4} parent=0
    #allocation2 [shape = 'u8[65536]{0}', space=vmem, size = 0x10000, scoped, tag = 'input window, operand 1']
    #allocation3 [shape = 'u8[32768]{0}', space=vmem, size = 0x8000, scoped, tag = 'output window, operand 0']
    loop: start=0, step=1, limit=4
    $region2: #{image_decoder_forward.4} parent=1 // loop_pre_header
      _
    $region3: #{image_decoder_forward.4} parent=1 // loop_header
      %s9 = sphi 0, %s13
      %p10 = scmp.ge.s32.totalorder %s9, 4
      %s17 = sphi 0, %s17
      %s19 = sphi 0, %s17
      %s20 = sphi 0, %s19
      %s34 = sphi 0, %s20
      %s40 = sphi 0, %s42
      %s43 = sphi 0, %s40
      %s44 = sphi 0, %s43
      %s60 = sphi 0, %s44
      %s64 = sphi 0, %s64
      %s66 = sphi 0, %s64
      %s67 = sphi 0, %s66
      %s81 = sphi 0, %s67
      %s87 = sphi 0, %s89
      %s90 = sphi 0, %s87
      %s91 = sphi 0, %s90
      %s107 = sphi 0, %s91
    $region4: #{image_decoder_forward.4} parent=1 // loop_header_branch
      %12 = sbr.rel (%p10) target = $region8
    $region5: #{image_decoder_forward.4} parent=1 // loop_body
      %s14 = ssub.s32 %s9, 1
      %s15 = ssub.s32 %s9, 2
      %s16 = sadd.s32 %s9, 1
      %s18 = sadd.s32 %s17, 1
      %p21 = scmp.eq.s32.totalorder %s9, 1
      %p22 = scmp.ne.s32.totalorder %s17, %s19
      %p23 = scmp.eq.s32.totalorder %s9, 0
      %p24 = por %p22, %p23
      %p25 = scmp.ne.s32.totalorder %s17, %s19
      %p26 = scmp.eq.s32.totalorder %s14, 1
      %p27 = por %p25, %p26
      %p28 = scmp.ne.s32.totalorder %s19, %s20
      %p29 = scmp.eq.s32.totalorder %s14, 0
      %p30 = por %p28, %p29
      %p31 = scmp.ne.s32.totalorder %s19, %s20
      %p32 = scmp.eq.s32.totalorder %s15, 1
      %p33 = por %p31, %p32
      %p35 = scmp.ne.s32.totalorder %s20, %s34
      %p36 = scmp.eq.s32.totalorder %s15, 0
      %p37 = por %p35, %p36
      %s38 = ssub.s32 %s9, %s16
      %p39 = scmp.eq.s32.totalorder %s38, 0
      %s41 = sadd.s32 %s40, 1
      %s42 = scalar_select %p39, %s40, %s41
      %p45 = pneg %p39
      %p46 = scmp.eq.s32.totalorder %s9, 1
      %p47 = por %p45, %p46
      %p48 = scmp.ne.s32.totalorder %s40, %s43
      %p49 = scmp.eq.s32.totalorder %s9, 0
      %p50 = por %p48, %p49
      %p51 = scmp.ne.s32.totalorder %s40, %s43
      %p52 = scmp.eq.s32.totalorder %s14, 1
      %p53 = por %p51, %p52
      %p54 = scmp.ne.s32.totalorder %s43, %s44
      %p55 = scmp.eq.s32.totalorder %s14, 0
      %p56 = por %p54, %p55
      %p57 = scmp.ne.s32.totalorder %s43, %s44
      %p58 = scmp.eq.s32.totalorder %s15, 1
      %p59 = por %p57, %p58
      %p61 = scmp.ne.s32.totalorder %s44, %s60
      %p62 = scmp.eq.s32.totalorder %s15, 0
      %p63 = por %p61, %p62
      %s65 = sadd.s32 %s64, 1
      %p68 = scmp.eq.s32.totalorder %s9, 1
      %p69 = scmp.ne.s32.totalorder %s64, %s66
      %p70 = scmp.eq.s32.totalorder %s9, 0
      %p71 = por %p69, %p70
      %p72 = scmp.ne.s32.totalorder %s64, %s66
      %p73 = scmp.eq.s32.totalorder %s14, 1
      %p74 = por %p72, %p73
      %p75 = scmp.ne.s32.totalorder %s66, %s67
      %p76 = scmp.eq.s32.totalorder %s14, 0
      %p77 = por %p75, %p76
      %p78 = scmp.ne.s32.totalorder %s66, %s67
      %p79 = scmp.eq.s32.totalorder %s15, 1
      %p80 = por %p78, %p79
      %p82 = scmp.ne.s32.totalorder %s67, %s81
      %p83 = scmp.eq.s32.totalorder %s15, 0
      %p84 = por %p82, %p83
      %s85 = ssub.s32 %s9, %s16
      %p86 = scmp.eq.s32.totalorder %s85, 0
      %s88 = sadd.s32 %s87, 1
      %s89 = scalar_select %p86, %s87, %s88
      %p92 = pneg %p86
      %p93 = scmp.eq.s32.totalorder %s9, 1
      %p94 = por %p92, %p93
      %p95 = scmp.ne.s32.totalorder %s87, %s90
      %p96 = scmp.eq.s32.totalorder %s9, 0
      %p97 = por %p95, %p96
      %p98 = scmp.ne.s32.totalorder %s87, %s90
      %p99 = scmp.eq.s32.totalorder %s14, 1
      %p100 = por %p98, %p99
      %p101 = scmp.ne.s32.totalorder %s90, %s91
      %p102 = scmp.eq.s32.totalorder %s14, 0
      %p103 = por %p101, %p102
      %p104 = scmp.ne.s32.totalorder %s90, %s91
      %p105 = scmp.eq.s32.totalorder %s15, 1
      %p106 = por %p104, %p105
      %p108 = scmp.ne.s32.totalorder %s91, %s107
      %p109 = scmp.eq.s32.totalorder %s15, 0
      %p110 = por %p108, %p109
      %p111 = scmp.le.s32.totalorder 1, %s9
      %p112 = scmp.lt.s32.totalorder %s9, 3
      %p113 = pnand %p111, %p112
      %p114 = pneg %p113
      // Predicated region
      $region9: #{image_decoder_forward.4} parent=5 // pred_check
        _
      $region10: #{image_decoder_forward.4} parent=5 // pred_check_branch
        %116 = sbr.rel (%p113) target = $region12
      $region11: #{image_decoder_forward.4} parent=5 // pred_region
        %s117 = ssub.s32 %s9, 1
        // Predicated region
        $region13: #{image_decoder_forward.4} parent=11 // pred_check
          %p118 = pneg %p30
        $region14: #{image_decoder_forward.4} parent=11 // pred_check_branch
          %120 = sbr.rel (%p118) target = $region16
        $region15: #{image_decoder_forward.4} parent=11 // pred_region
          _
        $region16: #{image_decoder_forward.4} parent=11 // pred_fallthru
          _
        // Predicated region
        $region17: #{image_decoder_forward.4} parent=11 // pred_check
          %p121 = pneg %p77
        $region18: #{image_decoder_forward.4} parent=11 // pred_check_branch
          %123 = sbr.rel (%p121) target = $region20
        $region19: #{image_decoder_forward.4} parent=11 // pred_region
          _
        $region20: #{image_decoder_forward.4} parent=11 // pred_fallthru
          _
      $region12: #{image_decoder_forward.4} parent=5 // pred_fallthru
        _
      %p124 = scmp.lt.s32.totalorder %s9, 2
      // Predicated region
      $region21: #{image_decoder_forward.4} parent=5 // pred_check
        %p125 = pneg %p124
      $region22: #{image_decoder_forward.4} parent=5 // pred_check_branch
        %127 = sbr.rel (%p125) target = $region24
      $region23: #{image_decoder_forward.4} parent=5 // pred_region
        // Predicated region
        $region25: #{image_decoder_forward.4} parent=23 // pred_check
          %p128 = pneg %p50
        $region26: #{image_decoder_forward.4} parent=23 // pred_check_branch
          %130 = sbr.rel (%p128) target = $region28
        $region27: #{image_decoder_forward.4} parent=23 // pred_region
          %s131 = sand.u32 %s40, 1
          %s132 = sand.u32 %s40, 1
          %s133 = smul.addr %s132, 64
          %s134 = scalar_lea.vmem [#allocation2], %s133
          %s135 = smul.u32 2, %s9
          %s136 = smul.addr %s135, 4
          %s137 = scalar_lea.vmem %s1, %s136
          // Predicated region
          $region29: #{image_decoder_forward.4} parent=27 // pred_check
            _
          $region30: #{image_decoder_forward.4} parent=27 // pred_check_branch
            %139 = sbr.rel (0) target = $region32
          $region31: #{image_decoder_forward.4} parent=27 // pred_region
            // Predicated region
            $region33: #{image_decoder_forward.4} parent=31 // pred_check
              _
            $region34: #{image_decoder_forward.4} parent=31 // pred_check_branch
              %141 = sbr.rel (0) target = $region36
            $region35: #{image_decoder_forward.4} parent=31 // pred_region
              // Predicated region
              $region48: #{image_decoder_forward.4} parent=35 // pred_check
                _
              $region49: #{image_decoder_forward.4} parent=35 // pred_check_branch
                %171 = sbr.rel (0) target = $region51
              $region50: #{image_decoder_forward.4} parent=35 // pred_region
                loop: start=0, step=1, limit=1
                $region52: #{image_decoder_forward.4} parent=50 // loop_pre_header
                  _
                $region53: #{image_decoder_forward.4} parent=50 // loop_header
                  %s173 = sphi 0, %s177
                  %p174 = scmp.ge.s32.totalorder %s173, 1
                  %s178 = sphi %s137, %s137
                  %s179 = sphi %s134, %s134
                $region54: #{image_decoder_forward.4} parent=50 // loop_header_branch
                  %176 = sbr.rel (%p174) target = $region58
                $region55: #{image_decoder_forward.4} parent=50 // loop_body
                  %v180 = vld [vmem:[%s178] sm:$0xff]
                  %181 = vst [vmem:[%s179] sm:$0xff] %v180
                  %v182 = vld [vmem:[%s178 + $0x10] sm:$0xff]
                  %183 = vst [vmem:[%s179 + $0x8] sm:$0xff] %v182
                  %v184 = vld [vmem:[%s178 + $0x20] sm:$0xff]
                  %185 = vst [vmem:[%s179 + $0x10] sm:$0xff] %v184
                  %v186 = vld [vmem:[%s178 + $0x30] sm:$0xff]
                  %187 = vst [vmem:[%s179 + $0x18] sm:$0xff] %v186
                  %v188 = vld [vmem:[%s178 + $0x40] sm:$0xff]
                  %189 = vst [vmem:[%s179 + $0x20] sm:$0xff] %v188
                  %v190 = vld [vmem:[%s178 + $0x50] sm:$0xff]
                  %191 = vst [vmem:[%s179 + $0x28] sm:$0xff] %v190
                  %v192 = vld [vmem:[%s178 + $0x60] sm:$0xff]
                  %193 = vst [vmem:[%s179 + $0x30] sm:$0xff] %v192
                  %v194 = vld [vmem:[%s178 + $0x70] sm:$0xff]
                  %195 = vst [vmem:[%s179 + $0x38] sm:$0xff] %v194
                $region56: #{image_decoder_forward.4} parent=50 // loop_footer
                  %s177 = sadd.s32 1, %s173
                $region57: #{image_decoder_forward.4} parent=50 // loop_footer_branch
                  %172 = sbr.rel target = $region53
                $region58: #{image_decoder_forward.4} parent=50 // loop_exit
                  _
              $region51: #{image_decoder_forward.4} parent=35 // pred_fallthru
                _
              // Predicated region
              $region59: #{image_decoder_forward.4} parent=35 // pred_check
                _
              $region60: #{image_decoder_forward.4} parent=35 // pred_check_branch
                %197 = sbr.rel target = $region62
              $region61: #{image_decoder_forward.4} parent=35 // pred_region
                _
              $region62: #{image_decoder_forward.4} parent=35 // pred_fallthru
                _
            $region36: #{image_decoder_forward.4} parent=31 // pred_fallthru
              _
            // Predicated region
            $region37: #{image_decoder_forward.4} parent=31 // pred_check
              _
            $region38: #{image_decoder_forward.4} parent=31 // pred_check_branch
              %143 = sbr.rel target = $region40
            $region39: #{image_decoder_forward.4} parent=31 // pred_region
              %s145 = ssub.s32 256, 1
              loop: start=0, step=1, limit=1
              $region41: #{image_decoder_forward.4} parent=39 // loop_pre_header
                _
              $region42: #{image_decoder_forward.4} parent=39 // loop_header
                %s147 = sphi 0, %s151
                %p148 = scmp.ge.s32.totalorder %s147, 1
                %s152 = sphi %s137, %s137
                %s153 = sphi %s134, %s134
              $region43: #{image_decoder_forward.4} parent=39 // loop_header_branch
                %150 = sbr.rel (%p148) target = $region47
              $region44: #{image_decoder_forward.4} parent=39 // loop_body
                %v154 = vld [vmem:[%s152] sm:%s145]
                %155 = vst [vmem:[%s153] sm:%s145] %v154
                %v156 = vld [vmem:[%s152 + $0x10] sm:%s145]
                %157 = vst [vmem:[%s153 + $0x8] sm:%s145] %v156
                %v158 = vld [vmem:[%s152 + $0x20] sm:%s145]
                %159 = vst [vmem:[%s153 + $0x10] sm:%s145] %v158
                %v160 = vld [vmem:[%s152 + $0x30] sm:%s145]
                %161 = vst [vmem:[%s153 + $0x18] sm:%s145] %v160
                %v162 = vld [vmem:[%s152 + $0x40] sm:%s145]
                %163 = vst [vmem:[%s153 + $0x20] sm:%s145] %v162
                %v164 = vld [vmem:[%s152 + $0x50] sm:%s145]
                %165 = vst [vmem:[%s153 + $0x28] sm:%s145] %v164
                %v166 = vld [vmem:[%s152 + $0x60] sm:%s145]
                %167 = vst [vmem:[%s153 + $0x30] sm:%s145] %v166
                %v168 = vld [vmem:[%s152 + $0x70] sm:%s145]
                %169 = vst [vmem:[%s153 + $0x38] sm:%s145] %v168
              $region45: #{image_decoder_forward.4} parent=39 // loop_footer
                %s151 = sadd.s32 1, %s147
              $region46: #{image_decoder_forward.4} parent=39 // loop_footer_branch
                %146 = sbr.rel target = $region42
              $region47: #{image_decoder_forward.4} parent=39 // loop_exit
                _
            $region40: #{image_decoder_forward.4} parent=31 // pred_fallthru
              _
          $region32: #{image_decoder_forward.4} parent=27 // pred_fallthru
            _
          %198 = vnop
        $region28: #{image_decoder_forward.4} parent=23 // pred_fallthru
          _
      $region24: #{image_decoder_forward.4} parent=5 // pred_fallthru
        _
      %p199 = scmp.le.s32.totalorder 1, %s9
      %p200 = scmp.lt.s32.totalorder %s9, 3
      %p201 = pnand %p199, %p200
      %p202 = pneg %p201
      // Predicated region
      $region63: #{image_decoder_forward.4} parent=5 // pred_check
        _
      $region64: #{image_decoder_forward.4} parent=5 // pred_check_branch
        %204 = sbr.rel (%p201) target = $region66
      $region65: #{image_decoder_forward.4} parent=5 // pred_region
        %s205 = ssub.s32 %s9, 1
        %s206 = sand.u32 %s43, 1
        %s207 = sand.u32 %s43, 1
        %s208 = smul.addr %s207, 64
        %s209 = scalar_lea.vmem [#allocation2], %s208
        // Predicated region
        $region67: #{image_decoder_forward.4} parent=65 // pred_check
          %p210 = pneg %p56
        $region68: #{image_decoder_forward.4} parent=65 // pred_check_branch
          %212 = sbr.rel (%p210) target = $region70
        $region69: #{image_decoder_forward.4} parent=65 // pred_region
          _
        $region70: #{image_decoder_forward.4} parent=65 // pred_fallthru
          _
        %p213 = pneg %p30
        %p214 = pneg %p27
        %s215 = sand.u32 %s43, 1
        %s216 = sand.u32 %s43, 1
        %s217 = smul.addr %s216, 64
        %s218 = scalar_lea.vmem [#allocation2], %s217
        %p219 = pneg %p56
        %p220 = pneg %p53
        %p221 = pneg %p77
        %p222 = pneg %p74
        %p223 = pneg %p103
        %p224 = pneg %p100
        %s225 = sand.u32 %s90, 1
        %s226 = sand.u32 %s90, 1
        %s227 = smul.addr %s226, 32
        %s228 = scalar_lea.vmem [#allocation3], %s227
        %s229 = smul.u32 2, %s14
        %s230 = smul.u32 2, %s14
        %v232 = vld [vmem:[%s0] sm:$0xf]
        %v233 = vld [vmem:[%s0 + $0x4] sm:$0xf]
        %v234 = vld [vmem:[%s0 + $0x8] sm:$0xf]
        %v235 = vld [vmem:[%s0 + $0xc] sm:$0xf]
        %v236 = vld [vmem:[%s209] sm:$0xff]
        %v237 = vld [vmem:[%s209 + $0x8] sm:$0xff]
        %v238 = vld [vmem:[%s209 + $0x10] sm:$0xff]
        %v239 = vld [vmem:[%s209 + $0x18] sm:$0xff]
        %v240 = vld [vmem:[%s209 + $0x20] sm:$0xff]
        %v241 = vld [vmem:[%s209 + $0x28] sm:$0xff]
        %v242 = vld [vmem:[%s209 + $0x30] sm:$0xff]
        %v243 = vld [vmem:[%s209 + $0x38] sm:$0xff]
        %v244 = vld [vmem:[%s2] sm:$0xff]
        %v245 = vld [vmem:[%s2 + $0x8] sm:$0xff]
        %v246 = vld [vmem:[%s2 + $0x10] sm:$0xff]
        %v247 = vld [vmem:[%s2 + $0x18] sm:$0xff]
        %249 = vset.pattern.permute.xlu0 0
        %250 = vperm.xlu0 %249, %v244
        %v251 = vpop.permute.xlu0 %250
        %254 = vset.pattern.permute.xlu0 0
        %255 = vperm.xlu0 %254, %v245
        %v256 = vpop.permute.xlu0 %255
        %259 = vset.pattern.permute.xlu0 0
        %260 = vperm.xlu0 %259, %v246
        %v261 = vpop.permute.xlu0 %260
        %264 = vset.pattern.permute.xlu0 0
        %265 = vperm.xlu0 %264, %v247
        %v266 = vpop.permute.xlu0 %265
        %v272 = vunpack.c.l.b16 %v232
        %v273 = vunpack.c.l.b16 %v233
        %v274 = vunpack.c.l.b16 %v234
        %v275 = vunpack.c.l.b16 %v235
        %v276 = vpack.c.b16 %v273, %v272
        %v277 = vpack.c.b16 %v275, %v274
        %v286 = vunpack.c.l.b16 %v236
        %v287 = vunpack.c.h.b16 %v236
        %v288 = vunpack.c.l.b16 %v237
        %v289 = vunpack.c.h.b16 %v237
        %v290 = vunpack.c.l.b16 %v238
        %v291 = vunpack.c.h.b16 %v238
        %v292 = vunpack.c.l.b16 %v239
        %v293 = vunpack.c.h.b16 %v239
        %v294 = vunpack.c.l.b16 %v240
        %v295 = vunpack.c.h.b16 %v240
        %v296 = vunpack.c.l.b16 %v241
        %v297 = vunpack.c.h.b16 %v241
        %v298 = vunpack.c.l.b16 %v242
        %v299 = vunpack.c.h.b16 %v242
        %v300 = vunpack.c.l.b16 %v243
        %v301 = vunpack.c.h.b16 %v243
        %v302 = vpack.c.b16 %v288, %v286
        %v303 = vpack.c.b16 %v289, %v287
        %v304 = vpack.c.b16 %v292, %v290
        %v305 = vpack.c.b16 %v293, %v291
        %v306 = vpack.c.b16 %v296, %v294
        %v307 = vpack.c.b16 %v297, %v295
        %v308 = vpack.c.b16 %v300, %v298
        %v309 = vpack.c.b16 %v301, %v299
        %vm318 = vcmask 523264
        %v320 = vsel %vm318, %v276, 0
        %v323 = vsel %vm318, %v277, 0
        %325 = vmatprep.subr.bf16.mxu0 0
        %326 = vmatpush1.bf16.msra.mxu0 0
        %327 = vmatprep.subr.bf16.mxu0 0
        %328 = vmatpush1.bf16.msra.mxu0 0
        %329 = vmatprep.subr.bf16.mxu0 0
        %330 = vmatpush1.bf16.msra.mxu0 0
        %331 = vmatprep.subr.bf16.mxu0 0
        %332 = vmatpush1.bf16.msra.mxu0 0
        %333 = vmatprep.subr.bf16.mxu0 %v309
        %334 = vmatpush1.bf16.msra.mxu0 %v308
        %335 = vmatprep.subr.bf16.mxu0 %v307
        %336 = vmatpush1.bf16.msra.mxu0 %v306
        %337 = vmatprep.subr.bf16.mxu0 %v305
        %338 = vmatpush1.bf16.msra.mxu0 %v304
        %339 = vmatprep.subr.bf16.mxu0 %v303
        %340 = vmatpush1.bf16.msra.mxu0 %v302
        %341 = vmatprep.subr.bf16.mxu0 0
        %342 = vmatpush2.bf16.msra.mxu0 0
        %343 = vmatprep.subr.bf16.mxu0 0
        %344 = vmatpush2.bf16.msra.mxu0 0
        %345 = vmatprep.subr.bf16.mxu0 0
        %346 = vmatpush2.bf16.msra.mxu0 0
        %347 = vmatprep.subr.bf16.mxu0 0
        %348 = vmatpush2.bf16.msra.mxu0 0
        %349 = vmatprep.subr.bf16.mxu0 0
        %350 = vmatpush2.bf16.msra.mxu0 0
        %351 = vmatprep.subr.bf16.mxu0 0
        %352 = vmatpush2.bf16.msra.mxu0 0
        %353 = vmatprep.subr.bf16.mxu0 0
        %354 = vmatpush2.bf16.msra.mxu0 0
        %355 = vmatprep.subr.bf16.mxu0 0
        %356 = vmatpush2.bf16.msra.mxu0 0
        %357 = vmatprep.mubr.bf16.mxu0 0
        %358 = vmatmul.mubr.bf16.gmra.mxu0 %v320
        %v359 = vpop.f32.mrf.mxu0
        %v360 = vadd.f32 %v251, %v359
        %v361 = vpop.f32.mrf.mxu0
        %v362 = vadd.f32 %v251, %v361
        %v363 = vpop.f32.mrf.mxu0
        %v364 = vadd.f32 %v256, %v363
        %v365 = vpop.f32.mrf.mxu0
        %v366 = vadd.f32 %v256, %v365
        %367 = vmatprep.mubr.bf16.mxu0 0
        %368 = vmatmul.mubr.bf16.gmra.mxu0 %v323
        %v369 = vpop.f32.mrf.mxu0
        %v370 = vadd.f32 %v261, %v369
        %v371 = vpop.f32.mrf.mxu0
        %v372 = vadd.f32 %v261, %v371
        %v373 = vpop.f32.mrf.mxu0
        %v374 = vadd.f32 %v266, %v373
        %v375 = vpop.f32.mrf.mxu0
        %v376 = vadd.f32 %v266, %v375
        %377 = vdwg.mxu0
        %v378 = vmax.f32 %v360, 0.0
        %v379 = vmax.f32 %v362, 0.0
        %v380 = vmax.f32 %v364, 0.0
        %v381 = vmax.f32 %v366, 0.0
        %v382 = vmax.f32 %v370, 0.0
        %v383 = vmax.f32 %v372, 0.0
        %v384 = vmax.f32 %v374, 0.0
        %v385 = vmax.f32 %v376, 0.0
        %v386 = vpack.c.bf16 %v380, %v378
        %v387 = vpack.c.bf16 %v381, %v379
        %v388 = vpack.c.bf16 %v384, %v382
        %v389 = vpack.c.bf16 %v385, %v383
        %v394 = vunpack.c.l.b16 %v386
        %v395 = vunpack.c.l.b16 %v387
        %v396 = vunpack.c.h.b16 %v386
        %v397 = vunpack.c.h.b16 %v387
        %v398 = vunpack.c.l.b16 %v388
        %v399 = vunpack.c.l.b16 %v389
        %v400 = vunpack.c.h.b16 %v388
        %v401 = vunpack.c.h.b16 %v389
        %v402 = vpack.c.b16 %v395, %v394
        %v403 = vpack.c.b16 %v397, %v396
        %v404 = vpack.c.b16 %v399, %v398
        %v405 = vpack.c.b16 %v401, %v400
        %410 = vst [vmem:[%s228] sm:$0xff] %v402
        %411 = vst [vmem:[%s228 + $0x8] sm:$0xff] %v403
        %412 = vst [vmem:[%s228 + $0x10] sm:$0xff] %v404
        %413 = vst [vmem:[%s228 + $0x18] sm:$0xff] %v405
        %s414 = sand.u32 %s90, 1
        %s415 = sand.u32 %s90, 1
        %s416 = smul.addr %s415, 32
        %s417 = scalar_lea.vmem [#allocation3], %s416
        // Predicated region
        $region71: #{image_decoder_forward.4} parent=65 // pred_check
          %p418 = pneg %p100
        $region72: #{image_decoder_forward.4} parent=65 // pred_check_branch
          %420 = sbr.rel (%p418) target = $region74
        $region73: #{image_decoder_forward.4} parent=65 // pred_region
          %s421 = smul.u32 2, %s14
          %s422 = smul.addr %s421, 4
          %s423 = scalar_lea.vmem %s3, %s422
          // Predicated region
          $region75: #{image_decoder_forward.4} parent=73 // pred_check
            _
          $region76: #{image_decoder_forward.4} parent=73 // pred_check_branch
            %425 = sbr.rel (0) target = $region78
          $region77: #{image_decoder_forward.4} parent=73 // pred_region
            // Predicated region
            $region79: #{image_decoder_forward.4} parent=77 // pred_check
              _
            $region80: #{image_decoder_forward.4} parent=77 // pred_check_branch
              %427 = sbr.rel (0) target = $region82
            $region81: #{image_decoder_forward.4} parent=77 // pred_region
              // Predicated region
              $region94: #{image_decoder_forward.4} parent=81 // pred_check
                _
              $region95: #{image_decoder_forward.4} parent=81 // pred_check_branch
                %449 = sbr.rel (0) target = $region97
              $region96: #{image_decoder_forward.4} parent=81 // pred_region
                loop: start=0, step=1, limit=1
                $region98: #{image_decoder_forward.4} parent=96 // loop_pre_header
                  _
                $region99: #{image_decoder_forward.4} parent=96 // loop_header
                  %s451 = sphi 0, %s455
                  %p452 = scmp.ge.s32.totalorder %s451, 1
                  %s456 = sphi %s417, %s417
                  %s457 = sphi %s423, %s423
                $region100: #{image_decoder_forward.4} parent=96 // loop_header_branch
                  %454 = sbr.rel (%p452) target = $region104
                $region101: #{image_decoder_forward.4} parent=96 // loop_body
                  %v458 = vld [vmem:[%s456] sm:$0xff]
                  %459 = vst [vmem:[%s457] sm:$0xff] %v458
                  %v460 = vld [vmem:[%s456 + $0x8] sm:$0xff]
                  %461 = vst [vmem:[%s457 + $0x10] sm:$0xff] %v460
                  %v462 = vld [vmem:[%s456 + $0x10] sm:$0xff]
                  %463 = vst [vmem:[%s457 + $0x20] sm:$0xff] %v462
                  %v464 = vld [vmem:[%s456 + $0x18] sm:$0xff]
                  %465 = vst [vmem:[%s457 + $0x30] sm:$0xff] %v464
                $region102: #{image_decoder_forward.4} parent=96 // loop_footer
                  %s455 = sadd.s32 1, %s451
                $region103: #{image_decoder_forward.4} parent=96 // loop_footer_branch
                  %450 = sbr.rel target = $region99
                $region104: #{image_decoder_forward.4} parent=96 // loop_exit
                  _
              $region97: #{image_decoder_forward.4} parent=81 // pred_fallthru
                _
              // Predicated region
              $region105: #{image_decoder_forward.4} parent=81 // pred_check
                _
              $region106: #{image_decoder_forward.4} parent=81 // pred_check_branch
                %467 = sbr.rel target = $region108
              $region107: #{image_decoder_forward.4} parent=81 // pred_region
                _
              $region108: #{image_decoder_forward.4} parent=81 // pred_fallthru
                _
            $region82: #{image_decoder_forward.4} parent=77 // pred_fallthru
              _
            // Predicated region
            $region83: #{image_decoder_forward.4} parent=77 // pred_check
              _
            $region84: #{image_decoder_forward.4} parent=77 // pred_check_branch
              %429 = sbr.rel target = $region86
            $region85: #{image_decoder_forward.4} parent=77 // pred_region
              %s431 = ssub.s32 256, 1
              loop: start=0, step=1, limit=1
              $region87: #{image_decoder_forward.4} parent=85 // loop_pre_header
                _
              $region88: #{image_decoder_forward.4} parent=85 // loop_header
                %s433 = sphi 0, %s437
                %p434 = scmp.ge.s32.totalorder %s433, 1
                %s438 = sphi %s417, %s417
                %s439 = sphi %s423, %s423
              $region89: #{image_decoder_forward.4} parent=85 // loop_header_branch
                %436 = sbr.rel (%p434) target = $region93
              $region90: #{image_decoder_forward.4} parent=85 // loop_body
                %v440 = vld [vmem:[%s438] sm:%s431]
                %441 = vst [vmem:[%s439] sm:%s431] %v440
                %v442 = vld [vmem:[%s438 + $0x8] sm:%s431]
                %443 = vst [vmem:[%s439 + $0x10] sm:%s431] %v442
                %v444 = vld [vmem:[%s438 + $0x10] sm:%s431]
                %445 = vst [vmem:[%s439 + $0x20] sm:%s431] %v444
                %v446 = vld [vmem:[%s438 + $0x18] sm:%s431]
                %447 = vst [vmem:[%s439 + $0x30] sm:%s431] %v446
              $region91: #{image_decoder_forward.4} parent=85 // loop_footer
                %s437 = sadd.s32 1, %s433
              $region92: #{image_decoder_forward.4} parent=85 // loop_footer_branch
                %432 = sbr.rel target = $region88
              $region93: #{image_decoder_forward.4} parent=85 // loop_exit
                _
            $region86: #{image_decoder_forward.4} parent=77 // pred_fallthru
              _
          $region78: #{image_decoder_forward.4} parent=73 // pred_fallthru
            _
          %468 = vnop
        $region74: #{image_decoder_forward.4} parent=65 // pred_fallthru
          _
      $region66: #{image_decoder_forward.4} parent=5 // pred_fallthru
        _
      %p469 = scmp.le.s32.totalorder 2, %s9
      // Predicated region
      $region109: #{image_decoder_forward.4} parent=5 // pred_check
        %p470 = pneg %p469
      $region110: #{image_decoder_forward.4} parent=5 // pred_check_branch
        %472 = sbr.rel (%p470) target = $region112
      $region111: #{image_decoder_forward.4} parent=5 // pred_region
        %s473 = ssub.s32 %s9, 2
        // Predicated region
        $region113: #{image_decoder_forward.4} parent=111 // pred_check
          %p474 = pneg %p106
        $region114: #{image_decoder_forward.4} parent=111 // pred_check_branch
          %476 = sbr.rel (%p474) target = $region116
        $region115: #{image_decoder_forward.4} parent=111 // pred_region
          %s477 = sand.u32 %s91, 1
          %s478 = sand.u32 %s91, 1
          %s479 = smul.addr %s478, 32
          %s480 = scalar_lea.vmem [#allocation3], %s479
        $region116: #{image_decoder_forward.4} parent=111 // pred_fallthru
          _
      $region112: #{image_decoder_forward.4} parent=5 // pred_fallthru
        _
    $region6: #{image_decoder_forward.4} parent=1 // loop_footer
      %s13 = sadd.s32 1, %s9
    $region7: #{image_decoder_forward.4} parent=1 // loop_footer_branch
      %8 = sbr.rel target = $region3
    $region8: #{image_decoder_forward.4} parent=1 // loop_exit
      _

// kernel: image_decoder_forward.5
$region0: #{image_decoder_forward.5}
  #allocation0 [shape = 'u32[]', space=smem, size = 0x4, offset = 0x4, fixed_abs, tag = 'smem constant byte address 0x4 - core index']
  #allocation1 [shape = 'u32[144,128]{1,0:T(1,128)}', space=vmem, size = 0x12000, scoped, tag = 'internal scratch']
  %s0 = inlined_call_operand.vmem [shape: bf16[2,1216,56], index: 0, kind: input, shape index: {}]
  %s1 = inlined_call_operand.vmem [shape: bf16[7,8,56], index: 1, kind: input, shape index: {}]
  %s2 = inlined_call_operand.vmem [shape: f32[8,1], index: 2, kind: input, shape index: {}]
  %s3 = inlined_call_operand.vmem [shape: f32[2,8,1024], index: 3, kind: output, shape index: {}]
  %s4 = sld [smem:[#allocation0]]
  $region45: #{image_decoder_forward.5} parent=0
    _
  %s6 = ssub.s32 1, %s4
  %s7 = scalar_select 0, %s6, %s4
  loop: start=0, step=1, limit=6
  $region2: #{image_decoder_forward.5} parent=0 // loop_pre_header
    _
  $region3: #{image_decoder_forward.5} parent=0 // loop_header
    %s9 = sphi 0, %s13
    %p10 = scmp.ge.s32.totalorder %s9, 6
    %s16 = sphi 0, %s28
    %s17 = sphi 0, %s24
    %s18 = sphi 0, %s16
    %s19 = sphi 0, %s17
    %s20 = sphi 0, %s18
    %s21 = sphi 0, %s19
    %s31 = sphi 0, %s33
    %s34 = sphi 0, %s31
    %s35 = sphi 0, %s34
    %s51 = sphi 0, %s35
    %s55 = sphi 0, %s55
    %s57 = sphi 0, %s55
    %s58 = sphi 0, %s57
    %s72 = sphi 0, %s58
    %s76 = sphi 0, %s76
    %s78 = sphi 0, %s76
    %s79 = sphi 0, %s78
    %s93 = sphi 0, %s79
    %s101 = sphi 0, %s103
    %s104 = sphi 0, %s101
    %s105 = sphi 0, %s104
    %s121 = sphi 0, %s105
  $region4: #{image_decoder_forward.5} parent=0 // loop_header_branch
    %12 = sbr.rel (%p10) target = $region8
  $region5: #{image_decoder_forward.5} parent=0 // loop_body
    %s14 = ssub.s32 %s9, 1
    %s15 = ssub.s32 %s9, 2
    %s22 = sadd.s32 1, %s17
    %p23 = scmp.ge.s32.totalorder %s22, 2
    %s24 = scalar_select %p23, 0, %s22
    %s25 = sadd.s32 1, %s16
    %s26 = scalar_select %p23, %s25, %s16
    %p27 = scmp.ge.s32.totalorder %s26, 2
    %s28 = scalar_select %p27, 0, %s26
    %s29 = ssub.s32 %s16, %s28
    %p30 = scmp.eq.s32.totalorder %s29, 0
    %s32 = sadd.s32 %s31, 1
    %s33 = scalar_select %p30, %s31, %s32
    %p36 = pneg %p30
    %p37 = scmp.eq.s32.totalorder %s9, 3
    %p38 = por %p36, %p37
    %p39 = scmp.ne.s32.totalorder %s31, %s34
    %p40 = scmp.eq.s32.totalorder %s9, 0
    %p41 = por %p39, %p40
    %p42 = scmp.ne.s32.totalorder %s31, %s34
    %p43 = scmp.eq.s32.totalorder %s14, 3
    %p44 = por %p42, %p43
    %p45 = scmp.ne.s32.totalorder %s34, %s35
    %p46 = scmp.eq.s32.totalorder %s14, 0
    %p47 = por %p45, %p46
    %p48 = scmp.ne.s32.totalorder %s34, %s35
    %p49 = scmp.eq.s32.totalorder %s15, 3
    %p50 = por %p48, %p49
    %p52 = scmp.ne.s32.totalorder %s35, %s51
    %p53 = scmp.eq.s32.totalorder %s15, 0
    %p54 = por %p52, %p53
    %s56 = sadd.s32 %s55, 1
    %p59 = scmp.eq.s32.totalorder %s9, 3
    %p60 = scmp.ne.s32.totalorder %s55, %s57
    %p61 = scmp.eq.s32.totalorder %s9, 0
    %p62 = por %p60, %p61
    %p63 = scmp.ne.s32.totalorder %s55, %s57
    %p64 = scmp.eq.s32.totalorder %s14, 3
    %p65 = por %p63, %p64
    %p66 = scmp.ne.s32.totalorder %s57, %s58
    %p67 = scmp.eq.s32.totalorder %s14, 0
    %p68 = por %p66, %p67
    %p69 = scmp.ne.s32.totalorder %s57, %s58
    %p70 = scmp.eq.s32.totalorder %s15, 3
    %p71 = por %p69, %p70
    %p73 = scmp.ne.s32.totalorder %s58, %s72
    %p74 = scmp.eq.s32.totalorder %s15, 0
    %p75 = por %p73, %p74
    %s77 = sadd.s32 %s76, 1
    %p80 = scmp.eq.s32.totalorder %s9, 3
    %p81 = scmp.ne.s32.totalorder %s76, %s78
    %p82 = scmp.eq.s32.totalorder %s9, 0
    %p83 = por %p81, %p82
    %p84 = scmp.ne.s32.totalorder %s76, %s78
    %p85 = scmp.eq.s32.totalorder %s14, 3
    %p86 = por %p84, %p85
    %p87 = scmp.ne.s32.totalorder %s78, %s79
    %p88 = scmp.eq.s32.totalorder %s14, 0
    %p89 = por %p87, %p88
    %p90 = scmp.ne.s32.totalorder %s78, %s79
    %p91 = scmp.eq.s32.totalorder %s15, 3
    %p92 = por %p90, %p91
    %p94 = scmp.ne.s32.totalorder %s79, %s93
    %p95 = scmp.eq.s32.totalorder %s15, 0
    %p96 = por %p94, %p95
    %s97 = ssub.s32 %s16, %s28
    %s98 = ssub.s32 %s17, %s24
    %s99 = sor.u32 %s97, %s98
    %p100 = scmp.eq.s32.totalorder %s99, 0
    %s102 = sadd.s32 %s101, 1
    %s103 = scalar_select %p100, %s101, %s102
    %p106 = pneg %p100
    %p107 = scmp.eq.s32.totalorder %s9, 3
    %p108 = por %p106, %p107
    %p109 = scmp.ne.s32.totalorder %s101, %s104
    %p110 = scmp.eq.s32.totalorder %s9, 0
    %p111 = por %p109, %p110
    %p112 = scmp.ne.s32.totalorder %s101, %s104
    %p113 = scmp.eq.s32.totalorder %s14, 3
    %p114 = por %p112, %p113
    %p115 = scmp.ne.s32.totalorder %s104, %s105
    %p116 = scmp.eq.s32.totalorder %s14, 0
    %p117 = por %p115, %p116
    %p118 = scmp.ne.s32.totalorder %s104, %s105
    %p119 = scmp.eq.s32.totalorder %s15, 3
    %p120 = por %p118, %p119
    %p122 = scmp.ne.s32.totalorder %s105, %s121
    %p123 = scmp.eq.s32.totalorder %s15, 0
    %p124 = por %p122, %p123
    %p125 = scmp.le.s32.totalorder 1, %s9
    %p126 = scmp.lt.s32.totalorder %s9, 5
    %p127 = pnand %p125, %p126
    %p128 = pneg %p127
    // Predicated region
    $region9: #{image_decoder_forward.5} parent=5 // pred_check
      _
    $region10: #{image_decoder_forward.5} parent=5 // pred_check_branch
      %130 = sbr.rel (%p127) target = $region12
    $region11: #{image_decoder_forward.5} parent=5 // pred_region
      %s131 = ssub.s32 %s9, 1
      // Predicated region
      $region13: #{image_decoder_forward.5} parent=11 // pred_check
        %p132 = pneg %p68
      $region14: #{image_decoder_forward.5} parent=11 // pred_check_branch
        %134 = sbr.rel (%p132) target = $region16
      $region15: #{image_decoder_forward.5} parent=11 // pred_region
        _
      $region16: #{image_decoder_forward.5} parent=11 // pred_fallthru
        _
      // Predicated region
      $region17: #{image_decoder_forward.5} parent=11 // pred_check
        %p135 = pneg %p89
      $region18: #{image_decoder_forward.5} parent=11 // pred_check_branch
        %137 = sbr.rel (%p135) target = $region20
      $region19: #{image_decoder_forward.5} parent=11 // pred_region
        _
      $region20: #{image_decoder_forward.5} parent=11 // pred_fallthru
        _
    $region12: #{image_decoder_forward.5} parent=5 // pred_fallthru
      _
    %p138 = scmp.lt.s32.totalorder %s9, 4
    // Predicated region
    $region21: #{image_decoder_forward.5} parent=5 // pred_check
      %p139 = pneg %p138
    $region22: #{image_decoder_forward.5} parent=5 // pred_check_branch
      %141 = sbr.rel (%p139) target = $region24
    $region23: #{image_decoder_forward.5} parent=5 // pred_region
      // Predicated region
      $region25: #{image_decoder_forward.5} parent=23 // pred_check
        %p142 = pneg %p41
      $region26: #{image_decoder_forward.5} parent=23 // pred_check_branch
        %144 = sbr.rel (%p142) target = $region28
      $region27: #{image_decoder_forward.5} parent=23 // pred_region
        %p145 = scmp.lt.s32.totalorder %s16, 1
        %s146 = scalar_select %p145, %s16, 1
        %s147 = smul.addr %s146, 152
        %s148 = smul.addr %s147, 4
        %s149 = scalar_lea.vmem %s0, %s148
      $region28: #{image_decoder_forward.5} parent=23 // pred_fallthru
        _
    $region24: #{image_decoder_forward.5} parent=5 // pred_fallthru
      _
    %p150 = scmp.le.s32.totalorder 1, %s9
    %p151 = scmp.lt.s32.totalorder %s9, 5
    %p152 = pnand %p150, %p151
    %p153 = pneg %p152
    // Predicated region
    $region29: #{image_decoder_forward.5} parent=5 // pred_check
      _
    $region30: #{image_decoder_forward.5} parent=5 // pred_check_branch
      %155 = sbr.rel (%p152) target = $region32
    $region31: #{image_decoder_forward.5} parent=5 // pred_region
      %s156 = ssub.s32 %s9, 1
      %p157 = scmp.lt.s32.totalorder %s18, 1
      %s158 = scalar_select %p157, %s18, 1
      %s159 = smul.addr %s158, 152
      %s160 = smul.addr %s159, 4
      %s161 = scalar_lea.vmem %s0, %s160
      %p162 = pneg %p47
      %p163 = pneg %p44
      %p164 = pneg %p68
      %p165 = pneg %p65
      %p166 = pneg %p89
      %p167 = pneg %p86
      %p168 = pneg %p117
      %p169 = pneg %p114
      %s170 = smul.u32 4, %s19
      %p171 = scmp.lt.s32.totalorder %s18, 1
      %s172 = scalar_select %p171, %s18, 1
      %p173 = scmp.lt.s32.totalorder %s170, 7
      %s174 = scalar_select %p173, %s170, 7
      %s175 = smul.addr %s172, 8
      %s176 = sadd.s32 %s174, %s175
      %s177 = smul.addr %s176, 8
      %s178 = scalar_lea.vmem %s3, %s177
      %p179 = scmp.lt.s32.totalorder %s18, 1
      %s180 = scalar_select %p179, %s18, 1
      %s181 = smul.addr %s180, 152
      %s182 = smul.addr %s181, 4
      %s183 = scalar_lea.vmem %s0, %s182
      %s184 = smul.u32 4, %s19
      %p185 = scmp.lt.s32.totalorder %s18, 1
      %s186 = scalar_select %p185, %s18, 1
      %p187 = scmp.lt.s32.totalorder %s184, 7
      %s188 = scalar_select %p187, %s184, 7
      %s189 = smul.addr %s186, 8
      %s190 = sadd.s32 %s188, %s189
      %s191 = smul.addr %s190, 8
      %s192 = scalar_lea.vmem %s3, %s191
      %s193 = smul.u32 4, %s19
      %s195 = smul.u32 %s19, 512
      %s196 = sshra.s32 %s195, 3
      %s197 = sand.u32 %s195, 7
      %s198 = smul.addr %s196, 4
      %s199 = scalar_lea.vmem %s183, %s198
      %v200 = vld [vmem:[%s199] sm:$0xf]
      %v201 = vld [vmem:[%s199 + $0x4] sm:$0xf]
      %v202 = vld [vmem:[%s199 + $0x8] sm:$0xf]
      %v203 = vld [vmem:[%s199 + $0xc] sm:$0xf]
      %v204 = vld [vmem:[%s199 + $0x10] sm:$0xf]
      %v205 = vld [vmem:[%s199 + $0x14] sm:$0xf]
      %v206 = vld [vmem:[%s199 + $0x18] sm:$0xf]
      %v207 = vld [vmem:[%s199 + $0x1c] sm:$0xf]
      %v208 = vld [vmem:[%s199 + $0x20] sm:$0xf]
      %v209 = vld [vmem:[%s199 + $0x24] sm:$0xf]
      %v210 = vld [vmem:[%s199 + $0x28] sm:$0xf]
      %v211 = vld [vmem:[%s199 + $0x2c] sm:$0xf]
      %v212 = vld [vmem:[%s199 + $0x30] sm:$0xf]
      %v213 = vld [vmem:[%s199 + $0x34] sm:$0xf]
      %v214 = vld [vmem:[%s199 + $0x38] sm:$0xf]
      %v215 = vld [vmem:[%s199 + $0x3c] sm:$0xf]
      %v216 = vld [vmem:[%s199 + $0x40] sm:$0xf]
      %v217 = vld [vmem:[%s199 + $0x44] sm:$0xf]
      %v218 = vld [vmem:[%s199 + $0x48] sm:$0xf]
      %v219 = vld [vmem:[%s199 + $0x4c] sm:$0xf]
      %v220 = vld [vmem:[%s199 + $0x50] sm:$0xf]
      %v221 = vld [vmem:[%s199 + $0x54] sm:$0xf]
      %v222 = vld [vmem:[%s199 + $0x58] sm:$0xf]
      %v223 = vld [vmem:[%s199 + $0x5c] sm:$0xf]
      %v224 = vld [vmem:[%s199 + $0x60] sm:$0xf]
      %v225 = vld [vmem:[%s199 + $0x64] sm:$0xf]
      %v226 = vld [vmem:[%s199 + $0x68] sm:$0xf]
      %v227 = vld [vmem:[%s199 + $0x6c] sm:$0xf]
      %v228 = vld [vmem:[%s199 + $0x70] sm:$0xf]
      %v229 = vld [vmem:[%s199 + $0x74] sm:$0xf]
      %v230 = vld [vmem:[%s199 + $0x78] sm:$0xf]
      %v231 = vld [vmem:[%s199 + $0x7c] sm:$0xf]
      %v232 = vld [vmem:[%s199 + $0x80] sm:$0xf]
      %v233 = vld [vmem:[%s199 + $0x84] sm:$0xf]
      %v234 = vld [vmem:[%s199 + $0x88] sm:$0xf]
      %v235 = vld [vmem:[%s199 + $0x8c] sm:$0xf]
      %v236 = vld [vmem:[%s199 + $0x90] sm:$0xf]
      %v237 = vld [vmem:[%s199 + $0x94] sm:$0xf]
      %v238 = vld [vmem:[%s199 + $0x98] sm:$0xf]
      %v239 = vld [vmem:[%s199 + $0x9c] sm:$0xf]
      %v240 = vld [vmem:[%s199 + $0xa0] sm:$0xf]
      %v241 = vld [vmem:[%s199 + $0xa4] sm:$0xf]
      %v242 = vld [vmem:[%s199 + $0xa8] sm:$0xf]
      %v243 = vld [vmem:[%s199 + $0xac] sm:$0xf]
      %v244 = vld [vmem:[%s199 + $0xb0] sm:$0xf]
      %v245 = vld [vmem:[%s199 + $0xb4] sm:$0xf]
      %v246 = vld [vmem:[%s199 + $0xb8] sm:$0xf]
      %v247 = vld [vmem:[%s199 + $0xbc] sm:$0xf]
      %v248 = vld [vmem:[%s199 + $0xc0] sm:$0xf]
      %v249 = vld [vmem:[%s199 + $0xc4] sm:$0xf]
      %v250 = vld [vmem:[%s199 + $0xc8] sm:$0xf]
      %v251 = vld [vmem:[%s199 + $0xcc] sm:$0xf]
      %v252 = vld [vmem:[%s199 + $0xd0] sm:$0xf]
      %v253 = vld [vmem:[%s199 + $0xd4] sm:$0xf]
      %v254 = vld [vmem:[%s199 + $0xd8] sm:$0xf]
      %v255 = vld [vmem:[%s199 + $0xdc] sm:$0xf]
      %v256 = vld [vmem:[%s199 + $0xe0] sm:$0xf]
      %v257 = vld [vmem:[%s199 + $0xe4] sm:$0xf]
      %v258 = vld [vmem:[%s199 + $0xe8] sm:$0xf]
      %v259 = vld [vmem:[%s199 + $0xec] sm:$0xf]
      %v260 = vld [vmem:[%s199 + $0xf0] sm:$0xf]
      %v261 = vld [vmem:[%s199 + $0xf4] sm:$0xf]
      %v262 = vld [vmem:[%s199 + $0xf8] sm:$0xf]
      %v263 = vld [vmem:[%s199 + $0xfc] sm:$0xf]
      %v264 = vld [vmem:[%s1] sm:$0xf]
      %s265 = sadd.s32 %s195, 32
      %s266 = sshra.s32 %s265, 3
      %s267 = sand.u32 %s265, 7
      %s268 = smul.addr %s266, 4
      %s269 = scalar_lea.vmem %s183, %s268
      %v270 = vld [vmem:[%s269] sm:$0xf]
      %v271 = vld [vmem:[%s269 + $0x4] sm:$0xf]
      %v272 = vld [vmem:[%s269 + $0x8] sm:$0xf]
      %v273 = vld [vmem:[%s269 + $0xc] sm:$0xf]
      %v274 = vld [vmem:[%s269 + $0x10] sm:$0xf]
      %v275 = vld [vmem:[%s269 + $0x14] sm:$0xf]
      %v276 = vld [vmem:[%s269 + $0x18] sm:$0xf]
      %v277 = vld [vmem:[%s269 + $0x1c] sm:$0xf]
      %v278 = vld [vmem:[%s269 + $0x20] sm:$0xf]
      %v279 = vld [vmem:[%s269 + $0x24] sm:$0xf]
      %v280 = vld [vmem:[%s269 + $0x28] sm:$0xf]
      %v281 = vld [vmem:[%s269 + $0x2c] sm:$0xf]
      %v282 = vld [vmem:[%s269 + $0x30] sm:$0xf]
      %v283 = vld [vmem:[%s269 + $0x34] sm:$0xf]
      %v284 = vld [vmem:[%s269 + $0x38] sm:$0xf]
      %v285 = vld [vmem:[%s269 + $0x3c] sm:$0xf]
      %v286 = vld [vmem:[%s269 + $0x40] sm:$0xf]
      %v287 = vld [vmem:[%s269 + $0x44] sm:$0xf]
      %v288 = vld [vmem:[%s269 + $0x48] sm:$0xf]
      %v289 = vld [vmem:[%s269 + $0x4c] sm:$0xf]
      %v290 = vld [vmem:[%s269 + $0x50] sm:$0xf]
      %v291 = vld [vmem:[%s269 + $0x54] sm:$0xf]
      %v292 = vld [vmem:[%s269 + $0x58] sm:$0xf]
      %v293 = vld [vmem:[%s269 + $0x5c] sm:$0xf]
      %v294 = vld [vmem:[%s269 + $0x60] sm:$0xf]
      %v295 = vld [vmem:[%s269 + $0x64] sm:$0xf]
      %v296 = vld [vmem:[%s269 + $0x68] sm:$0xf]
      %v297 = vld [vmem:[%s269 + $0x6c] sm:$0xf]
      %v298 = vld [vmem:[%s269 + $0x70] sm:$0xf]
      %v299 = vld [vmem:[%s269 + $0x74] sm:$0xf]
      %v300 = vld [vmem:[%s269 + $0x78] sm:$0xf]
      %v301 = vld [vmem:[%s269 + $0x7c] sm:$0xf]
      %v302 = vld [vmem:[%s269 + $0x80] sm:$0xf]
      %v303 = vld [vmem:[%s269 + $0x84] sm:$0xf]
      %v304 = vld [vmem:[%s269 + $0x88] sm:$0xf]
      %v305 = vld [vmem:[%s269 + $0x8c] sm:$0xf]
      %v306 = vld [vmem:[%s269 + $0x90] sm:$0xf]
      %v307 = vld [vmem:[%s269 + $0x94] sm:$0xf]
      %v308 = vld [vmem:[%s269 + $0x98] sm:$0xf]
      %v309 = vld [vmem:[%s269 + $0x9c] sm:$0xf]
      %v310 = vld [vmem:[%s269 + $0xa0] sm:$0xf]
      %v311 = vld [vmem:[%s269 + $0xa4] sm:$0xf]
      %v312 = vld [vmem:[%s269 + $0xa8] sm:$0xf]
      %v313 = vld [vmem:[%s269 + $0xac] sm:$0xf]
      %v314 = vld [vmem:[%s269 + $0xb0] sm:$0xf]
      %v315 = vld [vmem:[%s269 + $0xb4] sm:$0xf]
      %v316 = vld [vmem:[%s269 + $0xb8] sm:$0xf]
      %v317 = vld [vmem:[%s269 + $0xbc] sm:$0xf]
      %v318 = vld [vmem:[%s269 + $0xc0] sm:$0xf]
      %v319 = vld [vmem:[%s269 + $0xc4] sm:$0xf]
      %v320 = vld [vmem:[%s269 + $0xc8] sm:$0xf]
      %v321 = vld [vmem:[%s269 + $0xcc] sm:$0xf]
      %v322 = vld [vmem:[%s269 + $0xd0] sm:$0xf]
      %v323 = vld [vmem:[%s269 + $0xd4] sm:$0xf]
      %v324 = vld [vmem:[%s269 + $0xd8] sm:$0xf]
      %v325 = vld [vmem:[%s269 + $0xdc] sm:$0xf]
      %v326 = vld [vmem:[%s269 + $0xe0] sm:$0xf]
      %v327 = vld [vmem:[%s269 + $0xe4] sm:$0xf]
      %v328 = vld [vmem:[%s269 + $0xe8] sm:$0xf]
      %v329 = vld [vmem:[%s269 + $0xec] sm:$0xf]
      %v330 = vld [vmem:[%s269 + $0xf0] sm:$0xf]
      %v331 = vld [vmem:[%s269 + $0xf4] sm:$0xf]
      %v332 = vld [vmem:[%s269 + $0xf8] sm:$0xf]
      %v333 = vld [vmem:[%s269 + $0xfc] sm:$0xf]
      %s334 = scalar_lea.vmem %s1, 4
      %v335 = vld [vmem:[%s334] sm:$0xf]
      %v400 = vunpack.c.l.b16 %v270
      %v401 = vunpack.c.l.b16 %v271
      %v402 = vunpack.c.l.b16 %v272
      %v403 = vunpack.c.l.b16 %v273
      %v404 = vunpack.c.l.b16 %v274
      %v405 = vunpack.c.l.b16 %v275
      %v406 = vunpack.c.l.b16 %v276
      %v407 = vunpack.c.l.b16 %v277
      %v408 = vunpack.c.l.b16 %v278
      %v409 = vunpack.c.l.b16 %v279
      %v410 = vunpack.c.l.b16 %v280
      %v411 = vunpack.c.l.b16 %v281
      %v412 = vunpack.c.l.b16 %v282
      %v413 = vunpack.c.l.b16 %v283
      %v414 = vunpack.c.l.b16 %v284
      %v415 = vunpack.c.l.b16 %v285
      %v416 = vunpack.c.l.b16 %v286
      %v417 = vunpack.c.l.b16 %v287
      %v418 = vunpack.c.l.b16 %v288
      %v419 = vunpack.c.l.b16 %v289
      %v420 = vunpack.c.l.b16 %v290
      %v421 = vunpack.c.l.b16 %v291
      %v422 = vunpack.c.l.b16 %v292
      %v423 = vunpack.c.l.b16 %v293
      %v424 = vunpack.c.l.b16 %v294
      %v425 = vunpack.c.l.b16 %v295
      %v426 = vunpack.c.l.b16 %v296
      %v427 = vunpack.c.l.b16 %v297
      %v428 = vunpack.c.l.b16 %v298
      %v429 = vunpack.c.l.b16 %v299
      %v430 = vunpack.c.l.b16 %v300
      %v431 = vunpack.c.l.b16 %v301
      %v432 = vunpack.c.l.b16 %v302
      %v433 = vunpack.c.l.b16 %v303
      %v434 = vunpack.c.l.b16 %v304
      %v435 = vunpack.c.l.b16 %v305
      %v436 = vunpack.c.l.b16 %v306
      %v437 = vunpack.c.l.b16 %v307
      %v438 = vunpack.c.l.b16 %v308
      %v439 = vunpack.c.l.b16 %v309
      %v440 = vunpack.c.l.b16 %v310
      %v441 = vunpack.c.l.b16 %v311
      %v442 = vunpack.c.l.b16 %v312
      %v443 = vunpack.c.l.b16 %v313
      %v444 = vunpack.c.l.b16 %v314
      %v445 = vunpack.c.l.b16 %v315
      %v446 = vunpack.c.l.b16 %v316
      %v447 = vunpack.c.l.b16 %v317
      %v448 = vunpack.c.l.b16 %v318
      %v449 = vunpack.c.l.b16 %v319
      %v450 = vunpack.c.l.b16 %v320
      %v451 = vunpack.c.l.b16 %v321
      %v452 = vunpack.c.l.b16 %v322
      %v453 = vunpack.c.l.b16 %v323
      %v454 = vunpack.c.l.b16 %v324
      %v455 = vunpack.c.l.b16 %v325
      %v456 = vunpack.c.l.b16 %v326
      %v457 = vunpack.c.l.b16 %v327
      %v458 = vunpack.c.l.b16 %v328
      %v459 = vunpack.c.l.b16 %v329
      %v460 = vunpack.c.l.b16 %v330
      %v461 = vunpack.c.l.b16 %v331
      %v462 = vunpack.c.l.b16 %v332
      %v463 = vunpack.c.l.b16 %v333
      %v464 = vpack.c.b16 %v401, %v400
      %v465 = vpack.c.b16 %v403, %v402
      %v466 = vpack.c.b16 %v405, %v404
      %v467 = vpack.c.b16 %v407, %v406
      %v468 = vpack.c.b16 %v409, %v408
      %v469 = vpack.c.b16 %v411, %v410
      %v470 = vpack.c.b16 %v413, %v412
      %v471 = vpack.c.b16 %v415, %v414
      %v472 = vpack.c.b16 %v417, %v416
      %v473 = vpack.c.b16 %v419, %v418
      %v474 = vpack.c.b16 %v421, %v420
      %v475 = vpack.c.b16 %v423, %v422
      %v476 = vpack.c.b16 %v425, %v424
      %v477 = vpack.c.b16 %v427, %v426
      %v478 = vpack.c.b16 %v429, %v428
      %v479 = vpack.c.b16 %v431, %v430
      %v480 = vpack.c.b16 %v433, %v432
      %v481 = vpack.c.b16 %v435, %v434
      %v482 = vpack.c.b16 %v437, %v436
      %v483 = vpack.c.b16 %v439, %v438
      %v484 = vpack.c.b16 %v441, %v440
      %v485 = vpack.c.b16 %v443, %v442
      %v486 = vpack.c.b16 %v445, %v444
      %v487 = vpack.c.b16 %v447, %v446
      %v488 = vpack.c.b16 %v449, %v448
      %v489 = vpack.c.b16 %v451, %v450
      %v490 = vpack.c.b16 %v453, %v452
      %v491 = vpack.c.b16 %v455, %v454
      %v492 = vpack.c.b16 %v457, %v456
      %v493 = vpack.c.b16 %v459, %v458
      %v494 = vpack.c.b16 %v461, %v460
      %v495 = vpack.c.b16 %v463, %v462
      %vm496 = vcmask 457728
      %v498 = vsel %vm496, %v335, 0
      %v501 = vsel %vm496, %v464, 0
      %v504 = vsel %vm496, %v465, 0
      %v507 = vsel %vm496, %v466, 0
      %v510 = vsel %vm496, %v467, 0
      %v513 = vsel %vm496, %v468, 0
      %v516 = vsel %vm496, %v469, 0
      %v519 = vsel %vm496, %v470, 0
      %v522 = vsel %vm496, %v471, 0
      %v525 = vsel %vm496, %v472, 0
      %v528 = vsel %vm496, %v473, 0
      %v531 = vsel %vm496, %v474, 0
      %v534 = vsel %vm496, %v475, 0
      %v537 = vsel %vm496, %v476, 0
      %v540 = vsel %vm496, %v477, 0
      %v543 = vsel %vm496, %v478, 0
      %v546 = vsel %vm496, %v479, 0
      %v549 = vsel %vm496, %v480, 0
      %v552 = vsel %vm496, %v481, 0
      %v555 = vsel %vm496, %v482, 0
      %v558 = vsel %vm496, %v483, 0
      %v561 = vsel %vm496, %v484, 0
      %v564 = vsel %vm496, %v485, 0
      %v567 = vsel %vm496, %v486, 0
      %v570 = vsel %vm496, %v487, 0
      %v573 = vsel %vm496, %v488, 0
      %v576 = vsel %vm496, %v489, 0
      %v579 = vsel %vm496, %v490, 0
      %v582 = vsel %vm496, %v491, 0
      %v585 = vsel %vm496, %v492, 0
      %v588 = vsel %vm496, %v493, 0
      %v591 = vsel %vm496, %v494, 0
      %v594 = vsel %vm496, %v495, 0
      %596 = vmatprep.subr.bf16.mxu0 0
      %597 = vmatpush1.bf16.xpose.msra.mxu0 %v522
      %598 = vmatprep.subr.bf16.mxu0 0
      %599 = vmatpush1.bf16.xpose.msra.mxu0 %v519
      %600 = vmatprep.subr.bf16.mxu0 0
      %601 = vmatpush1.bf16.xpose.msra.mxu0 %v516
      %602 = vmatprep.subr.bf16.mxu0 0
      %603 = vmatpush1.bf16.xpose.msra.mxu0 %v513
      %604 = vmatprep.subr.bf16.mxu0 0
      %605 = vmatpush1.bf16.xpose.msra.mxu0 %v510
      %606 = vmatprep.subr.bf16.mxu0 0
      %607 = vmatpush1.bf16.xpose.msra.mxu0 %v507
      %608 = vmatprep.subr.bf16.mxu0 0
      %609 = vmatpush1.bf16.xpose.msra.mxu0 %v504
      %610 = vmatprep.subr.bf16.mxu0 0
      %611 = vmatpush1.bf16.xpose.msra.mxu0 %v501
      %612 = vmatprep.subr.bf16.mxu0 0
      %613 = vmatpush2.bf16.xpose.msra.mxu0 %v546
      %614 = vmatprep.subr.bf16.mxu0 0
      %615 = vmatpush2.bf16.xpose.msra.mxu0 %v543
      %616 = vmatprep.subr.bf16.mxu0 0
      %617 = vmatpush2.bf16.xpose.msra.mxu0 %v540
      %618 = vmatprep.subr.bf16.mxu0 0
      %619 = vmatpush2.bf16.xpose.msra.mxu0 %v537
      %620 = vmatprep.subr.bf16.mxu0 0
      %621 = vmatpush2.bf16.xpose.msra.mxu0 %v534
      %622 = vmatprep.subr.bf16.mxu0 0
      %623 = vmatpush2.bf16.xpose.msra.mxu0 %v531
      %624 = vmatprep.subr.bf16.mxu0 0
      %625 = vmatpush2.bf16.xpose.msra.mxu0 %v528
      %626 = vmatprep.subr.bf16.mxu0 0
      %627 = vmatpush2.bf16.xpose.msra.mxu0 %v525
      %628 = vmatprep.mubr.bf16.mxu0 0
      %629 = vmatmul.mubr.bf16.gmra.mxu0 %v498
      %v630 = vpop.f32.mrf.mxu0
      %v631 = vadd.f32 0.0, %v630
      %v632 = vpop.f32.mrf.mxu0
      %v633 = vadd.f32 0.0, %v632
      %v634 = vpop.f32.mrf.mxu0
      %v635 = vpop.f32.mrf.mxu0
      %636 = vdwg.mxu0
      %637 = vmatprep.subr.bf16.mxu0 0
      %638 = vmatpush1.bf16.xpose.msra.mxu0 %v570
      %639 = vmatprep.subr.bf16.mxu0 0
      %640 = vmatpush1.bf16.xpose.msra.mxu0 %v567
      %641 = vmatprep.subr.bf16.mxu0 0
      %642 = vmatpush1.bf16.xpose.msra.mxu0 %v564
      %643 = vmatprep.subr.bf16.mxu0 0
      %644 = vmatpush1.bf16.xpose.msra.mxu0 %v561
      %645 = vmatprep.subr.bf16.mxu0 0
      %646 = vmatpush1.bf16.xpose.msra.mxu0 %v558
      %647 = vmatprep.subr.bf16.mxu0 0
      %648 = vmatpush1.bf16.xpose.msra.mxu0 %v555
      %649 = vmatprep.subr.bf16.mxu0 0
      %650 = vmatpush1.bf16.xpose.msra.mxu0 %v552
      %651 = vmatprep.subr.bf16.mxu0 0
      %652 = vmatpush1.bf16.xpose.msra.mxu0 %v549
      %653 = vmatprep.subr.bf16.mxu0 0
      %654 = vmatpush2.bf16.xpose.msra.mxu0 %v594
      %655 = vmatprep.subr.bf16.mxu0 0
      %656 = vmatpush2.bf16.xpose.msra.mxu0 %v591
      %657 = vmatprep.subr.bf16.mxu0 0
      %658 = vmatpush2.bf16.xpose.msra.mxu0 %v588
      %659 = vmatprep.subr.bf16.mxu0 0
      %660 = vmatpush2.bf16.xpose.msra.mxu0 %v585
      %661 = vmatprep.subr.bf16.mxu0 0
      %662 = vmatpush2.bf16.xpose.msra.mxu0 %v582
      %663 = vmatprep.subr.bf16.mxu0 0
      %664 = vmatpush2.bf16.xpose.msra.mxu0 %v579
      %665 = vmatprep.subr.bf16.mxu0 0
      %666 = vmatpush2.bf16.xpose.msra.mxu0 %v576
      %667 = vmatprep.subr.bf16.mxu0 0
      %668 = vmatpush2.bf16.xpose.msra.mxu0 %v573
      %669 = vmatprep.mubr.bf16.mxu0 0
      %670 = vmatmul.mubr.bf16.gmra.mxu0 %v498
      %v671 = vpop.f32.mrf.mxu0
      %v672 = vadd.f32 0.0, %v671
      %v673 = vpop.f32.mrf.mxu0
      %v674 = vadd.f32 0.0, %v673
      %v675 = vpop.f32.mrf.mxu0
      %v676 = vpop.f32.mrf.mxu0
      %677 = vdwg.mxu0
      %v742 = vunpack.c.l.b16 %v200
      %v743 = vunpack.c.l.b16 %v201
      %v744 = vunpack.c.l.b16 %v202
      %v745 = vunpack.c.l.b16 %v203
      %v746 = vunpack.c.l.b16 %v204
      %v747 = vunpack.c.l.b16 %v205
      %v748 = vunpack.c.l.b16 %v206
      %v749 = vunpack.c.l.b16 %v207
      %v750 = vunpack.c.l.b16 %v208
      %v751 = vunpack.c.l.b16 %v209
      %v752 = vunpack.c.l.b16 %v210
      %v753 = vunpack.c.l.b16 %v211
      %v754 = vunpack.c.l.b16 %v212
      %v755 = vunpack.c.l.b16 %v213
      %v756 = vunpack.c.l.b16 %v214
      %v757 = vunpack.c.l.b16 %v215
      %v758 = vunpack.c.l.b16 %v216
      %v759 = vunpack.c.l.b16 %v217
      %v760 = vunpack.c.l.b16 %v218
      %v761 = vunpack.c.l.b16 %v219
      %v762 = vunpack.c.l.b16 %v220
      %v763 = vunpack.c.l.b16 %v221
      %v764 = vunpack.c.l.b16 %v222
      %v765 = vunpack.c.l.b16 %v223
      %v766 = vunpack.c.l.b16 %v224
      %v767 = vunpack.c.l.b16 %v225
      %v768 = vunpack.c.l.b16 %v226
      %v769 = vunpack.c.l.b16 %v227
      %v770 = vunpack.c.l.b16 %v228
      %v771 = vunpack.c.l.b16 %v229
      %v772 = vunpack.c.l.b16 %v230
      %v773 = vunpack.c.l.b16 %v231
      %v774 = vunpack.c.l.b16 %v232
      %v775 = vunpack.c.l.b16 %v233
      %v776 = vunpack.c.l.b16 %v234
      %v777 = vunpack.c.l.b16 %v235
      %v778 = vunpack.c.l.b16 %v236
      %v779 = vunpack.c.l.b16 %v237
      %v780 = vunpack.c.l.b16 %v238
      %v781 = vunpack.c.l.b16 %v239
      %v782 = vunpack.c.l.b16 %v240
      %v783 = vunpack.c.l.b16 %v241
      %v784 = vunpack.c.l.b16 %v242
      %v785 = vunpack.c.l.b16 %v243
      %v786 = vunpack.c.l.b16 %v244
      %v787 = vunpack.c.l.b16 %v245
      %v788 = vunpack.c.l.b16 %v246
      %v789 = vunpack.c.l.b16 %v247
      %v790 = vunpack.c.l.b16 %v248
      %v791 = vunpack.c.l.b16 %v249
      %v792 = vunpack.c.l.b16 %v250
      %v793 = vunpack.c.l.b16 %v251
      %v794 = vunpack.c.l.b16 %v252
      %v795 = vunpack.c.l.b16 %v253
      %v796 = vunpack.c.l.b16 %v254
      %v797 = vunpack.c.l.b16 %v255
      %v798 = vunpack.c.l.b16 %v256
      %v799 = vunpack.c.l.b16 %v257
      %v800 = vunpack.c.l.b16 %v258
      %v801 = vunpack.c.l.b16 %v259
      %v802 = vunpack.c.l.b16 %v260
      %v803 = vunpack.c.l.b16 %v261
      %v804 = vunpack.c.l.b16 %v262
      %v805 = vunpack.c.l.b16 %v263
      %v806 = vpack.c.b16 %v743, %v742
      %v807 = vpack.c.b16 %v745, %v744
      %v808 = vpack.c.b16 %v747, %v746
      %v809 = vpack.c.b16 %v749, %v748
      %v810 = vpack.c.b16 %v751, %v750
      %v811 = vpack.c.b16 %v753, %v752
      %v812 = vpack.c.b16 %v755, %v754
      %v813 = vpack.c.b16 %v757, %v756
      %v814 = vpack.c.b16 %v759, %v758
      %v815 = vpack.c.b16 %v761, %v760
      %v816 = vpack.c.b16 %v763, %v762
      %v817 = vpack.c.b16 %v765, %v764
      %v818 = vpack.c.b16 %v767, %v766
      %v819 = vpack.c.b16 %v769, %v768
      %v820 = vpack.c.b16 %v771, %v770
      %v821 = vpack.c.b16 %v773, %v772
      %v822 = vpack.c.b16 %v775, %v774
      %v823 = vpack.c.b16 %v777, %v776
      %v824 = vpack.c.b16 %v779, %v778
      %v825 = vpack.c.b16 %v781, %v780
      %v826 = vpack.c.b16 %v783, %v782
      %v827 = vpack.c.b16 %v785, %v784
      %v828 = vpack.c.b16 %v787, %v786
      %v829 = vpack.c.b16 %v789, %v788
      %v830 = vpack.c.b16 %v791, %v790
      %v831 = vpack.c.b16 %v793, %v792
      %v832 = vpack.c.b16 %v795, %v794
      %v833 = vpack.c.b16 %v797, %v796
      %v834 = vpack.c.b16 %v799, %v798
      %v835 = vpack.c.b16 %v801, %v800
      %v836 = vpack.c.b16 %v803, %v802
      %v837 = vpack.c.b16 %v805, %v804
      %v839 = vsel %vm496, %v264, 0
      %v842 = vsel %vm496, %v806, 0
      %v845 = vsel %vm496, %v807, 0
      %v848 = vsel %vm496, %v808, 0
      %v851 = vsel %vm496, %v809, 0
      %v854 = vsel %vm496, %v810, 0
      %v857 = vsel %vm496, %v811, 0
      %v860 = vsel %vm496, %v812, 0
      %v863 = vsel %vm496, %v813, 0
      %v866 = vsel %vm496, %v814, 0
      %v869 = vsel %vm496, %v815, 0
      %v872 = vsel %vm496, %v816, 0
      %v875 = vsel %vm496, %v817, 0
      %v878 = vsel %vm496, %v818, 0
      %v881 = vsel %vm496, %v819, 0
      %v884 = vsel %vm496, %v820, 0
      %v887 = vsel %vm496, %v821, 0
      %v890 = vsel %vm496, %v822, 0
      %v893 = vsel %vm496, %v823, 0
      %v896 = vsel %vm496, %v824, 0
      %v899 = vsel %vm496, %v825, 0
      %v902 = vsel %vm496, %v826, 0
      %v905 = vsel %vm496, %v827, 0
      %v908 = vsel %vm496, %v828, 0
      %v911 = vsel %vm496, %v829, 0
      %v914 = vsel %vm496, %v830, 0
      %v917 = vsel %vm496, %v831, 0
      %v920 = vsel %vm496, %v832, 0
      %v923 = vsel %vm496, %v833, 0
      %v926 = vsel %vm496, %v834, 0
      %v929 = vsel %vm496, %v835, 0
      %v932 = vsel %vm496, %v836, 0
      %v935 = vsel %vm496, %v837, 0
      %937 = vmatprep.subr.bf16.mxu0 0
      %938 = vmatpush1.bf16.xpose.msra.mxu0 %v863
      %939 = vmatprep.subr.bf16.mxu0 0
      %940 = vmatpush1.bf16.xpose.msra.mxu0 %v860
      %941 = vmatprep.subr.bf16.mxu0 0
      %942 = vmatpush1.bf16.xpose.msra.mxu0 %v857
      %943 = vmatprep.subr.bf16.mxu0 0
      %944 = vmatpush1.bf16.xpose.msra.mxu0 %v854
      %945 = vmatprep.subr.bf16.mxu0 0
      %946 = vmatpush1.bf16.xpose.msra.mxu0 %v851
      %947 = vmatprep.subr.bf16.mxu0 0
      %948 = vmatpush1.bf16.xpose.msra.mxu0 %v848
      %949 = vmatprep.subr.bf16.mxu0 0
      %950 = vmatpush1.bf16.xpose.msra.mxu0 %v845
      %951 = vmatprep.subr.bf16.mxu0 0
      %952 = vmatpush1.bf16.xpose.msra.mxu0 %v842
      %953 = vmatprep.subr.bf16.mxu0 0
      %954 = vmatpush2.bf16.xpose.msra.mxu0 %v887
      %955 = vmatprep.subr.bf16.mxu0 0
      %956 = vmatpush2.bf16.xpose.msra.mxu0 %v884
      %957 = vmatprep.subr.bf16.mxu0 0
      %958 = vmatpush2.bf16.xpose.msra.mxu0 %v881
      %959 = vmatprep.subr.bf16.mxu0 0
      %960 = vmatpush2.bf16.xpose.msra.mxu0 %v878
      %961 = vmatprep.subr.bf16.mxu0 0
      %962 = vmatpush2.bf16.xpose.msra.mxu0 %v875
      %963 = vmatprep.subr.bf16.mxu0 0
      %964 = vmatpush2.bf16.xpose.msra.mxu0 %v872
      %965 = vmatprep.subr.bf16.mxu0 0
      %966 = vmatpush2.bf16.xpose.msra.mxu0 %v869
      %967 = vmatprep.subr.bf16.mxu0 0
      %968 = vmatpush2.bf16.xpose.msra.mxu0 %v866
      %969 = vmatprep.mubr.bf16.mxu0 0
      %970 = vmatmul.mubr.bf16.gmra.mxu0 %v839
      %v971 = vpop.f32.mrf.mxu0
      %v972 = vadd.f32 %v631, %v971
      %v973 = vpop.f32.mrf.mxu0
      %v974 = vadd.f32 %v633, %v973
      %v975 = vpop.f32.mrf.mxu0
      %v976 = vpop.f32.mrf.mxu0
      %977 = vdwg.mxu0
      %978 = vmatprep.subr.bf16.mxu0 0
      %979 = vmatpush1.bf16.xpose.msra.mxu0 %v911
      %980 = vmatprep.subr.bf16.mxu0 0
      %981 = vmatpush1.bf16.xpose.msra.mxu0 %v908
      %982 = vmatprep.subr.bf16.mxu0 0
      %983 = vmatpush1.bf16.xpose.msra.mxu0 %v905
      %984 = vmatprep.subr.bf16.mxu0 0
      %985 = vmatpush1.bf16.xpose.msra.mxu0 %v902
      %986 = vmatprep.subr.bf16.mxu0 0
      %987 = vmatpush1.bf16.xpose.msra.mxu0 %v899
      %988 = vmatprep.subr.bf16.mxu0 0
      %989 = vmatpush1.bf16.xpose.msra.mxu0 %v896
      %990 = vmatprep.subr.bf16.mxu0 0
      %991 = vmatpush1.bf16.xpose.msra.mxu0 %v893
      %992 = vmatprep.subr.bf16.mxu0 0
      %993 = vmatpush1.bf16.xpose.msra.mxu0 %v890
      %994 = vmatprep.subr.bf16.mxu0 0
      %995 = vmatpush2.bf16.xpose.msra.mxu0 %v935
      %996 = vmatprep.subr.bf16.mxu0 0
      %997 = vmatpush2.bf16.xpose.msra.mxu0 %v932
      %998 = vmatprep.subr.bf16.mxu0 0
      %999 = vmatpush2.bf16.xpose.msra.mxu0 %v929
      %1000 = vmatprep.subr.bf16.mxu0 0
      %1001 = vmatpush2.bf16.xpose.msra.mxu0 %v926
      %1002 = vmatprep.subr.bf16.mxu0 0
      %1003 = vmatpush2.bf16.xpose.msra.mxu0 %v923
      %1004 = vmatprep.subr.bf16.mxu0 0
      %1005 = vmatpush2.bf16.xpose.msra.mxu0 %v920
      %1006 = vmatprep.subr.bf16.mxu0 0
      %1007 = vmatpush2.bf16.xpose.msra.mxu0 %v917
      %1008 = vmatprep.subr.bf16.mxu0 0
      %1009 = vmatpush2.bf16.xpose.msra.mxu0 %v914
      %1010 = vmatprep.mubr.bf16.mxu0 0
      %1011 = vmatmul.mubr.bf16.gmra.mxu0 %v839
      %v1012 = vpop.f32.mrf.mxu0
      %v1013 = vadd.f32 %v672, %v1012
      %v1014 = vpop.f32.mrf.mxu0
      %v1015 = vadd.f32 %v674, %v1014
      %v1016 = vpop.f32.mrf.mxu0
      %v1017 = vpop.f32.mrf.mxu0
      %1018 = vdwg.mxu0
      %s1019 = sadd.s32 %s195, 64
      %s1020 = sshra.s32 %s1019, 3
      %s1021 = sand.u32 %s1019, 7
      %s1022 = smul.addr %s1020, 4
      %s1023 = scalar_lea.vmem %s183, %s1022
      %v1024 = vld [vmem:[%s1023] sm:$0xf]
      %v1025 = vld [vmem:[%s1023 + $0x4] sm:$0xf]
      %v1026 = vld [vmem:[%s1023 + $0x8] sm:$0xf]
      %v1027 = vld [vmem:[%s1023 + $0xc] sm:$0xf]
      %v1028 = vld [vmem:[%s1023 + $0x10] sm:$0xf]
      %v1029 = vld [vmem:[%s1023 + $0x14] sm:$0xf]
      %v1030 = vld [vmem:[%s1023 + $0x18] sm:$0xf]
      %v1031 = vld [vmem:[%s1023 + $0x1c] sm:$0xf]
      %v1032 = vld [vmem:[%s1023 + $0x20] sm:$0xf]
      %v1033 = vld [vmem:[%s1023 + $0x24] sm:$0xf]
      %v1034 = vld [vmem:[%s1023 + $0x28] sm:$0xf]
      %v1035 = vld [vmem:[%s1023 + $0x2c] sm:$0xf]
      %v1036 = vld [vmem:[%s1023 + $0x30] sm:$0xf]
      %v1037 = vld [vmem:[%s1023 + $0x34] sm:$0xf]
      %v1038 = vld [vmem:[%s1023 + $0x38] sm:$0xf]
      %v1039 = vld [vmem:[%s1023 + $0x3c] sm:$0xf]
      %v1040 = vld [vmem:[%s1023 + $0x40] sm:$0xf]
      %v1041 = vld [vmem:[%s1023 + $0x44] sm:$0xf]
      %v1042 = vld [vmem:[%s1023 + $0x48] sm:$0xf]
      %v1043 = vld [vmem:[%s1023 + $0x4c] sm:$0xf]
      %v1044 = vld [vmem:[%s1023 + $0x50] sm:$0xf]
      %v1045 = vld [vmem:[%s1023 + $0x54] sm:$0xf]
      %v1046 = vld [vmem:[%s1023 + $0x58] sm:$0xf]
      %v1047 = vld [vmem:[%s1023 + $0x5c] sm:$0xf]
      %v1048 = vld [vmem:[%s1023 + $0x60] sm:$0xf]
      %v1049 = vld [vmem:[%s1023 + $0x64] sm:$0xf]
      %v1050 = vld [vmem:[%s1023 + $0x68] sm:$0xf]
      %v1051 = vld [vmem:[%s1023 + $0x6c] sm:$0xf]
      %v1052 = vld [vmem:[%s1023 + $0x70] sm:$0xf]
      %v1053 = vld [vmem:[%s1023 + $0x74] sm:$0xf]
      %v1054 = vld [vmem:[%s1023 + $0x78] sm:$0xf]
      %v1055 = vld [vmem:[%s1023 + $0x7c] sm:$0xf]
      %v1056 = vld [vmem:[%s1023 + $0x80] sm:$0xf]
      %v1057 = vld [vmem:[%s1023 + $0x84] sm:$0xf]
      %v1058 = vld [vmem:[%s1023 + $0x88] sm:$0xf]
      %v1059 = vld [vmem:[%s1023 + $0x8c] sm:$0xf]
      %v1060 = vld [vmem:[%s1023 + $0x90] sm:$0xf]
      %v1061 = vld [vmem:[%s1023 + $0x94] sm:$0xf]
      %v1062 = vld [vmem:[%s1023 + $0x98] sm:$0xf]
      %v1063 = vld [vmem:[%s1023 + $0x9c] sm:$0xf]
      %v1064 = vld [vmem:[%s1023 + $0xa0] sm:$0xf]
      %v1065 = vld [vmem:[%s1023 + $0xa4] sm:$0xf]
      %v1066 = vld [vmem:[%s1023 + $0xa8] sm:$0xf]
      %v1067 = vld [vmem:[%s1023 + $0xac] sm:$0xf]
      %v1068 = vld [vmem:[%s1023 + $0xb0] sm:$0xf]
      %v1069 = vld [vmem:[%s1023 + $0xb4] sm:$0xf]
      %v1070 = vld [vmem:[%s1023 + $0xb8] sm:$0xf]
      %v1071 = vld [vmem:[%s1023 + $0xbc] sm:$0xf]
      %v1072 = vld [vmem:[%s1023 + $0xc0] sm:$0xf]
      %v1073 = vld [vmem:[%s1023 + $0xc4] sm:$0xf]
      %v1074 = vld [vmem:[%s1023 + $0xc8] sm:$0xf]
      %v1075 = vld [vmem:[%s1023 + $0xcc] sm:$0xf]
      %v1076 = vld [vmem:[%s1023 + $0xd0] sm:$0xf]
      %v1077 = vld [vmem:[%s1023 + $0xd4] sm:$0xf]
      %v1078 = vld [vmem:[%s1023 + $0xd8] sm:$0xf]
      %v1079 = vld [vmem:[%s1023 + $0xdc] sm:$0xf]
      %v1080 = vld [vmem:[%s1023 + $0xe0] sm:$0xf]
      %v1081 = vld [vmem:[%s1023 + $0xe4] sm:$0xf]
      %v1082 = vld [vmem:[%s1023 + $0xe8] sm:$0xf]
      %v1083 = vld [vmem:[%s1023 + $0xec] sm:$0xf]
      %v1084 = vld [vmem:[%s1023 + $0xf0] sm:$0xf]
      %v1085 = vld [vmem:[%s1023 + $0xf4] sm:$0xf]
      %v1086 = vld [vmem:[%s1023 + $0xf8] sm:$0xf]
      %v1087 = vld [vmem:[%s1023 + $0xfc] sm:$0xf]
      %s1088 = scalar_lea.vmem %s1, 8
      %v1089 = vld [vmem:[%s1088] sm:$0xf]
      %v1154 = vunpack.c.l.b16 %v1024
      %v1155 = vunpack.c.l.b16 %v1025
      %v1156 = vunpack.c.l.b16 %v1026
      %v1157 = vunpack.c.l.b16 %v1027
      %v1158 = vunpack.c.l.b16 %v1028
      %v1159 = vunpack.c.l.b16 %v1029
      %v1160 = vunpack.c.l.b16 %v1030
      %v1161 = vunpack.c.l.b16 %v1031
      %v1162 = vunpack.c.l.b16 %v1032
      %v1163 = vunpack.c.l.b16 %v1033
      %v1164 = vunpack.c.l.b16 %v1034
      %v1165 = vunpack.c.l.b16 %v1035
      %v1166 = vunpack.c.l.b16 %v1036
      %v1167 = vunpack.c.l.b16 %v1037
      %v1168 = vunpack.c.l.b16 %v1038
      %v1169 = vunpack.c.l.b16 %v1039
      %v1170 = vunpack.c.l.b16 %v1040
      %v1171 = vunpack.c.l.b16 %v1041
      %v1172 = vunpack.c.l.b16 %v1042
      %v1173 = vunpack.c.l.b16 %v1043
      %v1174 = vunpack.c.l.b16 %v1044
      %v1175 = vunpack.c.l.b16 %v1045
      %v1176 = vunpack.c.l.b16 %v1046
      %v1177 = vunpack.c.l.b16 %v1047
      %v1178 = vunpack.c.l.b16 %v1048
      %v1179 = vunpack.c.l.b16 %v1049
      %v1180 = vunpack.c.l.b16 %v1050
      %v1181 = vunpack.c.l.b16 %v1051
      %v1182 = vunpack.c.l.b16 %v1052
      %v1183 = vunpack.c.l.b16 %v1053
      %v1184 = vunpack.c.l.b16 %v1054
      %v1185 = vunpack.c.l.b16 %v1055
      %v1186 = vunpack.c.l.b16 %v1056
      %v1187 = vunpack.c.l.b16 %v1057
      %v1188 = vunpack.c.l.b16 %v1058
      %v1189 = vunpack.c.l.b16 %v1059
      %v1190 = vunpack.c.l.b16 %v1060
      %v1191 = vunpack.c.l.b16 %v1061
      %v1192 = vunpack.c.l.b16 %v1062
      %v1193 = vunpack.c.l.b16 %v1063
      %v1194 = vunpack.c.l.b16 %v1064
      %v1195 = vunpack.c.l.b16 %v1065
      %v1196 = vunpack.c.l.b16 %v1066
      %v1197 = vunpack.c.l.b16 %v1067
      %v1198 = vunpack.c.l.b16 %v1068
      %v1199 = vunpack.c.l.b16 %v1069
      %v1200 = vunpack.c.l.b16 %v1070
      %v1201 = vunpack.c.l.b16 %v1071
      %v1202 = vunpack.c.l.b16 %v1072
      %v1203 = vunpack.c.l.b16 %v1073
      %v1204 = vunpack.c.l.b16 %v1074
      %v1205 = vunpack.c.l.b16 %v1075
      %v1206 = vunpack.c.l.b16 %v1076
      %v1207 = vunpack.c.l.b16 %v1077
      %v1208 = vunpack.c.l.b16 %v1078
      %v1209 = vunpack.c.l.b16 %v1079
      %v1210 = vunpack.c.l.b16 %v1080
      %v1211 = vunpack.c.l.b16 %v1081
      %v1212 = vunpack.c.l.b16 %v1082
      %v1213 = vunpack.c.l.b16 %v1083
      %v1214 = vunpack.c.l.b16 %v1084
      %v1215 = vunpack.c.l.b16 %v1085
      %v1216 = vunpack.c.l.b16 %v1086
      %v1217 = vunpack.c.l.b16 %v1087
      %v1218 = vpack.c.b16 %v1155, %v1154
      %v1219 = vpack.c.b16 %v1157, %v1156
      %v1220 = vpack.c.b16 %v1159, %v1158
      %v1221 = vpack.c.b16 %v1161, %v1160
      %v1222 = vpack.c.b16 %v1163, %v1162
      %v1223 = vpack.c.b16 %v1165, %v1164
      %v1224 = vpack.c.b16 %v1167, %v1166
      %v1225 = vpack.c.b16 %v1169, %v1168
      %v1226 = vpack.c.b16 %v1171, %v1170
      %v1227 = vpack.c.b16 %v1173, %v1172
      %v1228 = vpack.c.b16 %v1175, %v1174
      %v1229 = vpack.c.b16 %v1177, %v1176
      %v1230 = vpack.c.b16 %v1179, %v1178
      %v1231 = vpack.c.b16 %v1181, %v1180
      %v1232 = vpack.c.b16 %v1183, %v1182
      %v1233 = vpack.c.b16 %v1185, %v1184
      %v1234 = vpack.c.b16 %v1187, %v1186
      %v1235 = vpack.c.b16 %v1189, %v1188
      %v1236 = vpack.c.b16 %v1191, %v1190
      %v1237 = vpack.c.b16 %v1193, %v1192
      %v1238 = vpack.c.b16 %v1195, %v1194
      %v1239 = vpack.c.b16 %v1197, %v1196
      %v1240 = vpack.c.b16 %v1199, %v1198
      %v1241 = vpack.c.b16 %v1201, %v1200
      %v1242 = vpack.c.b16 %v1203, %v1202
      %v1243 = vpack.c.b16 %v1205, %v1204
      %v1244 = vpack.c.b16 %v1207, %v1206
      %v1245 = vpack.c.b16 %v1209, %v1208
      %v1246 = vpack.c.b16 %v1211, %v1210
      %v1247 = vpack.c.b16 %v1213, %v1212
      %v1248 = vpack.c.b16 %v1215, %v1214
      %v1249 = vpack.c.b16 %v1217, %v1216
      %v1251 = vsel %vm496, %v1089, 0
      %v1254 = vsel %vm496, %v1218, 0
      %v1257 = vsel %vm496, %v1219, 0
      %v1260 = vsel %vm496, %v1220, 0
      %v1263 = vsel %vm496, %v1221, 0
      %v1266 = vsel %vm496, %v1222, 0
      %v1269 = vsel %vm496, %v1223, 0
      %v1272 = vsel %vm496, %v1224, 0
      %v1275 = vsel %vm496, %v1225, 0
      %v1278 = vsel %vm496, %v1226, 0
      %v1281 = vsel %vm496, %v1227, 0
      %v1284 = vsel %vm496, %v1228, 0
      %v1287 = vsel %vm496, %v1229, 0
      %v1290 = vsel %vm496, %v1230, 0
      %v1293 = vsel %vm496, %v1231, 0
      %v1296 = vsel %vm496, %v1232, 0
      %v1299 = vsel %vm496, %v1233, 0
      %v1302 = vsel %vm496, %v1234, 0
      %v1305 = vsel %vm496, %v1235, 0
      %v1308 = vsel %vm496, %v1236, 0
      %v1311 = vsel %vm496, %v1237, 0
      %v1314 = vsel %vm496, %v1238, 0
      %v1317 = vsel %vm496, %v1239, 0
      %v1320 = vsel %vm496, %v1240, 0
      %v1323 = vsel %vm496, %v1241, 0
      %v1326 = vsel %vm496, %v1242, 0
      %v1329 = vsel %vm496, %v1243, 0
      %v1332 = vsel %vm496, %v1244, 0
      %v1335 = vsel %vm496, %v1245, 0
      %v1338 = vsel %vm496, %v1246, 0
      %v1341 = vsel %vm496, %v1247, 0
      %v1344 = vsel %vm496, %v1248, 0
      %v1347 = vsel %vm496, %v1249, 0
      %1349 = vmatprep.subr.bf16.mxu0 0
      %1350 = vmatpush1.bf16.xpose.msra.mxu0 %v1275
      %1351 = vmatprep.subr.bf16.mxu0 0
      %1352 = vmatpush1.bf16.xpose.msra.mxu0 %v1272
      %1353 = vmatprep.subr.bf16.mxu0 0
      %1354 = vmatpush1.bf16.xpose.msra.mxu0 %v1269
      %1355 = vmatprep.subr.bf16.mxu0 0
      %1356 = vmatpush1.bf16.xpose.msra.mxu0 %v1266
      %1357 = vmatprep.subr.bf16.mxu0 0
      %1358 = vmatpush1.bf16.xpose.msra.mxu0 %v1263
      %1359 = vmatprep.subr.bf16.mxu0 0
      %1360 = vmatpush1.bf16.xpose.msra.mxu0 %v1260
      %1361 = vmatprep.subr.bf16.mxu0 0
      %1362 = vmatpush1.bf16.xpose.msra.mxu0 %v1257
      %1363 = vmatprep.subr.bf16.mxu0 0
      %1364 = vmatpush1.bf16.xpose.msra.mxu0 %v1254
      %1365 = vmatprep.subr.bf16.mxu0 0
      %1366 = vmatpush2.bf16.xpose.msra.mxu0 %v1299
      %1367 = vmatprep.subr.bf16.mxu0 0
      %1368 = vmatpush2.bf16.xpose.msra.mxu0 %v1296
      %1369 = vmatprep.subr.bf16.mxu0 0
      %1370 = vmatpush2.bf16.xpose.msra.mxu0 %v1293
      %1371 = vmatprep.subr.bf16.mxu0 0
      %1372 = vmatpush2.bf16.xpose.msra.mxu0 %v1290
      %1373 = vmatprep.subr.bf16.mxu0 0
      %1374 = vmatpush2.bf16.xpose.msra.mxu0 %v1287
      %1375 = vmatprep.subr.bf16.mxu0 0
      %1376 = vmatpush2.bf16.xpose.msra.mxu0 %v1284
      %1377 = vmatprep.subr.bf16.mxu0 0
      %1378 = vmatpush2.bf16.xpose.msra.mxu0 %v1281
      %1379 = vmatprep.subr.bf16.mxu0 0
      %1380 = vmatpush2.bf16.xpose.msra.mxu0 %v1278
      %1381 = vmatprep.mubr.bf16.mxu0 0
      %1382 = vmatmul.mubr.bf16.gmra.mxu0 %v1251
      %v1383 = vpop.f32.mrf.mxu0
      %v1384 = vadd.f32 0.0, %v1383
      %v1385 = vpop.f32.mrf.mxu0
      %v1386 = vadd.f32 0.0, %v1385
      %v1387 = vpop.f32.mrf.mxu0
      %v1388 = vpop.f32.mrf.mxu0
      %1389 = vdwg.mxu0
      %1390 = vmatprep.subr.bf16.mxu0 0
      %1391 = vmatpush1.bf16.xpose.msra.mxu0 %v1323
      %1392 = vmatprep.subr.bf16.mxu0 0
      %1393 = vmatpush1.bf16.xpose.msra.mxu0 %v1320
      %1394 = vmatprep.subr.bf16.mxu0 0
      %1395 = vmatpush1.bf16.xpose.msra.mxu0 %v1317
      %1396 = vmatprep.subr.bf16.mxu0 0
      %1397 = vmatpush1.bf16.xpose.msra.mxu0 %v1314
      %1398 = vmatprep.subr.bf16.mxu0 0
      %1399 = vmatpush1.bf16.xpose.msra.mxu0 %v1311
      %1400 = vmatprep.subr.bf16.mxu0 0
      %1401 = vmatpush1.bf16.xpose.msra.mxu0 %v1308
      %1402 = vmatprep.subr.bf16.mxu0 0
      %1403 = vmatpush1.bf16.xpose.msra.mxu0 %v1305
      %1404 = vmatprep.subr.bf16.mxu0 0
      %1405 = vmatpush1.bf16.xpose.msra.mxu0 %v1302
      %1406 = vmatprep.subr.bf16.mxu0 0
      %1407 = vmatpush2.bf16.xpose.msra.mxu0 %v1347
      %1408 = vmatprep.subr.bf16.mxu0 0
      %1409 = vmatpush2.bf16.xpose.msra.mxu0 %v1344
      %1410 = vmatprep.subr.bf16.mxu0 0
      %1411 = vmatpush2.bf16.xpose.msra.mxu0 %v1341
      %1412 = vmatprep.subr.bf16.mxu0 0
      %1413 = vmatpush2.bf16.xpose.msra.mxu0 %v1338
      %1414 = vmatprep.subr.bf16.mxu0 0
      %1415 = vmatpush2.bf16.xpose.msra.mxu0 %v1335
      %1416 = vmatprep.subr.bf16.mxu0 0
      %1417 = vmatpush2.bf16.xpose.msra.mxu0 %v1332
      %1418 = vmatprep.subr.bf16.mxu0 0
      %1419 = vmatpush2.bf16.xpose.msra.mxu0 %v1329
      %1420 = vmatprep.subr.bf16.mxu0 0
      %1421 = vmatpush2.bf16.xpose.msra.mxu0 %v1326
      %1422 = vmatprep.mubr.bf16.mxu0 0
      %1423 = vmatmul.mubr.bf16.gmra.mxu0 %v1251
      %v1424 = vpop.f32.mrf.mxu0
      %v1425 = vadd.f32 0.0, %v1424
      %v1426 = vpop.f32.mrf.mxu0
      %v1427 = vadd.f32 0.0, %v1426
      %v1428 = vpop.f32.mrf.mxu0
      %v1429 = vpop.f32.mrf.mxu0
      %1430 = vdwg.mxu0
      %v1431 = vadd.f32 %v972, %v1384
      %v1432 = vadd.f32 %v974, %v1386
      %v1433 = vadd.f32 %v1013, %v1425
      %v1434 = vadd.f32 %v1015, %v1427
      %s1435 = sadd.s32 %s195, 96
      %s1436 = sshra.s32 %s1435, 3
      %s1437 = sand.u32 %s1435, 7
      %s1438 = smul.addr %s1436, 4
      %s1439 = scalar_lea.vmem %s183, %s1438
      %v1440 = vld [vmem:[%s1439] sm:$0xf]
      %v1441 = vld [vmem:[%s1439 + $0x4] sm:$0xf]
      %v1442 = vld [vmem:[%s1439 + $0x8] sm:$0xf]
      %v1443 = vld [vmem:[%s1439 + $0xc] sm:$0xf]
      %v1444 = vld [vmem:[%s1439 + $0x10] sm:$0xf]
      %v1445 = vld [vmem:[%s1439 + $0x14] sm:$0xf]
      %v1446 = vld [vmem:[%s1439 + $0x18] sm:$0xf]
      %v1447 = vld [vmem:[%s1439 + $0x1c] sm:$0xf]
      %v1448 = vld [vmem:[%s1439 + $0x20] sm:$0xf]
      %v1449 = vld [vmem:[%s1439 + $0x24] sm:$0xf]
      %v1450 = vld [vmem:[%s1439 + $0x28] sm:$0xf]
      %v1451 = vld [vmem:[%s1439 + $0x2c] sm:$0xf]
      %v1452 = vld [vmem:[%s1439 + $0x30] sm:$0xf]
      %v1453 = vld [vmem:[%s1439 + $0x34] sm:$0xf]
      %v1454 = vld [vmem:[%s1439 + $0x38] sm:$0xf]
      %v1455 = vld [vmem:[%s1439 + $0x3c] sm:$0xf]
      %v1456 = vld [vmem:[%s1439 + $0x40] sm:$0xf]
      %v1457 = vld [vmem:[%s1439 + $0x44] sm:$0xf]
      %v1458 = vld [vmem:[%s1439 + $0x48] sm:$0xf]
      %v1459 = vld [vmem:[%s1439 + $0x4c] sm:$0xf]
      %v1460 = vld [vmem:[%s1439 + $0x50] sm:$0xf]
      %v1461 = vld [vmem:[%s1439 + $0x54] sm:$0xf]
      %v1462 = vld [vmem:[%s1439 + $0x58] sm:$0xf]
      %v1463 = vld [vmem:[%s1439 + $0x5c] sm:$0xf]
      %v1464 = vld [vmem:[%s1439 + $0x60] sm:$0xf]
      %v1465 = vld [vmem:[%s1439 + $0x64] sm:$0xf]
      %v1466 = vld [vmem:[%s1439 + $0x68] sm:$0xf]
      %v1467 = vld [vmem:[%s1439 + $0x6c] sm:$0xf]
      %v1468 = vld [vmem:[%s1439 + $0x70] sm:$0xf]
      %v1469 = vld [vmem:[%s1439 + $0x74] sm:$0xf]
      %v1470 = vld [vmem:[%s1439 + $0x78] sm:$0xf]
      %v1471 = vld [vmem:[%s1439 + $0x7c] sm:$0xf]
      %v1472 = vld [vmem:[%s1439 + $0x80] sm:$0xf]
      %v1473 = vld [vmem:[%s1439 + $0x84] sm:$0xf]
      %v1474 = vld [vmem:[%s1439 + $0x88] sm:$0xf]
      %v1475 = vld [vmem:[%s1439 + $0x8c] sm:$0xf]
      %v1476 = vld [vmem:[%s1439 + $0x90] sm:$0xf]
      %v1477 = vld [vmem:[%s1439 + $0x94] sm:$0xf]
      %v1478 = vld [vmem:[%s1439 + $0x98] sm:$0xf]
      %v1479 = vld [vmem:[%s1439 + $0x9c] sm:$0xf]
      %v1480 = vld [vmem:[%s1439 + $0xa0] sm:$0xf]
      %v1481 = vld [vmem:[%s1439 + $0xa4] sm:$0xf]
      %v1482 = vld [vmem:[%s1439 + $0xa8] sm:$0xf]
      %v1483 = vld [vmem:[%s1439 + $0xac] sm:$0xf]
      %v1484 = vld [vmem:[%s1439 + $0xb0] sm:$0xf]
      %v1485 = vld [vmem:[%s1439 + $0xb4] sm:$0xf]
      %v1486 = vld [vmem:[%s1439 + $0xb8] sm:$0xf]
      %v1487 = vld [vmem:[%s1439 + $0xbc] sm:$0xf]
      %v1488 = vld [vmem:[%s1439 + $0xc0] sm:$0xf]
      %v1489 = vld [vmem:[%s1439 + $0xc4] sm:$0xf]
      %v1490 = vld [vmem:[%s1439 + $0xc8] sm:$0xf]
      %v1491 = vld [vmem:[%s1439 + $0xcc] sm:$0xf]
      %v1492 = vld [vmem:[%s1439 + $0xd0] sm:$0xf]
      %v1493 = vld [vmem:[%s1439 + $0xd4] sm:$0xf]
      %v1494 = vld [vmem:[%s1439 + $0xd8] sm:$0xf]
      %v1495 = vld [vmem:[%s1439 + $0xdc] sm:$0xf]
      %v1496 = vld [vmem:[%s1439 + $0xe0] sm:$0xf]
      %v1497 = vld [vmem:[%s1439 + $0xe4] sm:$0xf]
      %v1498 = vld [vmem:[%s1439 + $0xe8] sm:$0xf]
      %v1499 = vld [vmem:[%s1439 + $0xec] sm:$0xf]
      %v1500 = vld [vmem:[%s1439 + $0xf0] sm:$0xf]
      %v1501 = vld [vmem:[%s1439 + $0xf4] sm:$0xf]
      %v1502 = vld [vmem:[%s1439 + $0xf8] sm:$0xf]
      %v1503 = vld [vmem:[%s1439 + $0xfc] sm:$0xf]
      %s1504 = scalar_lea.vmem %s1, 12
      %v1505 = vld [vmem:[%s1504] sm:$0xf]
      %v1570 = vunpack.c.l.b16 %v1440
      %v1571 = vunpack.c.l.b16 %v1441
      %v1572 = vunpack.c.l.b16 %v1442
      %v1573 = vunpack.c.l.b16 %v1443
      %v1574 = vunpack.c.l.b16 %v1444
      %v1575 = vunpack.c.l.b16 %v1445
      %v1576 = vunpack.c.l.b16 %v1446
      %v1577 = vunpack.c.l.b16 %v1447
      %v1578 = vunpack.c.l.b16 %v1448
      %v1579 = vunpack.c.l.b16 %v1449
      %v1580 = vunpack.c.l.b16 %v1450
      %v1581 = vunpack.c.l.b16 %v1451
      %v1582 = vunpack.c.l.b16 %v1452
      %v1583 = vunpack.c.l.b16 %v1453
      %v1584 = vunpack.c.l.b16 %v1454
      %v1585 = vunpack.c.l.b16 %v1455
      %v1586 = vunpack.c.l.b16 %v1456
      %v1587 = vunpack.c.l.b16 %v1457
      %v1588 = vunpack.c.l.b16 %v1458
      %v1589 = vunpack.c.l.b16 %v1459
      %v1590 = vunpack.c.l.b16 %v1460
      %v1591 = vunpack.c.l.b16 %v1461
      %v1592 = vunpack.c.l.b16 %v1462
      %v1593 = vunpack.c.l.b16 %v1463
      %v1594 = vunpack.c.l.b16 %v1464
      %v1595 = vunpack.c.l.b16 %v1465
      %v1596 = vunpack.c.l.b16 %v1466
      %v1597 = vunpack.c.l.b16 %v1467
      %v1598 = vunpack.c.l.b16 %v1468
      %v1599 = vunpack.c.l.b16 %v1469
      %v1600 = vunpack.c.l.b16 %v1470
      %v1601 = vunpack.c.l.b16 %v1471
      %v1602 = vunpack.c.l.b16 %v1472
      %v1603 = vunpack.c.l.b16 %v1473
      %v1604 = vunpack.c.l.b16 %v1474
      %v1605 = vunpack.c.l.b16 %v1475
      %v1606 = vunpack.c.l.b16 %v1476
      %v1607 = vunpack.c.l.b16 %v1477
      %v1608 = vunpack.c.l.b16 %v1478
      %v1609 = vunpack.c.l.b16 %v1479
      %v1610 = vunpack.c.l.b16 %v1480
      %v1611 = vunpack.c.l.b16 %v1481
      %v1612 = vunpack.c.l.b16 %v1482
      %v1613 = vunpack.c.l.b16 %v1483
      %v1614 = vunpack.c.l.b16 %v1484
      %v1615 = vunpack.c.l.b16 %v1485
      %v1616 = vunpack.c.l.b16 %v1486
      %v1617 = vunpack.c.l.b16 %v1487
      %v1618 = vunpack.c.l.b16 %v1488
      %v1619 = vunpack.c.l.b16 %v1489
      %v1620 = vunpack.c.l.b16 %v1490
      %v1621 = vunpack.c.l.b16 %v1491
      %v1622 = vunpack.c.l.b16 %v1492
      %v1623 = vunpack.c.l.b16 %v1493
      %v1624 = vunpack.c.l.b16 %v1494
      %v1625 = vunpack.c.l.b16 %v1495
      %v1626 = vunpack.c.l.b16 %v1496
      %v1627 = vunpack.c.l.b16 %v1497
      %v1628 = vunpack.c.l.b16 %v1498
      %v1629 = vunpack.c.l.b16 %v1499
      %v1630 = vunpack.c.l.b16 %v1500
      %v1631 = vunpack.c.l.b16 %v1501
      %v1632 = vunpack.c.l.b16 %v1502
      %v1633 = vunpack.c.l.b16 %v1503
      %v1634 = vpack.c.b16 %v1571, %v1570
      %v1635 = vpack.c.b16 %v1573, %v1572
      %v1636 = vpack.c.b16 %v1575, %v1574
      %v1637 = vpack.c.b16 %v1577, %v1576
      %v1638 = vpack.c.b16 %v1579, %v1578
      %v1639 = vpack.c.b16 %v1581, %v1580
      %v1640 = vpack.c.b16 %v1583, %v1582
      %v1641 = vpack.c.b16 %v1585, %v1584
      %v1642 = vpack.c.b16 %v1587, %v1586
      %v1643 = vpack.c.b16 %v1589, %v1588
      %v1644 = vpack.c.b16 %v1591, %v1590
      %v1645 = vpack.c.b16 %v1593, %v1592
      %v1646 = vpack.c.b16 %v1595, %v1594
      %v1647 = vpack.c.b16 %v1597, %v1596
      %v1648 = vpack.c.b16 %v1599, %v1598
      %v1649 = vpack.c.b16 %v1601, %v1600
      %v1650 = vpack.c.b16 %v1603, %v1602
      %v1651 = vpack.c.b16 %v1605, %v1604
      %v1652 = vpack.c.b16 %v1607, %v1606
      %v1653 = vpack.c.b16 %v1609, %v1608
      %v1654 = vpack.c.b16 %v1611, %v1610
      %v1655 = vpack.c.b16 %v1613, %v1612
      %v1656 = vpack.c.b16 %v1615, %v1614
      %v1657 = vpack.c.b16 %v1617, %v1616
      %v1658 = vpack.c.b16 %v1619, %v1618
      %v1659 = vpack.c.b16 %v1621, %v1620
      %v1660 = vpack.c.b16 %v1623, %v1622
      %v1661 = vpack.c.b16 %v1625, %v1624
      %v1662 = vpack.c.b16 %v1627, %v1626
      %v1663 = vpack.c.b16 %v1629, %v1628
      %v1664 = vpack.c.b16 %v1631, %v1630
      %v1665 = vpack.c.b16 %v1633, %v1632
      %v1667 = vsel %vm496, %v1505, 0
      %v1670 = vsel %vm496, %v1634, 0
      %v1673 = vsel %vm496, %v1635, 0
      %v1676 = vsel %vm496, %v1636, 0
      %v1679 = vsel %vm496, %v1637, 0
      %v1682 = vsel %vm496, %v1638, 0
      %v1685 = vsel %vm496, %v1639, 0
      %v1688 = vsel %vm496, %v1640, 0
      %v1691 = vsel %vm496, %v1641, 0
      %v1694 = vsel %vm496, %v1642, 0
      %v1697 = vsel %vm496, %v1643, 0
      %v1700 = vsel %vm496, %v1644, 0
      %v1703 = vsel %vm496, %v1645, 0
      %v1706 = vsel %vm496, %v1646, 0
      %v1709 = vsel %vm496, %v1647, 0
      %v1712 = vsel %vm496, %v1648, 0
      %v1715 = vsel %vm496, %v1649, 0
      %v1718 = vsel %vm496, %v1650, 0
      %v1721 = vsel %vm496, %v1651, 0
      %v1724 = vsel %vm496, %v1652, 0
      %v1727 = vsel %vm496, %v1653, 0
      %v1730 = vsel %vm496, %v1654, 0
      %v1733 = vsel %vm496, %v1655, 0
      %v1736 = vsel %vm496, %v1656, 0
      %v1739 = vsel %vm496, %v1657, 0
      %v1742 = vsel %vm496, %v1658, 0
      %v1745 = vsel %vm496, %v1659, 0
      %v1748 = vsel %vm496, %v1660, 0
      %v1751 = vsel %vm496, %v1661, 0
      %v1754 = vsel %vm496, %v1662, 0
      %v1757 = vsel %vm496, %v1663, 0
      %v1760 = vsel %vm496, %v1664, 0
      %v1763 = vsel %vm496, %v1665, 0
      %1765 = vmatprep.subr.bf16.mxu0 0
      %1766 = vmatpush1.bf16.xpose.msra.mxu0 %v1691
      %1767 = vmatprep.subr.bf16.mxu0 0
      %1768 = vmatpush1.bf16.xpose.msra.mxu0 %v1688
      %1769 = vmatprep.subr.bf16.mxu0 0
      %1770 = vmatpush1.bf16.xpose.msra.mxu0 %v1685
      %1771 = vmatprep.subr.bf16.mxu0 0
      %1772 = vmatpush1.bf16.xpose.msra.mxu0 %v1682
      %1773 = vmatprep.subr.bf16.mxu0 0
      %1774 = vmatpush1.bf16.xpose.msra.mxu0 %v1679
      %1775 = vmatprep.subr.bf16.mxu0 0
      %1776 = vmatpush1.bf16.xpose.msra.mxu0 %v1676
      %1777 = vmatprep.subr.bf16.mxu0 0
      %1778 = vmatpush1.bf16.xpose.msra.mxu0 %v1673
      %1779 = vmatprep.subr.bf16.mxu0 0
      %1780 = vmatpush1.bf16.xpose.msra.mxu0 %v1670
      %1781 = vmatprep.subr.bf16.mxu0 0
      %1782 = vmatpush2.bf16.xpose.msra.mxu0 %v1715
      %1783 = vmatprep.subr.bf16.mxu0 0
      %1784 = vmatpush2.bf16.xpose.msra.mxu0 %v1712
      %1785 = vmatprep.subr.bf16.mxu0 0
      %1786 = vmatpush2.bf16.xpose.msra.mxu0 %v1709
      %1787 = vmatprep.subr.bf16.mxu0 0
      %1788 = vmatpush2.bf16.xpose.msra.mxu0 %v1706
      %1789 = vmatprep.subr.bf16.mxu0 0
      %1790 = vmatpush2.bf16.xpose.msra.mxu0 %v1703
      %1791 = vmatprep.subr.bf16.mxu0 0
      %1792 = vmatpush2.bf16.xpose.msra.mxu0 %v1700
      %1793 = vmatprep.subr.bf16.mxu0 0
      %1794 = vmatpush2.bf16.xpose.msra.mxu0 %v1697
      %1795 = vmatprep.subr.bf16.mxu0 0
      %1796 = vmatpush2.bf16.xpose.msra.mxu0 %v1694
      %1797 = vmatprep.mubr.bf16.mxu0 0
      %1798 = vmatmul.mubr.bf16.gmra.mxu0 %v1667
      %v1799 = vpop.f32.mrf.mxu0
      %v1800 = vadd.f32 0.0, %v1799
      %v1801 = vpop.f32.mrf.mxu0
      %v1802 = vadd.f32 0.0, %v1801
      %v1803 = vpop.f32.mrf.mxu0
      %v1804 = vpop.f32.mrf.mxu0
      %1805 = vdwg.mxu0
      %1806 = vmatprep.subr.bf16.mxu0 0
      %1807 = vmatpush1.bf16.xpose.msra.mxu0 %v1739
      %1808 = vmatprep.subr.bf16.mxu0 0
      %1809 = vmatpush1.bf16.xpose.msra.mxu0 %v1736
      %1810 = vmatprep.subr.bf16.mxu0 0
      %1811 = vmatpush1.bf16.xpose.msra.mxu0 %v1733
      %1812 = vmatprep.subr.bf16.mxu0 0
      %1813 = vmatpush1.bf16.xpose.msra.mxu0 %v1730
      %1814 = vmatprep.subr.bf16.mxu0 0
      %1815 = vmatpush1.bf16.xpose.msra.mxu0 %v1727
      %1816 = vmatprep.subr.bf16.mxu0 0
      %1817 = vmatpush1.bf16.xpose.msra.mxu0 %v1724
      %1818 = vmatprep.subr.bf16.mxu0 0
      %1819 = vmatpush1.bf16.xpose.msra.mxu0 %v1721
      %1820 = vmatprep.subr.bf16.mxu0 0
      %1821 = vmatpush1.bf16.xpose.msra.mxu0 %v1718
      %1822 = vmatprep.subr.bf16.mxu0 0
      %1823 = vmatpush2.bf16.xpose.msra.mxu0 %v1763
      %1824 = vmatprep.subr.bf16.mxu0 0
      %1825 = vmatpush2.bf16.xpose.msra.mxu0 %v1760
      %1826 = vmatprep.subr.bf16.mxu0 0
      %1827 = vmatpush2.bf16.xpose.msra.mxu0 %v1757
      %1828 = vmatprep.subr.bf16.mxu0 0
      %1829 = vmatpush2.bf16.xpose.msra.mxu0 %v1754
      %1830 = vmatprep.subr.bf16.mxu0 0
      %1831 = vmatpush2.bf16.xpose.msra.mxu0 %v1751
      %1832 = vmatprep.subr.bf16.mxu0 0
      %1833 = vmatpush2.bf16.xpose.msra.mxu0 %v1748
      %1834 = vmatprep.subr.bf16.mxu0 0
      %1835 = vmatpush2.bf16.xpose.msra.mxu0 %v1745
      %1836 = vmatprep.subr.bf16.mxu0 0
      %1837 = vmatpush2.bf16.xpose.msra.mxu0 %v1742
      %1838 = vmatprep.mubr.bf16.mxu0 0
      %1839 = vmatmul.mubr.bf16.gmra.mxu0 %v1667
      %v1840 = vpop.f32.mrf.mxu0
      %v1841 = vadd.f32 0.0, %v1840
      %v1842 = vpop.f32.mrf.mxu0
      %v1843 = vadd.f32 0.0, %v1842
      %v1844 = vpop.f32.mrf.mxu0
      %v1845 = vpop.f32.mrf.mxu0
      %1846 = vdwg.mxu0
      %v1847 = vadd.f32 %v1431, %v1800
      %v1848 = vadd.f32 %v1432, %v1802
      %v1849 = vadd.f32 %v1433, %v1841
      %v1850 = vadd.f32 %v1434, %v1843
      %s1851 = sadd.s32 %s195, 128
      %s1852 = sshra.s32 %s1851, 3
      %s1853 = sand.u32 %s1851, 7
      %s1854 = smul.addr %s1852, 4
      %s1855 = scalar_lea.vmem %s183, %s1854
      %v1856 = vld [vmem:[%s1855] sm:$0xf]
      %v1857 = vld [vmem:[%s1855 + $0x4] sm:$0xf]
      %v1858 = vld [vmem:[%s1855 + $0x8] sm:$0xf]
      %v1859 = vld [vmem:[%s1855 + $0xc] sm:$0xf]
      %v1860 = vld [vmem:[%s1855 + $0x10] sm:$0xf]
      %v1861 = vld [vmem:[%s1855 + $0x14] sm:$0xf]
      %v1862 = vld [vmem:[%s1855 + $0x18] sm:$0xf]
      %v1863 = vld [vmem:[%s1855 + $0x1c] sm:$0xf]
      %v1864 = vld [vmem:[%s1855 + $0x20] sm:$0xf]
      %v1865 = vld [vmem:[%s1855 + $0x24] sm:$0xf]
      %v1866 = vld [vmem:[%s1855 + $0x28] sm:$0xf]
      %v1867 = vld [vmem:[%s1855 + $0x2c] sm:$0xf]
      %v1868 = vld [vmem:[%s1855 + $0x30] sm:$0xf]
      %v1869 = vld [vmem:[%s1855 + $0x34] sm:$0xf]
      %v1870 = vld [vmem:[%s1855 + $0x38] sm:$0xf]
      %v1871 = vld [vmem:[%s1855 + $0x3c] sm:$0xf]
      %v1872 = vld [vmem:[%s1855 + $0x40] sm:$0xf]
      %v1873 = vld [vmem:[%s1855 + $0x44] sm:$0xf]
      %v1874 = vld [vmem:[%s1855 + $0x48] sm:$0xf]
      %v1875 = vld [vmem:[%s1855 + $0x4c] sm:$0xf]
      %v1876 = vld [vmem:[%s1855 + $0x50] sm:$0xf]
      %v1877 = vld [vmem:[%s1855 + $0x54] sm:$0xf]
      %v1878 = vld [vmem:[%s1855 + $0x58] sm:$0xf]
      %v1879 = vld [vmem:[%s1855 + $0x5c] sm:$0xf]
      %v1880 = vld [vmem:[%s1855 + $0x60] sm:$0xf]
      %v1881 = vld [vmem:[%s1855 + $0x64] sm:$0xf]
      %v1882 = vld [vmem:[%s1855 + $0x68] sm:$0xf]
      %v1883 = vld [vmem:[%s1855 + $0x6c] sm:$0xf]
      %v1884 = vld [vmem:[%s1855 + $0x70] sm:$0xf]
      %v1885 = vld [vmem:[%s1855 + $0x74] sm:$0xf]
      %v1886 = vld [vmem:[%s1855 + $0x78] sm:$0xf]
      %v1887 = vld [vmem:[%s1855 + $0x7c] sm:$0xf]
      %v1888 = vld [vmem:[%s1855 + $0x80] sm:$0xf]
      %v1889 = vld [vmem:[%s1855 + $0x84] sm:$0xf]
      %v1890 = vld [vmem:[%s1855 + $0x88] sm:$0xf]
      %v1891 = vld [vmem:[%s1855 + $0x8c] sm:$0xf]
      %v1892 = vld [vmem:[%s1855 + $0x90] sm:$0xf]
      %v1893 = vld [vmem:[%s1855 + $0x94] sm:$0xf]
      %v1894 = vld [vmem:[%s1855 + $0x98] sm:$0xf]
      %v1895 = vld [vmem:[%s1855 + $0x9c] sm:$0xf]
      %v1896 = vld [vmem:[%s1855 + $0xa0] sm:$0xf]
      %v1897 = vld [vmem:[%s1855 + $0xa4] sm:$0xf]
      %v1898 = vld [vmem:[%s1855 + $0xa8] sm:$0xf]
      %v1899 = vld [vmem:[%s1855 + $0xac] sm:$0xf]
      %v1900 = vld [vmem:[%s1855 + $0xb0] sm:$0xf]
      %v1901 = vld [vmem:[%s1855 + $0xb4] sm:$0xf]
      %v1902 = vld [vmem:[%s1855 + $0xb8] sm:$0xf]
      %v1903 = vld [vmem:[%s1855 + $0xbc] sm:$0xf]
      %v1904 = vld [vmem:[%s1855 + $0xc0] sm:$0xf]
      %v1905 = vld [vmem:[%s1855 + $0xc4] sm:$0xf]
      %v1906 = vld [vmem:[%s1855 + $0xc8] sm:$0xf]
      %v1907 = vld [vmem:[%s1855 + $0xcc] sm:$0xf]
      %v1908 = vld [vmem:[%s1855 + $0xd0] sm:$0xf]
      %v1909 = vld [vmem:[%s1855 + $0xd4] sm:$0xf]
      %v1910 = vld [vmem:[%s1855 + $0xd8] sm:$0xf]
      %v1911 = vld [vmem:[%s1855 + $0xdc] sm:$0xf]
      %v1912 = vld [vmem:[%s1855 + $0xe0] sm:$0xf]
      %v1913 = vld [vmem:[%s1855 + $0xe4] sm:$0xf]
      %v1914 = vld [vmem:[%s1855 + $0xe8] sm:$0xf]
      %v1915 = vld [vmem:[%s1855 + $0xec] sm:$0xf]
      %v1916 = vld [vmem:[%s1855 + $0xf0] sm:$0xf]
      %v1917 = vld [vmem:[%s1855 + $0xf4] sm:$0xf]
      %v1918 = vld [vmem:[%s1855 + $0xf8] sm:$0xf]
      %v1919 = vld [vmem:[%s1855 + $0xfc] sm:$0xf]
      %s1920 = scalar_lea.vmem %s1, 16
      %v1921 = vld [vmem:[%s1920] sm:$0xf]
      %v1986 = vunpack.c.l.b16 %v1856
      %v1987 = vunpack.c.l.b16 %v1857
      %v1988 = vunpack.c.l.b16 %v1858
      %v1989 = vunpack.c.l.b16 %v1859
      %v1990 = vunpack.c.l.b16 %v1860
      %v1991 = vunpack.c.l.b16 %v1861
      %v1992 = vunpack.c.l.b16 %v1862
      %v1993 = vunpack.c.l.b16 %v1863
      %v1994 = vunpack.c.l.b16 %v1864
      %v1995 = vunpack.c.l.b16 %v1865
      %v1996 = vunpack.c.l.b16 %v1866
      %v1997 = vunpack.c.l.b16 %v1867
      %v1998 = vunpack.c.l.b16 %v1868
      %v1999 = vunpack.c.l.b16 %v1869
      %v2000 = vunpack.c.l.b16 %v1870
      %v2001 = vunpack.c.l.b16 %v1871
      %v2002 = vunpack.c.l.b16 %v1872
      %v2003 = vunpack.c.l.b16 %v1873
      %v2004 = vunpack.c.l.b16 %v1874
      %v2005 = vunpack.c.l.b16 %v1875
      %v2006 = vunpack.c.l.b16 %v1876
      %v2007 = vunpack.c.l.b16 %v1877
      %v2008 = vunpack.c.l.b16 %v1878
      %v2009 = vunpack.c.l.b16 %v1879
      %v2010 = vunpack.c.l.b16 %v1880
      %v2011 = vunpack.c.l.b16 %v1881
      %v2012 = vunpack.c.l.b16 %v1882
      %v2013 = vunpack.c.l.b16 %v1883
      %v2014 = vunpack.c.l.b16 %v1884
      %v2015 = vunpack.c.l.b16 %v1885
      %v2016 = vunpack.c.l.b16 %v1886
      %v2017 = vunpack.c.l.b16 %v1887
      %v2018 = vunpack.c.l.b16 %v1888
      %v2019 = vunpack.c.l.b16 %v1889
      %v2020 = vunpack.c.l.b16 %v1890
      %v2021 = vunpack.c.l.b16 %v1891
      %v2022 = vunpack.c.l.b16 %v1892
      %v2023 = vunpack.c.l.b16 %v1893
      %v2024 = vunpack.c.l.b16 %v1894
      %v2025 = vunpack.c.l.b16 %v1895
      %v2026 = vunpack.c.l.b16 %v1896
      %v2027 = vunpack.c.l.b16 %v1897
      %v2028 = vunpack.c.l.b16 %v1898
      %v2029 = vunpack.c.l.b16 %v1899
      %v2030 = vunpack.c.l.b16 %v1900
      %v2031 = vunpack.c.l.b16 %v1901
      %v2032 = vunpack.c.l.b16 %v1902
      %v2033 = vunpack.c.l.b16 %v1903
      %v2034 = vunpack.c.l.b16 %v1904
      %v2035 = vunpack.c.l.b16 %v1905
      %v2036 = vunpack.c.l.b16 %v1906
      %v2037 = vunpack.c.l.b16 %v1907
      %v2038 = vunpack.c.l.b16 %v1908
      %v2039 = vunpack.c.l.b16 %v1909
      %v2040 = vunpack.c.l.b16 %v1910
      %v2041 = vunpack.c.l.b16 %v1911
      %v2042 = vunpack.c.l.b16 %v1912
      %v2043 = vunpack.c.l.b16 %v1913
      %v2044 = vunpack.c.l.b16 %v1914
      %v2045 = vunpack.c.l.b16 %v1915
      %v2046 = vunpack.c.l.b16 %v1916
      %v2047 = vunpack.c.l.b16 %v1917
      %v2048 = vunpack.c.l.b16 %v1918
      %v2049 = vunpack.c.l.b16 %v1919
      %v2050 = vpack.c.b16 %v1987, %v1986
      %v2051 = vpack.c.b16 %v1989, %v1988
      %v2052 = vpack.c.b16 %v1991, %v1990
      %v2053 = vpack.c.b16 %v1993, %v1992
      %v2054 = vpack.c.b16 %v1995, %v1994
      %v2055 = vpack.c.b16 %v1997, %v1996
      %v2056 = vpack.c.b16 %v1999, %v1998
      %v2057 = vpack.c.b16 %v2001, %v2000
      %v2058 = vpack.c.b16 %v2003, %v2002
      %v2059 = vpack.c.b16 %v2005, %v2004
      %v2060 = vpack.c.b16 %v2007, %v2006
      %v2061 = vpack.c.b16 %v2009, %v2008
      %v2062 = vpack.c.b16 %v2011, %v2010
      %v2063 = vpack.c.b16 %v2013, %v2012
      %v2064 = vpack.c.b16 %v2015, %v2014
      %v2065 = vpack.c.b16 %v2017, %v2016
      %v2066 = vpack.c.b16 %v2019, %v2018
      %v2067 = vpack.c.b16 %v2021, %v2020
      %v2068 = vpack.c.b16 %v2023, %v2022
      %v2069 = vpack.c.b16 %v2025, %v2024
      %v2070 = vpack.c.b16 %v2027, %v2026
      %v2071 = vpack.c.b16 %v2029, %v2028
      %v2072 = vpack.c.b16 %v2031, %v2030
      %v2073 = vpack.c.b16 %v2033, %v2032
      %v2074 = vpack.c.b16 %v2035, %v2034
      %v2075 = vpack.c.b16 %v2037, %v2036
      %v2076 = vpack.c.b16 %v2039, %v2038
      %v2077 = vpack.c.b16 %v2041, %v2040
      %v2078 = vpack.c.b16 %v2043, %v2042
      %v2079 = vpack.c.b16 %v2045, %v2044
      %v2080 = vpack.c.b16 %v2047, %v2046
      %v2081 = vpack.c.b16 %v2049, %v2048
      %v2083 = vsel %vm496, %v1921, 0
      %v2086 = vsel %vm496, %v2050, 0
      %v2089 = vsel %vm496, %v2051, 0
      %v2092 = vsel %vm496, %v2052, 0
      %v2095 = vsel %vm496, %v2053, 0
      %v2098 = vsel %vm496, %v2054, 0
      %v2101 = vsel %vm496, %v2055, 0
      %v2104 = vsel %vm496, %v2056, 0
      %v2107 = vsel %vm496, %v2057, 0
      %v2110 = vsel %vm496, %v2058, 0
      %v2113 = vsel %vm496, %v2059, 0
      %v2116 = vsel %vm496, %v2060, 0
      %v2119 = vsel %vm496, %v2061, 0
      %v2122 = vsel %vm496, %v2062, 0
      %v2125 = vsel %vm496, %v2063, 0
      %v2128 = vsel %vm496, %v2064, 0
      %v2131 = vsel %vm496, %v2065, 0
      %v2134 = vsel %vm496, %v2066, 0
      %v2137 = vsel %vm496, %v2067, 0
      %v2140 = vsel %vm496, %v2068, 0
      %v2143 = vsel %vm496, %v2069, 0
      %v2146 = vsel %vm496, %v2070, 0
      %v2149 = vsel %vm496, %v2071, 0
      %v2152 = vsel %vm496, %v2072, 0
      %v2155 = vsel %vm496, %v2073, 0
      %v2158 = vsel %vm496, %v2074, 0
      %v2161 = vsel %vm496, %v2075, 0
      %v2164 = vsel %vm496, %v2076, 0
      %v2167 = vsel %vm496, %v2077, 0
      %v2170 = vsel %vm496, %v2078, 0
      %v2173 = vsel %vm496, %v2079, 0
      %v2176 = vsel %vm496, %v2080, 0
      %v2179 = vsel %vm496, %v2081, 0
      %2181 = vmatprep.subr.bf16.mxu0 0
      %2182 = vmatpush1.bf16.xpose.msra.mxu0 %v2107
      %2183 = vmatprep.subr.bf16.mxu0 0
      %2184 = vmatpush1.bf16.xpose.msra.mxu0 %v2104
      %2185 = vmatprep.subr.bf16.mxu0 0
      %2186 = vmatpush1.bf16.xpose.msra.mxu0 %v2101
      %2187 = vmatprep.subr.bf16.mxu0 0
      %2188 = vmatpush1.bf16.xpose.msra.mxu0 %v2098
      %2189 = vmatprep.subr.bf16.mxu0 0
      %2190 = vmatpush1.bf16.xpose.msra.mxu0 %v2095
      %2191 = vmatprep.subr.bf16.mxu0 0
      %2192 = vmatpush1.bf16.xpose.msra.mxu0 %v2092
      %2193 = vmatprep.subr.bf16.mxu0 0
      %2194 = vmatpush1.bf16.xpose.msra.mxu0 %v2089
      %2195 = vmatprep.subr.bf16.mxu0 0
      %2196 = vmatpush1.bf16.xpose.msra.mxu0 %v2086
      %2197 = vmatprep.subr.bf16.mxu0 0
      %2198 = vmatpush2.bf16.xpose.msra.mxu0 %v2131
      %2199 = vmatprep.subr.bf16.mxu0 0
      %2200 = vmatpush2.bf16.xpose.msra.mxu0 %v2128
      %2201 = vmatprep.subr.bf16.mxu0 0
      %2202 = vmatpush2.bf16.xpose.msra.mxu0 %v2125
      %2203 = vmatprep.subr.bf16.mxu0 0
      %2204 = vmatpush2.bf16.xpose.msra.mxu0 %v2122
      %2205 = vmatprep.subr.bf16.mxu0 0
      %2206 = vmatpush2.bf16.xpose.msra.mxu0 %v2119
      %2207 = vmatprep.subr.bf16.mxu0 0
      %2208 = vmatpush2.bf16.xpose.msra.mxu0 %v2116
      %2209 = vmatprep.subr.bf16.mxu0 0
      %2210 = vmatpush2.bf16.xpose.msra.mxu0 %v2113
      %2211 = vmatprep.subr.bf16.mxu0 0
      %2212 = vmatpush2.bf16.xpose.msra.mxu0 %v2110
      %2213 = vmatprep.mubr.bf16.mxu0 0
      %2214 = vmatmul.mubr.bf16.gmra.mxu0 %v2083
      %v2215 = vpop.f32.mrf.mxu0
      %v2216 = vadd.f32 0.0, %v2215
      %v2217 = vpop.f32.mrf.mxu0
      %v2218 = vadd.f32 0.0, %v2217
      %v2219 = vpop.f32.mrf.mxu0
      %v2220 = vpop.f32.mrf.mxu0
      %2221 = vdwg.mxu0
      %2222 = vmatprep.subr.bf16.mxu0 0
      %2223 = vmatpush1.bf16.xpose.msra.mxu0 %v2155
      %2224 = vmatprep.subr.bf16.mxu0 0
      %2225 = vmatpush1.bf16.xpose.msra.mxu0 %v2152
      %2226 = vmatprep.subr.bf16.mxu0 0
      %2227 = vmatpush1.bf16.xpose.msra.mxu0 %v2149
      %2228 = vmatprep.subr.bf16.mxu0 0
      %2229 = vmatpush1.bf16.xpose.msra.mxu0 %v2146
      %2230 = vmatprep.subr.bf16.mxu0 0
      %2231 = vmatpush1.bf16.xpose.msra.mxu0 %v2143
      %2232 = vmatprep.subr.bf16.mxu0 0
      %2233 = vmatpush1.bf16.xpose.msra.mxu0 %v2140
      %2234 = vmatprep.subr.bf16.mxu0 0
      %2235 = vmatpush1.bf16.xpose.msra.mxu0 %v2137
      %2236 = vmatprep.subr.bf16.mxu0 0
      %2237 = vmatpush1.bf16.xpose.msra.mxu0 %v2134
      %2238 = vmatprep.subr.bf16.mxu0 0
      %2239 = vmatpush2.bf16.xpose.msra.mxu0 %v2179
      %2240 = vmatprep.subr.bf16.mxu0 0
      %2241 = vmatpush2.bf16.xpose.msra.mxu0 %v2176
      %2242 = vmatprep.subr.bf16.mxu0 0
      %2243 = vmatpush2.bf16.xpose.msra.mxu0 %v2173
      %2244 = vmatprep.subr.bf16.mxu0 0
      %2245 = vmatpush2.bf16.xpose.msra.mxu0 %v2170
      %2246 = vmatprep.subr.bf16.mxu0 0
      %2247 = vmatpush2.bf16.xpose.msra.mxu0 %v2167
      %2248 = vmatprep.subr.bf16.mxu0 0
      %2249 = vmatpush2.bf16.xpose.msra.mxu0 %v2164
      %2250 = vmatprep.subr.bf16.mxu0 0
      %2251 = vmatpush2.bf16.xpose.msra.mxu0 %v2161
      %2252 = vmatprep.subr.bf16.mxu0 0
      %2253 = vmatpush2.bf16.xpose.msra.mxu0 %v2158
      %2254 = vmatprep.mubr.bf16.mxu0 0
      %2255 = vmatmul.mubr.bf16.gmra.mxu0 %v2083
      %v2256 = vpop.f32.mrf.mxu0
      %v2257 = vadd.f32 0.0, %v2256
      %v2258 = vpop.f32.mrf.mxu0
      %v2259 = vadd.f32 0.0, %v2258
      %v2260 = vpop.f32.mrf.mxu0
      %v2261 = vpop.f32.mrf.mxu0
      %2262 = vdwg.mxu0
      %v2263 = vadd.f32 %v1847, %v2216
      %v2264 = vadd.f32 %v1848, %v2218
      %v2265 = vadd.f32 %v1849, %v2257
      %v2266 = vadd.f32 %v1850, %v2259
      %s2267 = sadd.s32 %s195, 160
      %s2268 = sshra.s32 %s2267, 3
      %s2269 = sand.u32 %s2267, 7
      %s2270 = smul.addr %s2268, 4
      %s2271 = scalar_lea.vmem %s183, %s2270
      %v2272 = vld [vmem:[%s2271] sm:$0xf]
      %v2273 = vld [vmem:[%s2271 + $0x4] sm:$0xf]
      %v2274 = vld [vmem:[%s2271 + $0x8] sm:$0xf]
      %v2275 = vld [vmem:[%s2271 + $0xc] sm:$0xf]
      %v2276 = vld [vmem:[%s2271 + $0x10] sm:$0xf]
      %v2277 = vld [vmem:[%s2271 + $0x14] sm:$0xf]
      %v2278 = vld [vmem:[%s2271 + $0x18] sm:$0xf]
      %v2279 = vld [vmem:[%s2271 + $0x1c] sm:$0xf]
      %v2280 = vld [vmem:[%s2271 + $0x20] sm:$0xf]
      %v2281 = vld [vmem:[%s2271 + $0x24] sm:$0xf]
      %v2282 = vld [vmem:[%s2271 + $0x28] sm:$0xf]
      %v2283 = vld [vmem:[%s2271 + $0x2c] sm:$0xf]
      %v2284 = vld [vmem:[%s2271 + $0x30] sm:$0xf]
      %v2285 = vld [vmem:[%s2271 + $0x34] sm:$0xf]
      %v2286 = vld [vmem:[%s2271 + $0x38] sm:$0xf]
      %v2287 = vld [vmem:[%s2271 + $0x3c] sm:$0xf]
      %v2288 = vld [vmem:[%s2271 + $0x40] sm:$0xf]
      %v2289 = vld [vmem:[%s2271 + $0x44] sm:$0xf]
      %v2290 = vld [vmem:[%s2271 + $0x48] sm:$0xf]
      %v2291 = vld [vmem:[%s2271 + $0x4c] sm:$0xf]
      %v2292 = vld [vmem:[%s2271 + $0x50] sm:$0xf]
      %v2293 = vld [vmem:[%s2271 + $0x54] sm:$0xf]
      %v2294 = vld [vmem:[%s2271 + $0x58] sm:$0xf]
      %v2295 = vld [vmem:[%s2271 + $0x5c] sm:$0xf]
      %v2296 = vld [vmem:[%s2271 + $0x60] sm:$0xf]
      %v2297 = vld [vmem:[%s2271 + $0x64] sm:$0xf]
      %v2298 = vld [vmem:[%s2271 + $0x68] sm:$0xf]
      %v2299 = vld [vmem:[%s2271 + $0x6c] sm:$0xf]
      %v2300 = vld [vmem:[%s2271 + $0x70] sm:$0xf]
      %v2301 = vld [vmem:[%s2271 + $0x74] sm:$0xf]
      %v2302 = vld [vmem:[%s2271 + $0x78] sm:$0xf]
      %v2303 = vld [vmem:[%s2271 + $0x7c] sm:$0xf]
      %v2304 = vld [vmem:[%s2271 + $0x80] sm:$0xf]
      %v2305 = vld [vmem:[%s2271 + $0x84] sm:$0xf]
      %v2306 = vld [vmem:[%s2271 + $0x88] sm:$0xf]
      %v2307 = vld [vmem:[%s2271 + $0x8c] sm:$0xf]
      %v2308 = vld [vmem:[%s2271 + $0x90] sm:$0xf]
      %v2309 = vld [vmem:[%s2271 + $0x94] sm:$0xf]
      %v2310 = vld [vmem:[%s2271 + $0x98] sm:$0xf]
      %v2311 = vld [vmem:[%s2271 + $0x9c] sm:$0xf]
      %v2312 = vld [vmem:[%s2271 + $0xa0] sm:$0xf]
      %v2313 = vld [vmem:[%s2271 + $0xa4] sm:$0xf]
      %v2314 = vld [vmem:[%s2271 + $0xa8] sm:$0xf]
      %v2315 = vld [vmem:[%s2271 + $0xac] sm:$0xf]
      %v2316 = vld [vmem:[%s2271 + $0xb0] sm:$0xf]
      %v2317 = vld [vmem:[%s2271 + $0xb4] sm:$0xf]
      %v2318 = vld [vmem:[%s2271 + $0xb8] sm:$0xf]
      %v2319 = vld [vmem:[%s2271 + $0xbc] sm:$0xf]
      %v2320 = vld [vmem:[%s2271 + $0xc0] sm:$0xf]
      %v2321 = vld [vmem:[%s2271 + $0xc4] sm:$0xf]
      %v2322 = vld [vmem:[%s2271 + $0xc8] sm:$0xf]
      %v2323 = vld [vmem:[%s2271 + $0xcc] sm:$0xf]
      %v2324 = vld [vmem:[%s2271 + $0xd0] sm:$0xf]
      %v2325 = vld [vmem:[%s2271 + $0xd4] sm:$0xf]
      %v2326 = vld [vmem:[%s2271 + $0xd8] sm:$0xf]
      %v2327 = vld [vmem:[%s2271 + $0xdc] sm:$0xf]
      %v2328 = vld [vmem:[%s2271 + $0xe0] sm:$0xf]
      %v2329 = vld [vmem:[%s2271 + $0xe4] sm:$0xf]
      %v2330 = vld [vmem:[%s2271 + $0xe8] sm:$0xf]
      %v2331 = vld [vmem:[%s2271 + $0xec] sm:$0xf]
      %v2332 = vld [vmem:[%s2271 + $0xf0] sm:$0xf]
      %v2333 = vld [vmem:[%s2271 + $0xf4] sm:$0xf]
      %v2334 = vld [vmem:[%s2271 + $0xf8] sm:$0xf]
      %v2335 = vld [vmem:[%s2271 + $0xfc] sm:$0xf]
      %s2336 = scalar_lea.vmem %s1, 20
      %v2337 = vld [vmem:[%s2336] sm:$0xf]
      %v2402 = vunpack.c.l.b16 %v2272
      %v2403 = vunpack.c.l.b16 %v2273
      %v2404 = vunpack.c.l.b16 %v2274
      %v2405 = vunpack.c.l.b16 %v2275
      %v2406 = vunpack.c.l.b16 %v2276
      %v2407 = vunpack.c.l.b16 %v2277
      %v2408 = vunpack.c.l.b16 %v2278
      %v2409 = vunpack.c.l.b16 %v2279
      %v2410 = vunpack.c.l.b16 %v2280
      %v2411 = vunpack.c.l.b16 %v2281
      %v2412 = vunpack.c.l.b16 %v2282
      %v2413 = vunpack.c.l.b16 %v2283
      %v2414 = vunpack.c.l.b16 %v2284
      %v2415 = vunpack.c.l.b16 %v2285
      %v2416 = vunpack.c.l.b16 %v2286
      %v2417 = vunpack.c.l.b16 %v2287
      %v2418 = vunpack.c.l.b16 %v2288
      %v2419 = vunpack.c.l.b16 %v2289
      %v2420 = vunpack.c.l.b16 %v2290
      %v2421 = vunpack.c.l.b16 %v2291
      %v2422 = vunpack.c.l.b16 %v2292
      %v2423 = vunpack.c.l.b16 %v2293
      %v2424 = vunpack.c.l.b16 %v2294
      %v2425 = vunpack.c.l.b16 %v2295
      %v2426 = vunpack.c.l.b16 %v2296
      %v2427 = vunpack.c.l.b16 %v2297
      %v2428 = vunpack.c.l.b16 %v2298
      %v2429 = vunpack.c.l.b16 %v2299
      %v2430 = vunpack.c.l.b16 %v2300
      %v2431 = vunpack.c.l.b16 %v2301
      %v2432 = vunpack.c.l.b16 %v2302
      %v2433 = vunpack.c.l.b16 %v2303
      %v2434 = vunpack.c.l.b16 %v2304
      %v2435 = vunpack.c.l.b16 %v2305
      %v2436 = vunpack.c.l.b16 %v2306
      %v2437 = vunpack.c.l.b16 %v2307
      %v2438 = vunpack.c.l.b16 %v2308
      %v2439 = vunpack.c.l.b16 %v2309
      %v2440 = vunpack.c.l.b16 %v2310
      %v2441 = vunpack.c.l.b16 %v2311
      %v2442 = vunpack.c.l.b16 %v2312
      %v2443 = vunpack.c.l.b16 %v2313
      %v2444 = vunpack.c.l.b16 %v2314
      %v2445 = vunpack.c.l.b16 %v2315
      %v2446 = vunpack.c.l.b16 %v2316
      %v2447 = vunpack.c.l.b16 %v2317
      %v2448 = vunpack.c.l.b16 %v2318
      %v2449 = vunpack.c.l.b16 %v2319
      %v2450 = vunpack.c.l.b16 %v2320
      %v2451 = vunpack.c.l.b16 %v2321
      %v2452 = vunpack.c.l.b16 %v2322
      %v2453 = vunpack.c.l.b16 %v2323
      %v2454 = vunpack.c.l.b16 %v2324
      %v2455 = vunpack.c.l.b16 %v2325
      %v2456 = vunpack.c.l.b16 %v2326
      %v2457 = vunpack.c.l.b16 %v2327
      %v2458 = vunpack.c.l.b16 %v2328
      %v2459 = vunpack.c.l.b16 %v2329
      %v2460 = vunpack.c.l.b16 %v2330
      %v2461 = vunpack.c.l.b16 %v2331
      %v2462 = vunpack.c.l.b16 %v2332
      %v2463 = vunpack.c.l.b16 %v2333
      %v2464 = vunpack.c.l.b16 %v2334
      %v2465 = vunpack.c.l.b16 %v2335
      %v2466 = vpack.c.b16 %v2403, %v2402
      %v2467 = vpack.c.b16 %v2405, %v2404
      %v2468 = vpack.c.b16 %v2407, %v2406
      %v2469 = vpack.c.b16 %v2409, %v2408
      %v2470 = vpack.c.b16 %v2411, %v2410
      %v2471 = vpack.c.b16 %v2413, %v2412
      %v2472 = vpack.c.b16 %v2415, %v2414
      %v2473 = vpack.c.b16 %v2417, %v2416
      %v2474 = vpack.c.b16 %v2419, %v2418
      %v2475 = vpack.c.b16 %v2421, %v2420
      %v2476 = vpack.c.b16 %v2423, %v2422
      %v2477 = vpack.c.b16 %v2425, %v2424
      %v2478 = vpack.c.b16 %v2427, %v2426
      %v2479 = vpack.c.b16 %v2429, %v2428
      %v2480 = vpack.c.b16 %v2431, %v2430
      %v2481 = vpack.c.b16 %v2433, %v2432
      %v2482 = vpack.c.b16 %v2435, %v2434
      %v2483 = vpack.c.b16 %v2437, %v2436
      %v2484 = vpack.c.b16 %v2439, %v2438
      %v2485 = vpack.c.b16 %v2441, %v2440
      %v2486 = vpack.c.b16 %v2443, %v2442
      %v2487 = vpack.c.b16 %v2445, %v2444
      %v2488 = vpack.c.b16 %v2447, %v2446
      %v2489 = vpack.c.b16 %v2449, %v2448
      %v2490 = vpack.c.b16 %v2451, %v2450
      %v2491 = vpack.c.b16 %v2453, %v2452
      %v2492 = vpack.c.b16 %v2455, %v2454
      %v2493 = vpack.c.b16 %v2457, %v2456
      %v2494 = vpack.c.b16 %v2459, %v2458
      %v2495 = vpack.c.b16 %v2461, %v2460
      %v2496 = vpack.c.b16 %v2463, %v2462
      %v2497 = vpack.c.b16 %v2465, %v2464
      %v2499 = vsel %vm496, %v2337, 0
      %v2502 = vsel %vm496, %v2466, 0
      %v2505 = vsel %vm496, %v2467, 0
      %v2508 = vsel %vm496, %v2468, 0
      %v2511 = vsel %vm496, %v2469, 0
      %v2514 = vsel %vm496, %v2470, 0
      %v2517 = vsel %vm496, %v2471, 0
      %v2520 = vsel %vm496, %v2472, 0
      %v2523 = vsel %vm496, %v2473, 0
      %v2526 = vsel %vm496, %v2474, 0
      %v2529 = vsel %vm496, %v2475, 0
      %v2532 = vsel %vm496, %v2476, 0
      %v2535 = vsel %vm496, %v2477, 0
      %v2538 = vsel %vm496, %v2478, 0
      %v2541 = vsel %vm496, %v2479, 0
      %v2544 = vsel %vm496, %v2480, 0
      %v2547 = vsel %vm496, %v2481, 0
      %v2550 = vsel %vm496, %v2482, 0
      %v2553 = vsel %vm496, %v2483, 0
      %v2556 = vsel %vm496, %v2484, 0
      %v2559 = vsel %vm496, %v2485, 0
      %v2562 = vsel %vm496, %v2486, 0
      %v2565 = vsel %vm496, %v2487, 0
      %v2568 = vsel %vm496, %v2488, 0
      %v2571 = vsel %vm496, %v2489, 0
      %v2574 = vsel %vm496, %v2490, 0
      %v2577 = vsel %vm496, %v2491, 0
      %v2580 = vsel %vm496, %v2492, 0
      %v2583 = vsel %vm496, %v2493, 0
      %v2586 = vsel %vm496, %v2494, 0
      %v2589 = vsel %vm496, %v2495, 0
      %v2592 = vsel %vm496, %v2496, 0
      %v2595 = vsel %vm496, %v2497, 0
      %2597 = vmatprep.subr.bf16.mxu0 0
      %2598 = vmatpush1.bf16.xpose.msra.mxu0 %v2523
      %2599 = vmatprep.subr.bf16.mxu0 0
      %2600 = vmatpush1.bf16.xpose.msra.mxu0 %v2520
      %2601 = vmatprep.subr.bf16.mxu0 0
      %2602 = vmatpush1.bf16.xpose.msra.mxu0 %v2517
      %2603 = vmatprep.subr.bf16.mxu0 0
      %2604 = vmatpush1.bf16.xpose.msra.mxu0 %v2514
      %2605 = vmatprep.subr.bf16.mxu0 0
      %2606 = vmatpush1.bf16.xpose.msra.mxu0 %v2511
      %2607 = vmatprep.subr.bf16.mxu0 0
      %2608 = vmatpush1.bf16.xpose.msra.mxu0 %v2508
      %2609 = vmatprep.subr.bf16.mxu0 0
      %2610 = vmatpush1.bf16.xpose.msra.mxu0 %v2505
      %2611 = vmatprep.subr.bf16.mxu0 0
      %2612 = vmatpush1.bf16.xpose.msra.mxu0 %v2502
      %2613 = vmatprep.subr.bf16.mxu0 0
      %2614 = vmatpush2.bf16.xpose.msra.mxu0 %v2547
      %2615 = vmatprep.subr.bf16.mxu0 0
      %2616 = vmatpush2.bf16.xpose.msra.mxu0 %v2544
      %2617 = vmatprep.subr.bf16.mxu0 0
      %2618 = vmatpush2.bf16.xpose.msra.mxu0 %v2541
      %2619 = vmatprep.subr.bf16.mxu0 0
      %2620 = vmatpush2.bf16.xpose.msra.mxu0 %v2538
      %2621 = vmatprep.subr.bf16.mxu0 0
      %2622 = vmatpush2.bf16.xpose.msra.mxu0 %v2535
      %2623 = vmatprep.subr.bf16.mxu0 0
      %2624 = vmatpush2.bf16.xpose.msra.mxu0 %v2532
      %2625 = vmatprep.subr.bf16.mxu0 0
      %2626 = vmatpush2.bf16.xpose.msra.mxu0 %v2529
      %2627 = vmatprep.subr.bf16.mxu0 0
      %2628 = vmatpush2.bf16.xpose.msra.mxu0 %v2526
      %2629 = vmatprep.mubr.bf16.mxu0 0
      %2630 = vmatmul.mubr.bf16.gmra.mxu0 %v2499
      %v2631 = vpop.f32.mrf.mxu0
      %v2632 = vadd.f32 0.0, %v2631
      %v2633 = vpop.f32.mrf.mxu0
      %v2634 = vadd.f32 0.0, %v2633
      %v2635 = vpop.f32.mrf.mxu0
      %v2636 = vpop.f32.mrf.mxu0
      %2637 = vdwg.mxu0
      %2638 = vmatprep.subr.bf16.mxu0 0
      %2639 = vmatpush1.bf16.xpose.msra.mxu0 %v2571
      %2640 = vmatprep.subr.bf16.mxu0 0
      %2641 = vmatpush1.bf16.xpose.msra.mxu0 %v2568
      %2642 = vmatprep.subr.bf16.mxu0 0
      %2643 = vmatpush1.bf16.xpose.msra.mxu0 %v2565
      %2644 = vmatprep.subr.bf16.mxu0 0
      %2645 = vmatpush1.bf16.xpose.msra.mxu0 %v2562
      %2646 = vmatprep.subr.bf16.mxu0 0
      %2647 = vmatpush1.bf16.xpose.msra.mxu0 %v2559
      %2648 = vmatprep.subr.bf16.mxu0 0
      %2649 = vmatpush1.bf16.xpose.msra.mxu0 %v2556
      %2650 = vmatprep.subr.bf16.mxu0 0
      %2651 = vmatpush1.bf16.xpose.msra.mxu0 %v2553
      %2652 = vmatprep.subr.bf16.mxu0 0
      %2653 = vmatpush1.bf16.xpose.msra.mxu0 %v2550
      %2654 = vmatprep.subr.bf16.mxu0 0
      %2655 = vmatpush2.bf16.xpose.msra.mxu0 %v2595
      %2656 = vmatprep.subr.bf16.mxu0 0
      %2657 = vmatpush2.bf16.xpose.msra.mxu0 %v2592
      %2658 = vmatprep.subr.bf16.mxu0 0
      %2659 = vmatpush2.bf16.xpose.msra.mxu0 %v2589
      %2660 = vmatprep.subr.bf16.mxu0 0
      %2661 = vmatpush2.bf16.xpose.msra.mxu0 %v2586
      %2662 = vmatprep.subr.bf16.mxu0 0
      %2663 = vmatpush2.bf16.xpose.msra.mxu0 %v2583
      %2664 = vmatprep.subr.bf16.mxu0 0
      %2665 = vmatpush2.bf16.xpose.msra.mxu0 %v2580
      %2666 = vmatprep.subr.bf16.mxu0 0
      %2667 = vmatpush2.bf16.xpose.msra.mxu0 %v2577
      %2668 = vmatprep.subr.bf16.mxu0 0
      %2669 = vmatpush2.bf16.xpose.msra.mxu0 %v2574
      %2670 = vmatprep.mubr.bf16.mxu0 0
      %2671 = vmatmul.mubr.bf16.gmra.mxu0 %v2499
      %v2672 = vpop.f32.mrf.mxu0
      %v2673 = vadd.f32 0.0, %v2672
      %v2674 = vpop.f32.mrf.mxu0
      %v2675 = vadd.f32 0.0, %v2674
      %v2676 = vpop.f32.mrf.mxu0
      %v2677 = vpop.f32.mrf.mxu0
      %2678 = vdwg.mxu0
      %v2679 = vadd.f32 %v2263, %v2632
      %v2680 = vadd.f32 %v2264, %v2634
      %v2681 = vadd.f32 %v2265, %v2673
      %v2682 = vadd.f32 %v2266, %v2675
      %s2683 = sadd.s32 %s195, 192
      %s2684 = sshra.s32 %s2683, 3
      %s2685 = sand.u32 %s2683, 7
      %s2686 = smul.addr %s2684, 4
      %s2687 = scalar_lea.vmem %s183, %s2686
      %v2688 = vld [vmem:[%s2687] sm:$0xf]
      %v2689 = vld [vmem:[%s2687 + $0x4] sm:$0xf]
      %v2690 = vld [vmem:[%s2687 + $0x8] sm:$0xf]
      %v2691 = vld [vmem:[%s2687 + $0xc] sm:$0xf]
      %v2692 = vld [vmem:[%s2687 + $0x10] sm:$0xf]
      %v2693 = vld [vmem:[%s2687 + $0x14] sm:$0xf]
      %v2694 = vld [vmem:[%s2687 + $0x18] sm:$0xf]
      %v2695 = vld [vmem:[%s2687 + $0x1c] sm:$0xf]
      %v2696 = vld [vmem:[%s2687 + $0x20] sm:$0xf]
      %v2697 = vld [vmem:[%s2687 + $0x24] sm:$0xf]
      %v2698 = vld [vmem:[%s2687 + $0x28] sm:$0xf]
      %v2699 = vld [vmem:[%s2687 + $0x2c] sm:$0xf]
      %v2700 = vld [vmem:[%s2687 + $0x30] sm:$0xf]
      %v2701 = vld [vmem:[%s2687 + $0x34] sm:$0xf]
      %v2702 = vld [vmem:[%s2687 + $0x38] sm:$0xf]
      %v2703 = vld [vmem:[%s2687 + $0x3c] sm:$0xf]
      %v2704 = vld [vmem:[%s2687 + $0x40] sm:$0xf]
      %v2705 = vld [vmem:[%s2687 + $0x44] sm:$0xf]
      %v2706 = vld [vmem:[%s2687 + $0x48] sm:$0xf]
      %v2707 = vld [vmem:[%s2687 + $0x4c] sm:$0xf]
      %v2708 = vld [vmem:[%s2687 + $0x50] sm:$0xf]
      %v2709 = vld [vmem:[%s2687 + $0x54] sm:$0xf]
      %v2710 = vld [vmem:[%s2687 + $0x58] sm:$0xf]
      %v2711 = vld [vmem:[%s2687 + $0x5c] sm:$0xf]
      %v2712 = vld [vmem:[%s2687 + $0x60] sm:$0xf]
      %v2713 = vld [vmem:[%s2687 + $0x64] sm:$0xf]
      %v2714 = vld [vmem:[%s2687 + $0x68] sm:$0xf]
      %v2715 = vld [vmem:[%s2687 + $0x6c] sm:$0xf]
      %v2716 = vld [vmem:[%s2687 + $0x70] sm:$0xf]
      %v2717 = vld [vmem:[%s2687 + $0x74] sm:$0xf]
      %v2718 = vld [vmem:[%s2687 + $0x78] sm:$0xf]
      %v2719 = vld [vmem:[%s2687 + $0x7c] sm:$0xf]
      %v2720 = vld [vmem:[%s2687 + $0x80] sm:$0xf]
      %v2721 = vld [vmem:[%s2687 + $0x84] sm:$0xf]
      %v2722 = vld [vmem:[%s2687 + $0x88] sm:$0xf]
      %v2723 = vld [vmem:[%s2687 + $0x8c] sm:$0xf]
      %v2724 = vld [vmem:[%s2687 + $0x90] sm:$0xf]
      %v2725 = vld [vmem:[%s2687 + $0x94] sm:$0xf]
      %v2726 = vld [vmem:[%s2687 + $0x98] sm:$0xf]
      %v2727 = vld [vmem:[%s2687 + $0x9c] sm:$0xf]
      %v2728 = vld [vmem:[%s2687 + $0xa0] sm:$0xf]
      %v2729 = vld [vmem:[%s2687 + $0xa4] sm:$0xf]
      %v2730 = vld [vmem:[%s2687 + $0xa8] sm:$0xf]
      %v2731 = vld [vmem:[%s2687 + $0xac] sm:$0xf]
      %v2732 = vld [vmem:[%s2687 + $0xb0] sm:$0xf]
      %v2733 = vld [vmem:[%s2687 + $0xb4] sm:$0xf]
      %v2734 = vld [vmem:[%s2687 + $0xb8] sm:$0xf]
      %v2735 = vld [vmem:[%s2687 + $0xbc] sm:$0xf]
      %v2736 = vld [vmem:[%s2687 + $0xc0] sm:$0xf]
      %v2737 = vld [vmem:[%s2687 + $0xc4] sm:$0xf]
      %v2738 = vld [vmem:[%s2687 + $0xc8] sm:$0xf]
      %v2739 = vld [vmem:[%s2687 + $0xcc] sm:$0xf]
      %v2740 = vld [vmem:[%s2687 + $0xd0] sm:$0xf]
      %v2741 = vld [vmem:[%s2687 + $0xd4] sm:$0xf]
      %v2742 = vld [vmem:[%s2687 + $0xd8] sm:$0xf]
      %v2743 = vld [vmem:[%s2687 + $0xdc] sm:$0xf]
      %v2744 = vld [vmem:[%s2687 + $0xe0] sm:$0xf]
      %v2745 = vld [vmem:[%s2687 + $0xe4] sm:$0xf]
      %v2746 = vld [vmem:[%s2687 + $0xe8] sm:$0xf]
      %v2747 = vld [vmem:[%s2687 + $0xec] sm:$0xf]
      %v2748 = vld [vmem:[%s2687 + $0xf0] sm:$0xf]
      %v2749 = vld [vmem:[%s2687 + $0xf4] sm:$0xf]
      %v2750 = vld [vmem:[%s2687 + $0xf8] sm:$0xf]
      %v2751 = vld [vmem:[%s2687 + $0xfc] sm:$0xf]
      %s2752 = scalar_lea.vmem %s1, 24
      %v2753 = vld [vmem:[%s2752] sm:$0xf]
      %v2818 = vunpack.c.l.b16 %v2688
      %v2819 = vunpack.c.l.b16 %v2689
      %v2820 = vunpack.c.l.b16 %v2690
      %v2821 = vunpack.c.l.b16 %v2691
      %v2822 = vunpack.c.l.b16 %v2692
      %v2823 = vunpack.c.l.b16 %v2693
      %v2824 = vunpack.c.l.b16 %v2694
      %v2825 = vunpack.c.l.b16 %v2695
      %v2826 = vunpack.c.l.b16 %v2696
      %v2827 = vunpack.c.l.b16 %v2697
      %v2828 = vunpack.c.l.b16 %v2698
      %v2829 = vunpack.c.l.b16 %v2699
      %v2830 = vunpack.c.l.b16 %v2700
      %v2831 = vunpack.c.l.b16 %v2701
      %v2832 = vunpack.c.l.b16 %v2702
      %v2833 = vunpack.c.l.b16 %v2703
      %v2834 = vunpack.c.l.b16 %v2704
      %v2835 = vunpack.c.l.b16 %v2705
      %v2836 = vunpack.c.l.b16 %v2706
      %v2837 = vunpack.c.l.b16 %v2707
      %v2838 = vunpack.c.l.b16 %v2708
      %v2839 = vunpack.c.l.b16 %v2709
      %v2840 = vunpack.c.l.b16 %v2710
      %v2841 = vunpack.c.l.b16 %v2711
      %v2842 = vunpack.c.l.b16 %v2712
      %v2843 = vunpack.c.l.b16 %v2713
      %v2844 = vunpack.c.l.b16 %v2714
      %v2845 = vunpack.c.l.b16 %v2715
      %v2846 = vunpack.c.l.b16 %v2716
      %v2847 = vunpack.c.l.b16 %v2717
      %v2848 = vunpack.c.l.b16 %v2718
      %v2849 = vunpack.c.l.b16 %v2719
      %v2850 = vunpack.c.l.b16 %v2720
      %v2851 = vunpack.c.l.b16 %v2721
      %v2852 = vunpack.c.l.b16 %v2722
      %v2853 = vunpack.c.l.b16 %v2723
      %v2854 = vunpack.c.l.b16 %v2724
      %v2855 = vunpack.c.l.b16 %v2725
      %v2856 = vunpack.c.l.b16 %v2726
      %v2857 = vunpack.c.l.b16 %v2727
      %v2858 = vunpack.c.l.b16 %v2728
      %v2859 = vunpack.c.l.b16 %v2729
      %v2860 = vunpack.c.l.b16 %v2730
      %v2861 = vunpack.c.l.b16 %v2731
      %v2862 = vunpack.c.l.b16 %v2732
      %v2863 = vunpack.c.l.b16 %v2733
      %v2864 = vunpack.c.l.b16 %v2734
      %v2865 = vunpack.c.l.b16 %v2735
      %v2866 = vunpack.c.l.b16 %v2736
      %v2867 = vunpack.c.l.b16 %v2737
      %v2868 = vunpack.c.l.b16 %v2738
      %v2869 = vunpack.c.l.b16 %v2739
      %v2870 = vunpack.c.l.b16 %v2740
      %v2871 = vunpack.c.l.b16 %v2741
      %v2872 = vunpack.c.l.b16 %v2742
      %v2873 = vunpack.c.l.b16 %v2743
      %v2874 = vunpack.c.l.b16 %v2744
      %v2875 = vunpack.c.l.b16 %v2745
      %v2876 = vunpack.c.l.b16 %v2746
      %v2877 = vunpack.c.l.b16 %v2747
      %v2878 = vunpack.c.l.b16 %v2748
      %v2879 = vunpack.c.l.b16 %v2749
      %v2880 = vunpack.c.l.b16 %v2750
      %v2881 = vunpack.c.l.b16 %v2751
      %v2882 = vpack.c.b16 %v2819, %v2818
      %v2883 = vpack.c.b16 %v2821, %v2820
      %v2884 = vpack.c.b16 %v2823, %v2822
      %v2885 = vpack.c.b16 %v2825, %v2824
      %v2886 = vpack.c.b16 %v2827, %v2826
      %v2887 = vpack.c.b16 %v2829, %v2828
      %v2888 = vpack.c.b16 %v2831, %v2830
      %v2889 = vpack.c.b16 %v2833, %v2832
      %v2890 = vpack.c.b16 %v2835, %v2834
      %v2891 = vpack.c.b16 %v2837, %v2836
      %v2892 = vpack.c.b16 %v2839, %v2838
      %v2893 = vpack.c.b16 %v2841, %v2840
      %v2894 = vpack.c.b16 %v2843, %v2842
      %v2895 = vpack.c.b16 %v2845, %v2844
      %v2896 = vpack.c.b16 %v2847, %v2846
      %v2897 = vpack.c.b16 %v2849, %v2848
      %v2898 = vpack.c.b16 %v2851, %v2850
      %v2899 = vpack.c.b16 %v2853, %v2852
      %v2900 = vpack.c.b16 %v2855, %v2854
      %v2901 = vpack.c.b16 %v2857, %v2856
      %v2902 = vpack.c.b16 %v2859, %v2858
      %v2903 = vpack.c.b16 %v2861, %v2860
      %v2904 = vpack.c.b16 %v2863, %v2862
      %v2905 = vpack.c.b16 %v2865, %v2864
      %v2906 = vpack.c.b16 %v2867, %v2866
      %v2907 = vpack.c.b16 %v2869, %v2868
      %v2908 = vpack.c.b16 %v2871, %v2870
      %v2909 = vpack.c.b16 %v2873, %v2872
      %v2910 = vpack.c.b16 %v2875, %v2874
      %v2911 = vpack.c.b16 %v2877, %v2876
      %v2912 = vpack.c.b16 %v2879, %v2878
      %v2913 = vpack.c.b16 %v2881, %v2880
      %v2915 = vsel %vm496, %v2753, 0
      %v2918 = vsel %vm496, %v2882, 0
      %v2921 = vsel %vm496, %v2883, 0
      %v2924 = vsel %vm496, %v2884, 0
      %v2927 = vsel %vm496, %v2885, 0
      %v2930 = vsel %vm496, %v2886, 0
      %v2933 = vsel %vm496, %v2887, 0
      %v2936 = vsel %vm496, %v2888, 0
      %v2939 = vsel %vm496, %v2889, 0
      %v2942 = vsel %vm496, %v2890, 0
      %v2945 = vsel %vm496, %v2891, 0
      %v2948 = vsel %vm496, %v2892, 0
      %v2951 = vsel %vm496, %v2893, 0
      %v2954 = vsel %vm496, %v2894, 0
      %v2957 = vsel %vm496, %v2895, 0
      %v2960 = vsel %vm496, %v2896, 0
      %v2963 = vsel %vm496, %v2897, 0
      %v2966 = vsel %vm496, %v2898, 0
      %v2969 = vsel %vm496, %v2899, 0
      %v2972 = vsel %vm496, %v2900, 0
      %v2975 = vsel %vm496, %v2901, 0
      %v2978 = vsel %vm496, %v2902, 0
      %v2981 = vsel %vm496, %v2903, 0
      %v2984 = vsel %vm496, %v2904, 0
      %v2987 = vsel %vm496, %v2905, 0
      %v2990 = vsel %vm496, %v2906, 0
      %v2993 = vsel %vm496, %v2907, 0
      %v2996 = vsel %vm496, %v2908, 0
      %v2999 = vsel %vm496, %v2909, 0
      %v3002 = vsel %vm496, %v2910, 0
      %v3005 = vsel %vm496, %v2911, 0
      %v3008 = vsel %vm496, %v2912, 0
      %v3011 = vsel %vm496, %v2913, 0
      %3013 = vmatprep.subr.bf16.mxu0 0
      %3014 = vmatpush1.bf16.xpose.msra.mxu0 %v2939
      %3015 = vmatprep.subr.bf16.mxu0 0
      %3016 = vmatpush1.bf16.xpose.msra.mxu0 %v2936
      %3017 = vmatprep.subr.bf16.mxu0 0
      %3018 = vmatpush1.bf16.xpose.msra.mxu0 %v2933
      %3019 = vmatprep.subr.bf16.mxu0 0
      %3020 = vmatpush1.bf16.xpose.msra.mxu0 %v2930
      %3021 = vmatprep.subr.bf16.mxu0 0
      %3022 = vmatpush1.bf16.xpose.msra.mxu0 %v2927
      %3023 = vmatprep.subr.bf16.mxu0 0
      %3024 = vmatpush1.bf16.xpose.msra.mxu0 %v2924
      %3025 = vmatprep.subr.bf16.mxu0 0
      %3026 = vmatpush1.bf16.xpose.msra.mxu0 %v2921
      %3027 = vmatprep.subr.bf16.mxu0 0
      %3028 = vmatpush1.bf16.xpose.msra.mxu0 %v2918
      %3029 = vmatprep.subr.bf16.mxu0 0
      %3030 = vmatpush2.bf16.xpose.msra.mxu0 %v2963
      %3031 = vmatprep.subr.bf16.mxu0 0
      %3032 = vmatpush2.bf16.xpose.msra.mxu0 %v2960
      %3033 = vmatprep.subr.bf16.mxu0 0
      %3034 = vmatpush2.bf16.xpose.msra.mxu0 %v2957
      %3035 = vmatprep.subr.bf16.mxu0 0
      %3036 = vmatpush2.bf16.xpose.msra.mxu0 %v2954
      %3037 = vmatprep.subr.bf16.mxu0 0
      %3038 = vmatpush2.bf16.xpose.msra.mxu0 %v2951
      %3039 = vmatprep.subr.bf16.mxu0 0
      %3040 = vmatpush2.bf16.xpose.msra.mxu0 %v2948
      %3041 = vmatprep.subr.bf16.mxu0 0
      %3042 = vmatpush2.bf16.xpose.msra.mxu0 %v2945
      %3043 = vmatprep.subr.bf16.mxu0 0
      %3044 = vmatpush2.bf16.xpose.msra.mxu0 %v2942
      %3045 = vmatprep.mubr.bf16.mxu0 0
      %3046 = vmatmul.mubr.bf16.gmra.mxu0 %v2915
      %v3047 = vpop.f32.mrf.mxu0
      %v3048 = vadd.f32 0.0, %v3047
      %v3049 = vpop.f32.mrf.mxu0
      %v3050 = vadd.f32 0.0, %v3049
      %v3051 = vpop.f32.mrf.mxu0
      %v3052 = vpop.f32.mrf.mxu0
      %3053 = vdwg.mxu0
      %3054 = vmatprep.subr.bf16.mxu0 0
      %3055 = vmatpush1.bf16.xpose.msra.mxu0 %v2987
      %3056 = vmatprep.subr.bf16.mxu0 0
      %3057 = vmatpush1.bf16.xpose.msra.mxu0 %v2984
      %3058 = vmatprep.subr.bf16.mxu0 0
      %3059 = vmatpush1.bf16.xpose.msra.mxu0 %v2981
      %3060 = vmatprep.subr.bf16.mxu0 0
      %3061 = vmatpush1.bf16.xpose.msra.mxu0 %v2978
      %3062 = vmatprep.subr.bf16.mxu0 0
      %3063 = vmatpush1.bf16.xpose.msra.mxu0 %v2975
      %3064 = vmatprep.subr.bf16.mxu0 0
      %3065 = vmatpush1.bf16.xpose.msra.mxu0 %v2972
      %3066 = vmatprep.subr.bf16.mxu0 0
      %3067 = vmatpush1.bf16.xpose.msra.mxu0 %v2969
      %3068 = vmatprep.subr.bf16.mxu0 0
      %3069 = vmatpush1.bf16.xpose.msra.mxu0 %v2966
      %3070 = vmatprep.subr.bf16.mxu0 0
      %3071 = vmatpush2.bf16.xpose.msra.mxu0 %v3011
      %3072 = vmatprep.subr.bf16.mxu0 0
      %3073 = vmatpush2.bf16.xpose.msra.mxu0 %v3008
      %3074 = vmatprep.subr.bf16.mxu0 0
      %3075 = vmatpush2.bf16.xpose.msra.mxu0 %v3005
      %3076 = vmatprep.subr.bf16.mxu0 0
      %3077 = vmatpush2.bf16.xpose.msra.mxu0 %v3002
      %3078 = vmatprep.subr.bf16.mxu0 0
      %3079 = vmatpush2.bf16.xpose.msra.mxu0 %v2999
      %3080 = vmatprep.subr.bf16.mxu0 0
      %3081 = vmatpush2.bf16.xpose.msra.mxu0 %v2996
      %3082 = vmatprep.subr.bf16.mxu0 0
      %3083 = vmatpush2.bf16.xpose.msra.mxu0 %v2993
      %3084 = vmatprep.subr.bf16.mxu0 0
      %3085 = vmatpush2.bf16.xpose.msra.mxu0 %v2990
      %3086 = vmatprep.mubr.bf16.mxu0 0
      %3087 = vmatmul.mubr.bf16.gmra.mxu0 %v2915
      %v3088 = vpop.f32.mrf.mxu0
      %v3089 = vadd.f32 0.0, %v3088
      %v3090 = vpop.f32.mrf.mxu0
      %v3091 = vadd.f32 0.0, %v3090
      %v3092 = vpop.f32.mrf.mxu0
      %v3093 = vpop.f32.mrf.mxu0
      %3094 = vdwg.mxu0
      %v3095 = vadd.f32 %v2679, %v3048
      %v3096 = vadd.f32 %v2680, %v3050
      %v3097 = vadd.f32 %v2681, %v3089
      %v3098 = vadd.f32 %v2682, %v3091
      %v3099 = vld [vmem:[%s2] sm:$0xff]
      %3101 = vset.pattern.permute.xlu0 0
      %3102 = vperm.xlu0 %3101, %v3099
      %v3103 = vpop.permute.xlu0 %3102
      %v3105 = vadd.f32 %v3095, %v3103
      %v3106 = vadd.f32 %v3096, %v3103
      %v3107 = vadd.f32 %v3097, %v3103
      %v3108 = vadd.f32 %v3098, %v3103
      %v3109 = vtanh.pop %v3105
      %v3110 = vtanh.pop %v3106
      %v3111 = vtanh.pop %v3107
      %v3112 = vtanh.pop %v3108
      %3113 = vst [vmem:[%s192] sm:$0xff] %v3109
      %3114 = vst [vmem:[%s192 + $0x8] sm:$0xff] %v3110
      %3115 = vst [vmem:[%s192 + $0x10] sm:$0xff] %v3111
      %3116 = vst [vmem:[%s192 + $0x18] sm:$0xff] %v3112
      %s3117 = smul.u32 4, %s19
      %p3118 = scmp.lt.s32.totalorder %s18, 1
      %s3119 = scalar_select %p3118, %s18, 1
      %p3120 = scmp.lt.s32.totalorder %s3117, 7
      %s3121 = scalar_select %p3120, %s3117, 7
      %s3122 = smul.addr %s3119, 8
      %s3123 = sadd.s32 %s3121, %s3122
      %s3124 = smul.addr %s3123, 8
      %s3125 = scalar_lea.vmem %s3, %s3124
      // Predicated region
      $region33: #{image_decoder_forward.5} parent=31 // pred_check
        %p3126 = pneg %p114
      $region34: #{image_decoder_forward.5} parent=31 // pred_check_branch
        %3128 = sbr.rel (%p3126) target = $region36
      $region35: #{image_decoder_forward.5} parent=31 // pred_region
        %s3129 = smul.u32 4, %s19
      $region36: #{image_decoder_forward.5} parent=31 // pred_fallthru
        _
    $region32: #{image_decoder_forward.5} parent=5 // pred_fallthru
      _
    %p3130 = scmp.le.s32.totalorder 2, %s9
    // Predicated region
    $region37: #{image_decoder_forward.5} parent=5 // pred_check
      %p3131 = pneg %p3130
    $region38: #{image_decoder_forward.5} parent=5 // pred_check_branch
      %3133 = sbr.rel (%p3131) target = $region40
    $region39: #{image_decoder_forward.5} parent=5 // pred_region
      %s3134 = ssub.s32 %s9, 2
      // Predicated region
      $region41: #{image_decoder_forward.5} parent=39 // pred_check
        %p3135 = pneg %p120
      $region42: #{image_decoder_forward.5} parent=39 // pred_check_branch
        %3137 = sbr.rel (%p3135) target = $region44
      $region43: #{image_decoder_forward.5} parent=39 // pred_region
        %s3138 = smul.u32 4, %s21
        %p3139 = scmp.lt.s32.totalorder %s20, 1
        %s3140 = scalar_select %p3139, %s20, 1
        %p3141 = scmp.lt.s32.totalorder %s3138, 7
        %s3142 = scalar_select %p3141, %s3138, 7
        %s3143 = smul.addr %s3140, 8
        %s3144 = sadd.s32 %s3142, %s3143
        %s3145 = smul.addr %s3144, 8
        %s3146 = scalar_lea.vmem %s3, %s3145
      $region44: #{image_decoder_forward.5} parent=39 // pred_fallthru
        _
    $region40: #{image_decoder_forward.5} parent=5 // pred_fallthru
      _
  $region6: #{image_decoder_forward.5} parent=0 // loop_footer
    %s13 = sadd.s32 1, %s9
  $region7: #{image_decoder_forward.5} parent=0 // loop_footer_branch
    %8 = sbr.rel target = $region3
  $region8: #{image_decoder_forward.5} parent=0 // loop_exit
    _

</llo_original>
